<compile_context>
chip_gen: v7x
topology: tpu7x:2x2x1
jax: 0.10.0
libtpu: 0.0.40
codegen_flags: <defaults>
</compile_context>

<pallas_src>
import functools

import jax
import jax.numpy as jnp
from jax.experimental import pallas as pl
from jax.experimental.pallas import tpu as pltpu


def _num_groups(c):
    # matches normalize(): 32 groups if 32 < channels else 1
    return 32 if 32 < c else 1


# --------------------------- in-kernel helpers ------------------------------


def _gn_swish(x, gamma, beta, num_groups, eps):
    """GroupNorm + swish on a (P, C) f32 tile. gamma/beta: (1, C)."""
    P, C = x.shape
    if num_groups == 1:
        mean = jnp.mean(x)
        d = x - mean
        var = jnp.mean(d * d)
        y = d * jax.lax.rsqrt(var + eps)
    else:
        # general path (not traced for the test shapes): per-channel sums, then a
        # tiny (C,C) same-group matmul combines channels of the same group.
        cg = C // num_groups
        gi = jax.lax.broadcasted_iota(jnp.int32, (C, C), 0) // cg
        gj = jax.lax.broadcasted_iota(jnp.int32, (C, C), 1) // cg
        same = (gi == gj).astype(jnp.float32)                      # (C, C)
        inv_n = 1.0 / (P * cg)
        s1 = jnp.sum(x, axis=0, keepdims=True)                     # (1, C)
        mean = jnp.dot(s1, same, preferred_element_type=jnp.float32) * inv_n
        d = x - mean
        s2 = jnp.sum(d * d, axis=0, keepdims=True)
        var = jnp.dot(s2, same, preferred_element_type=jnp.float32) * inv_n
        y = d * jax.lax.rsqrt(var + eps)
    y = y * gamma + beta
    return y * jax.nn.sigmoid(y)                                   # swish


def _conv3x3(h, w, b, H, W, mxu_dtype):
    """3x3 'SAME' conv. h: (H*W, Cin) f32; w: (9*Cin, Cout) mxu_dtype; b: (1, Cout) f32."""
    P, Cin = h.shape
    h3 = h.reshape(H, W, Cin).astype(mxu_dtype)
    # in-kernel halo padding (zeros) via concatenation — no HBM pad round trip
    zc = jnp.zeros((H, 1, Cin), mxu_dtype)
    zr = jnp.zeros((1, W + 2, Cin), mxu_dtype)
    hp = jnp.concatenate([zc, h3, zc], axis=1)                     # (H, W+2, Cin)
    hp = jnp.concatenate([zr, hp, zr], axis=0)                     # (H+2, W+2, Cin)
    # im2col: one (P, 9*Cin) slab -> single MXU matmul with K = 9*Cin
    taps = [hp[dh:dh + H, dw:dw + W, :].reshape(P, Cin)
            for dh in range(3) for dw in range(3)]
    patches = jnp.concatenate(taps, axis=1)                        # (P, 9*Cin)
    acc = jnp.dot(patches, w, preferred_element_type=jnp.float32)  # (P, Cout) f32
    return acc + b


# ------------------------------ fused kernel --------------------------------


def resblock_kernel(*refs, H, W, Cin, Cout, groups1, groups2, eps, has_proj, mxu_dtype):
    if has_proj:
        (x_ref, g1_ref, b1_ref, w1_ref, cb1_ref,
         g2_ref, b2_ref, w2_ref, cb2_ref, wsc_ref, bsc_ref, o_ref) = refs
    else:
        (x_ref, g1_ref, b1_ref, w1_ref, cb1_ref,
         g2_ref, b2_ref, w2_ref, cb2_ref, o_ref) = refs

    P = H * W
    x = x_ref[0].astype(jnp.float32).reshape(P, Cin)               # (P, Cin)

    h = _gn_swish(x, g1_ref[...], b1_ref[...], groups1, eps)       # (P, Cin)  f32
    h = _conv3x3(h, w1_ref[...], cb1_ref[...], H, W, mxu_dtype)    # (P, Cout) f32
    h = _gn_swish(h, g2_ref[...], b2_ref[...], groups2, eps)       # (P, Cout) f32
    h = _conv3x3(h, w2_ref[...], cb2_ref[...], H, W, mxu_dtype)    # (P, Cout) f32

    if has_proj:
        # fused 1x1 shortcut conv on the already-resident input tile
        sc = jnp.dot(x.astype(mxu_dtype), wsc_ref[...],
                     preferred_element_type=jnp.float32) + bsc_ref[...]
    else:
        sc = x

    o_ref[0] = (h + sc).reshape(H, W, Cout).astype(o_ref.dtype)


# ------------------------------- wrapper -------------------------------------


def _full_spec(arr):
    nd = arr.ndim
    return pl.BlockSpec(arr.shape, lambda n, _nd=nd: (0,) * _nd)


def resblock2d_forward(x_nchw, params, in_channels, out_channels, use_bf16=True):
    N, C, H, W = x_nchw.shape
    assert C == in_channels
    mxu_dtype = jnp.bfloat16 if use_bf16 else jnp.float32
    has_proj = in_channels != out_channels

    # NCHW -> NHWC (pixels on sublanes, channels on lanes inside the kernel)
    x = jnp.transpose(x_nchw, (0, 2, 3, 1))

    row = lambda v: v.reshape(1, -1).astype(jnp.float32)
    # conv weights: (3,3,Cin,Cout) -> (9*Cin, Cout), rows ordered (dh, dw, ci)
    w1 = params["conv1_w"].reshape(9 * in_channels, out_channels).astype(mxu_dtype)
    w2 = params["conv2_w"].reshape(9 * out_channels, out_channels).astype(mxu_dtype)

    operands = [x,
                row(params["norm1_w"]), row(params["norm1_b"]),
                w1, row(params["conv1_b"]),
                row(params["norm2_w"]), row(params["norm2_b"]),
                w2, row(params["conv2_b"])]
    if has_proj:
        operands += [params["convout_w"].astype(mxu_dtype), row(params["convout_b"])]

    in_specs = [pl.BlockSpec((1, H, W, in_channels), lambda n: (n, 0, 0, 0))]
    in_specs += [_full_spec(a) for a in operands[1:]]

    kern = functools.partial(
        resblock_kernel, H=H, W=W, Cin=in_channels, Cout=out_channels,
        groups1=_num_groups(in_channels), groups2=_num_groups(out_channels),
        eps=1e-6, has_proj=has_proj, mxu_dtype=mxu_dtype)

    out = pl.pallas_call(
        kern,
        out_shape=jax.ShapeDtypeStruct((N, H, W, out_channels), x_nchw.dtype),
        grid=(N,),
        in_specs=in_specs,
        out_specs=pl.BlockSpec((1, H, W, out_channels), lambda n: (n, 0, 0, 0)),
        compiler_params=pltpu.CompilerParams(dimension_semantics=("parallel",)),
    )(*operands)

    # NHWC -> NCHW back to PyTorch convention
    return jnp.transpose(out, (0, 3, 1, 2))


# --------------------------- params & reference ------------------------------


def init_resblock_params(key, in_channels, out_channels):
    ks = jax.random.split(key, 6)
    return {
        "norm1_w": jnp.ones((in_channels,), jnp.float32),
        "norm1_b": jnp.zeros((in_channels,), jnp.float32),
        "norm2_w": jnp.ones((out_channels,), jnp.float32),
        "norm2_b": jnp.zeros((out_channels,), jnp.float32),
        # conv weights in HWIO layout
        "conv1_w": 0.1 * jax.random.normal(ks[0], (3, 3, in_channels, out_channels), jnp.float32),
        "conv1_b": 0.1 * jax.random.normal(ks[1], (out_channels,), jnp.float32),
        "conv2_w": 0.1 * jax.random.normal(ks[2], (3, 3, out_channels, out_channels), jnp.float32),
        "conv2_b": 0.1 * jax.random.normal(ks[3], (out_channels,), jnp.float32),
        # 1x1 shortcut conv, stored as (Cin, Cout)
        "convout_w": 0.1 * jax.random.normal(ks[4], (in_channels, out_channels), jnp.float32),
        "convout_b": 0.1 * jax.random.normal(ks[5], (out_channels,), jnp.float32),
    }


def _ref_groupnorm_swish(x, gamma, beta, num_groups, eps=1e-6):
    N, H, W, C = x.shape
    xg = x.reshape(N, H, W, num_groups, C // num_groups)
    mean = jnp.mean(xg, axis=(1, 2, 4), keepdims=True)
    var = jnp.mean((xg - mean) ** 2, axis=(1, 2, 4), keepdims=True)
    xn = ((xg - mean) / jnp.sqrt(var + eps)).reshape(N, H, W, C)
    y = xn * gamma + beta
    return y * jax.nn.sigmoid(y)


def _ref_conv(x, w, b, padding):
    y = jax.lax.conv_general_dilated(
        x, w, window_strides=(1, 1), padding=padding,
        dimension_numbers=("NHWC", "HWIO", "NHWC"))
    return y + b


def resblock2d_reference(x_nchw, params, in_channels, out_channels):
    x = jnp.transpose(x_nchw, (0, 2, 3, 1))
    x_in = x
    h = _ref_groupnorm_swish(x, params["norm1_w"], params["norm1_b"], _num_groups(in_channels))
    h = _ref_conv(h, params["conv1_w"], params["conv1_b"], "SAME")
    h = _ref_groupnorm_swish(h, params["norm2_w"], params["norm2_b"], _num_groups(out_channels))
    h = _ref_conv(h, params["conv2_w"], params["conv2_b"], "SAME")
    if in_channels != out_channels:
        x_in = _ref_conv(x_in, params["convout_w"][None, None], params["convout_b"], "VALID")
    out = h + x_in
    return jnp.transpose(out, (0, 3, 1, 2))


# --------------------------------- main ---------------------------------------


if __name__ == "__main__":
    N, Cin, Cout, H, W = 2, 4, 8, 16, 16

    key = jax.random.PRNGKey(0)
    kx, kp = jax.random.split(key)
    x = jax.random.normal(kx, (N, Cin, H, W), jnp.float32)   # PyTorch NCHW input
    params = init_resblock_params(kp, Cin, Cout)

    ref = jax.block_until_ready(resblock2d_reference(x, params, Cin, Cout))

    # exact path (f32 MXU feeds) — tight check
    out_f32 = jax.block_until_ready(resblock2d_forward(x, params, Cin, Cout, use_bf16=False))
    assert out_f32.shape == (N, Cout, H, W), out_f32.shape
    assert jnp.allclose(out_f32, ref, rtol=2e-3, atol=2e-3), \
        float(jnp.max(jnp.abs(out_f32 - ref)))

    # perf-default path (bf16 MXU operands, f32 accumulate / elementwise) — looser check
    out_bf16 = jax.block_until_ready(resblock2d_forward(x, params, Cin, Cout, use_bf16=True))
    assert out_bf16.shape == (N, Cout, H, W), out_bf16.shape
    assert jnp.allclose(out_bf16, ref, rtol=5e-2, atol=5e-2), \
        float(jnp.max(jnp.abs(out_bf16 - ref)))

    print("KERNEL_OK")
</pallas_src>

<mosaic_0001>
module attributes {stable_mosaic.version = 11 : i64} {
  func.func @resblock_kernel(%arg0: i32, %arg1: memref<1x16x16x4xf32, #tpu.memory_space<vmem>>, %arg2: memref<1x4xf32, #tpu.memory_space<vmem>>, %arg3: memref<1x4xf32, #tpu.memory_space<vmem>>, %arg4: memref<36x8xf32, #tpu.memory_space<vmem>>, %arg5: memref<1x8xf32, #tpu.memory_space<vmem>>, %arg6: memref<1x8xf32, #tpu.memory_space<vmem>>, %arg7: memref<1x8xf32, #tpu.memory_space<vmem>>, %arg8: memref<72x8xf32, #tpu.memory_space<vmem>>, %arg9: memref<1x8xf32, #tpu.memory_space<vmem>>, %arg10: memref<4x8xf32, #tpu.memory_space<vmem>>, %arg11: memref<1x8xf32, #tpu.memory_space<vmem>>, %arg12: memref<1x16x16x8xf32, #tpu.memory_space<vmem>>) attributes {dimension_semantics = [#tpu.dimension_semantics<parallel>], iteration_bounds = array<i64: 2>, scalar_prefetch = 0 : i64, scratch_operands = 0 : i64, tpu.core_type = #tpu.core_type<tc>, window_params = [{transform_indices = @transform_0, window_bounds = array<i64: 1, 16, 16, 4>}, {pipeline_mode = #tpu.pipeline_mode<synchronous>, transform_indices = @transform_1, window_bounds = array<i64: 1, 4>}, {pipeline_mode = #tpu.pipeline_mode<synchronous>, transform_indices = @transform_2, window_bounds = array<i64: 1, 4>}, {pipeline_mode = #tpu.pipeline_mode<synchronous>, transform_indices = @transform_3, window_bounds = array<i64: 36, 8>}, {pipeline_mode = #tpu.pipeline_mode<synchronous>, transform_indices = @transform_4, window_bounds = array<i64: 1, 8>}, {pipeline_mode = #tpu.pipeline_mode<synchronous>, transform_indices = @transform_5, window_bounds = array<i64: 1, 8>}, {pipeline_mode = #tpu.pipeline_mode<synchronous>, transform_indices = @transform_6, window_bounds = array<i64: 1, 8>}, {pipeline_mode = #tpu.pipeline_mode<synchronous>, transform_indices = @transform_7, window_bounds = array<i64: 72, 8>}, {pipeline_mode = #tpu.pipeline_mode<synchronous>, transform_indices = @transform_8, window_bounds = array<i64: 1, 8>}, {pipeline_mode = #tpu.pipeline_mode<synchronous>, transform_indices = @transform_9, window_bounds = array<i64: 4, 8>}, {pipeline_mode = #tpu.pipeline_mode<synchronous>, transform_indices = @transform_10, window_bounds = array<i64: 1, 8>}, {transform_indices = @transform_11, window_bounds = array<i64: 1, 16, 16, 8>}]} {
    %c0 = arith.constant 0 : index
    %c0_0 = arith.constant 0 : index
    %c0_1 = arith.constant 0 : index
    %c0_2 = arith.constant 0 : index
    %0 = vector.load %arg1[%c0, %c0_0, %c0_1, %c0_2] : memref<1x16x16x4xf32, #tpu.memory_space<vmem>>, vector<1x16x16x4xf32>
    %1 = vector.shape_cast %0 : vector<1x16x16x4xf32> to vector<16x16x4xf32>
    %2 = vector.shape_cast %1 : vector<16x16x4xf32> to vector<256x4xf32>
    %c0_3 = arith.constant 0 : index
    %c0_4 = arith.constant 0 : index
    %3 = vector.load %arg2[%c0_3, %c0_4] : memref<1x4xf32, #tpu.memory_space<vmem>>, vector<1x4xf32>
    %c0_5 = arith.constant 0 : index
    %c0_6 = arith.constant 0 : index
    %4 = vector.load %arg3[%c0_5, %c0_6] : memref<1x4xf32, #tpu.memory_space<vmem>>, vector<1x4xf32>
    %5 = vector.shape_cast %2 : vector<256x4xf32> to vector<1x256x4xf32>
    %cst = arith.constant dense<0.000000e+00> : vector<1xf32>
    %6 = vector.multi_reduction <add>, %5, %cst [1, 2] : vector<1x256x4xf32> to vector<1xf32>
    %7 = vector.shape_cast %6 : vector<1xf32> to vector<1x1x1xf32>
    %8 = vector.extract %7[0, 0, 0] : f32 from vector<1x1x1xf32>
    %cst_7 = arith.constant 1.024000e+03 : f32
    %9 = arith.divf %8, %cst_7 : f32
    %10 = vector.broadcast %9 : f32 to vector<256x4xf32>
    %11 = arith.subf %2, %10 : vector<256x4xf32>
    %12 = arith.mulf %11, %11 : vector<256x4xf32>
    %13 = vector.shape_cast %12 : vector<256x4xf32> to vector<1x256x4xf32>
    %cst_8 = arith.constant dense<0.000000e+00> : vector<1xf32>
    %14 = vector.multi_reduction <add>, %13, %cst_8 [1, 2] : vector<1x256x4xf32> to vector<1xf32>
    %15 = vector.shape_cast %14 : vector<1xf32> to vector<1x1x1xf32>
    %16 = vector.extract %15[0, 0, 0] : f32 from vector<1x1x1xf32>
    %cst_9 = arith.constant 1.024000e+03 : f32
    %17 = arith.divf %16, %cst_9 : f32
    %cst_10 = arith.constant 9.99999997E-7 : f32
    %18 = arith.addf %17, %cst_10 : f32
    %19 = math.rsqrt %18 : f32
    %20 = vector.broadcast %19 : f32 to vector<256x4xf32>
    %21 = arith.mulf %11, %20 : vector<256x4xf32>
    %22 = vector.broadcast %3 : vector<1x4xf32> to vector<256x4xf32>
    %23 = arith.mulf %21, %22 : vector<256x4xf32>
    %24 = vector.broadcast %4 : vector<1x4xf32> to vector<256x4xf32>
    %25 = arith.addf %23, %24 : vector<256x4xf32>
    %26 = arith.negf %25 : vector<256x4xf32>
    %27 = math.exp %26 : vector<256x4xf32>
    %cst_11 = arith.constant 1.000000e+00 : f32
    %28 = vector.broadcast %cst_11 : f32 to vector<256x4xf32>
    %29 = arith.addf %28, %27 : vector<256x4xf32>
    %30 = arith.divf %28, %29 : vector<256x4xf32>
    %31 = arith.mulf %25, %30 : vector<256x4xf32>
    %c0_12 = arith.constant 0 : index
    %c0_13 = arith.constant 0 : index
    %32 = vector.load %arg4[%c0_12, %c0_13] : memref<36x8xf32, #tpu.memory_space<vmem>>, vector<36x8xf32>
    %c0_14 = arith.constant 0 : index
    %c0_15 = arith.constant 0 : index
    %33 = vector.load %arg5[%c0_14, %c0_15] : memref<1x8xf32, #tpu.memory_space<vmem>>, vector<1x8xf32>
    %34 = vector.shape_cast %31 : vector<256x4xf32> to vector<16x16x4xf32>
    %cst_16 = arith.constant 0.000000e+00 : f32
    %35 = vector.broadcast %cst_16 : f32 to vector<16x1x4xf32>
    %cst_17 = arith.constant 0.000000e+00 : f32
    %36 = vector.broadcast %cst_17 : f32 to vector<1x18x4xf32>
    %37 = tpu.concatenate %35, %34, %35 in 1 : vector<16x1x4xf32>, vector<16x16x4xf32>, vector<16x1x4xf32> -> vector<16x18x4xf32>
    %38 = tpu.concatenate %36, %37, %36 in 0 : vector<1x18x4xf32>, vector<16x18x4xf32>, vector<1x18x4xf32> -> vector<18x18x4xf32>
    %39 = vector.extract_strided_slice %38 {offsets = [0, 0, 0], sizes = [16, 16, 4], strides = [1, 1, 1]} : vector<18x18x4xf32> to vector<16x16x4xf32>
    %40 = vector.shape_cast %39 : vector<16x16x4xf32> to vector<256x4xf32>
    %41 = vector.extract_strided_slice %38 {offsets = [0, 1, 0], sizes = [16, 16, 4], strides = [1, 1, 1]} : vector<18x18x4xf32> to vector<16x16x4xf32>
    %42 = vector.shape_cast %41 : vector<16x16x4xf32> to vector<256x4xf32>
    %43 = vector.extract_strided_slice %38 {offsets = [0, 2, 0], sizes = [16, 16, 4], strides = [1, 1, 1]} : vector<18x18x4xf32> to vector<16x16x4xf32>
    %44 = vector.shape_cast %43 : vector<16x16x4xf32> to vector<256x4xf32>
    %45 = vector.extract_strided_slice %38 {offsets = [1, 0, 0], sizes = [16, 16, 4], strides = [1, 1, 1]} : vector<18x18x4xf32> to vector<16x16x4xf32>
    %46 = vector.shape_cast %45 : vector<16x16x4xf32> to vector<256x4xf32>
    %47 = vector.extract_strided_slice %38 {offsets = [1, 1, 0], sizes = [16, 16, 4], strides = [1, 1, 1]} : vector<18x18x4xf32> to vector<16x16x4xf32>
    %48 = vector.shape_cast %47 : vector<16x16x4xf32> to vector<256x4xf32>
    %49 = vector.extract_strided_slice %38 {offsets = [1, 2, 0], sizes = [16, 16, 4], strides = [1, 1, 1]} : vector<18x18x4xf32> to vector<16x16x4xf32>
    %50 = vector.shape_cast %49 : vector<16x16x4xf32> to vector<256x4xf32>
    %51 = vector.extract_strided_slice %38 {offsets = [2, 0, 0], sizes = [16, 16, 4], strides = [1, 1, 1]} : vector<18x18x4xf32> to vector<16x16x4xf32>
    %52 = vector.shape_cast %51 : vector<16x16x4xf32> to vector<256x4xf32>
    %53 = vector.extract_strided_slice %38 {offsets = [2, 1, 0], sizes = [16, 16, 4], strides = [1, 1, 1]} : vector<18x18x4xf32> to vector<16x16x4xf32>
    %54 = vector.shape_cast %53 : vector<16x16x4xf32> to vector<256x4xf32>
    %55 = vector.extract_strided_slice %38 {offsets = [2, 2, 0], sizes = [16, 16, 4], strides = [1, 1, 1]} : vector<18x18x4xf32> to vector<16x16x4xf32>
    %56 = vector.shape_cast %55 : vector<16x16x4xf32> to vector<256x4xf32>
    %57 = tpu.concatenate %40, %42, %44, %46, %48, %50, %52, %54, %56 in 1 : vector<256x4xf32>, vector<256x4xf32>, vector<256x4xf32>, vector<256x4xf32>, vector<256x4xf32>, vector<256x4xf32>, vector<256x4xf32>, vector<256x4xf32>, vector<256x4xf32> -> vector<256x36xf32>
    %cst_18 = arith.constant dense<0.000000e+00> : vector<256x8xf32>
    %58 = tpu.matmul %57, %32, %cst_18 {dimension_numbers = #tpu.dot_dimension_numbers<[1], [0], [0], [1], [0, 0, 1, 1], [], []>} : vector<256x36xf32>, vector<36x8xf32>, vector<256x8xf32> -> vector<256x8xf32>
    %59 = vector.broadcast %33 : vector<1x8xf32> to vector<256x8xf32>
    %60 = arith.addf %58, %59 : vector<256x8xf32>
    %c0_19 = arith.constant 0 : index
    %c0_20 = arith.constant 0 : index
    %61 = vector.load %arg6[%c0_19, %c0_20] : memref<1x8xf32, #tpu.memory_space<vmem>>, vector<1x8xf32>
    %c0_21 = arith.constant 0 : index
    %c0_22 = arith.constant 0 : index
    %62 = vector.load %arg7[%c0_21, %c0_22] : memref<1x8xf32, #tpu.memory_space<vmem>>, vector<1x8xf32>
    %63 = vector.shape_cast %60 : vector<256x8xf32> to vector<1x256x8xf32>
    %cst_23 = arith.constant dense<0.000000e+00> : vector<1xf32>
    %64 = vector.multi_reduction <add>, %63, %cst_23 [1, 2] : vector<1x256x8xf32> to vector<1xf32>
    %65 = vector.shape_cast %64 : vector<1xf32> to vector<1x1x1xf32>
    %66 = vector.extract %65[0, 0, 0] : f32 from vector<1x1x1xf32>
    %cst_24 = arith.constant 2.048000e+03 : f32
    %67 = arith.divf %66, %cst_24 : f32
    %68 = vector.broadcast %67 : f32 to vector<256x8xf32>
    %69 = arith.subf %60, %68 : vector<256x8xf32>
    %70 = arith.mulf %69, %69 : vector<256x8xf32>
    %71 = vector.shape_cast %70 : vector<256x8xf32> to vector<1x256x8xf32>
    %cst_25 = arith.constant dense<0.000000e+00> : vector<1xf32>
    %72 = vector.multi_reduction <add>, %71, %cst_25 [1, 2] : vector<1x256x8xf32> to vector<1xf32>
    %73 = vector.shape_cast %72 : vector<1xf32> to vector<1x1x1xf32>
    %74 = vector.extract %73[0, 0, 0] : f32 from vector<1x1x1xf32>
    %cst_26 = arith.constant 2.048000e+03 : f32
    %75 = arith.divf %74, %cst_26 : f32
    %cst_27 = arith.constant 9.99999997E-7 : f32
    %76 = arith.addf %75, %cst_27 : f32
    %77 = math.rsqrt %76 : f32
    %78 = vector.broadcast %77 : f32 to vector<256x8xf32>
    %79 = arith.mulf %69, %78 : vector<256x8xf32>
    %80 = vector.broadcast %61 : vector<1x8xf32> to vector<256x8xf32>
    %81 = arith.mulf %79, %80 : vector<256x8xf32>
    %82 = vector.broadcast %62 : vector<1x8xf32> to vector<256x8xf32>
    %83 = arith.addf %81, %82 : vector<256x8xf32>
    %84 = arith.negf %83 : vector<256x8xf32>
    %85 = math.exp %84 : vector<256x8xf32>
    %cst_28 = arith.constant 1.000000e+00 : f32
    %86 = vector.broadcast %cst_28 : f32 to vector<256x8xf32>
    %87 = arith.addf %86, %85 : vector<256x8xf32>
    %88 = arith.divf %86, %87 : vector<256x8xf32>
    %89 = arith.mulf %83, %88 : vector<256x8xf32>
    %c0_29 = arith.constant 0 : index
    %c0_30 = arith.constant 0 : index
    %90 = vector.load %arg8[%c0_29, %c0_30] : memref<72x8xf32, #tpu.memory_space<vmem>>, vector<72x8xf32>
    %c0_31 = arith.constant 0 : index
    %c0_32 = arith.constant 0 : index
    %91 = vector.load %arg9[%c0_31, %c0_32] : memref<1x8xf32, #tpu.memory_space<vmem>>, vector<1x8xf32>
    %92 = vector.shape_cast %89 : vector<256x8xf32> to vector<16x16x8xf32>
    %cst_33 = arith.constant 0.000000e+00 : f32
    %93 = vector.broadcast %cst_33 : f32 to vector<16x1x8xf32>
    %cst_34 = arith.constant 0.000000e+00 : f32
    %94 = vector.broadcast %cst_34 : f32 to vector<1x18x8xf32>
    %95 = tpu.concatenate %93, %92, %93 in 1 : vector<16x1x8xf32>, vector<16x16x8xf32>, vector<16x1x8xf32> -> vector<16x18x8xf32>
    %96 = tpu.concatenate %94, %95, %94 in 0 : vector<1x18x8xf32>, vector<16x18x8xf32>, vector<1x18x8xf32> -> vector<18x18x8xf32>
    %97 = vector.extract_strided_slice %96 {offsets = [0, 0, 0], sizes = [16, 16, 8], strides = [1, 1, 1]} : vector<18x18x8xf32> to vector<16x16x8xf32>
    %98 = vector.shape_cast %97 : vector<16x16x8xf32> to vector<256x8xf32>
    %99 = vector.extract_strided_slice %96 {offsets = [0, 1, 0], sizes = [16, 16, 8], strides = [1, 1, 1]} : vector<18x18x8xf32> to vector<16x16x8xf32>
    %100 = vector.shape_cast %99 : vector<16x16x8xf32> to vector<256x8xf32>
    %101 = vector.extract_strided_slice %96 {offsets = [0, 2, 0], sizes = [16, 16, 8], strides = [1, 1, 1]} : vector<18x18x8xf32> to vector<16x16x8xf32>
    %102 = vector.shape_cast %101 : vector<16x16x8xf32> to vector<256x8xf32>
    %103 = vector.extract_strided_slice %96 {offsets = [1, 0, 0], sizes = [16, 16, 8], strides = [1, 1, 1]} : vector<18x18x8xf32> to vector<16x16x8xf32>
    %104 = vector.shape_cast %103 : vector<16x16x8xf32> to vector<256x8xf32>
    %105 = vector.extract_strided_slice %96 {offsets = [1, 1, 0], sizes = [16, 16, 8], strides = [1, 1, 1]} : vector<18x18x8xf32> to vector<16x16x8xf32>
    %106 = vector.shape_cast %105 : vector<16x16x8xf32> to vector<256x8xf32>
    %107 = vector.extract_strided_slice %96 {offsets = [1, 2, 0], sizes = [16, 16, 8], strides = [1, 1, 1]} : vector<18x18x8xf32> to vector<16x16x8xf32>
    %108 = vector.shape_cast %107 : vector<16x16x8xf32> to vector<256x8xf32>
    %109 = vector.extract_strided_slice %96 {offsets = [2, 0, 0], sizes = [16, 16, 8], strides = [1, 1, 1]} : vector<18x18x8xf32> to vector<16x16x8xf32>
    %110 = vector.shape_cast %109 : vector<16x16x8xf32> to vector<256x8xf32>
    %111 = vector.extract_strided_slice %96 {offsets = [2, 1, 0], sizes = [16, 16, 8], strides = [1, 1, 1]} : vector<18x18x8xf32> to vector<16x16x8xf32>
    %112 = vector.shape_cast %111 : vector<16x16x8xf32> to vector<256x8xf32>
    %113 = vector.extract_strided_slice %96 {offsets = [2, 2, 0], sizes = [16, 16, 8], strides = [1, 1, 1]} : vector<18x18x8xf32> to vector<16x16x8xf32>
    %114 = vector.shape_cast %113 : vector<16x16x8xf32> to vector<256x8xf32>
    %115 = tpu.concatenate %98, %100, %102, %104, %106, %108, %110, %112, %114 in 1 : vector<256x8xf32>, vector<256x8xf32>, vector<256x8xf32>, vector<256x8xf32>, vector<256x8xf32>, vector<256x8xf32>, vector<256x8xf32>, vector<256x8xf32>, vector<256x8xf32> -> vector<256x72xf32>
    %cst_35 = arith.constant dense<0.000000e+00> : vector<256x8xf32>
    %116 = tpu.matmul %115, %90, %cst_35 {dimension_numbers = #tpu.dot_dimension_numbers<[1], [0], [0], [1], [0, 0, 1, 1], [], []>} : vector<256x72xf32>, vector<72x8xf32>, vector<256x8xf32> -> vector<256x8xf32>
    %117 = vector.broadcast %91 : vector<1x8xf32> to vector<256x8xf32>
    %118 = arith.addf %116, %117 : vector<256x8xf32>
    %c0_36 = arith.constant 0 : index
    %c0_37 = arith.constant 0 : index
    %119 = vector.load %arg10[%c0_36, %c0_37] : memref<4x8xf32, #tpu.memory_space<vmem>>, vector<4x8xf32>
    %cst_38 = arith.constant dense<0.000000e+00> : vector<256x8xf32>
    %120 = tpu.matmul %2, %119, %cst_38 {dimension_numbers = #tpu.dot_dimension_numbers<[1], [0], [0], [1], [0, 0, 1, 1], [], []>} : vector<256x4xf32>, vector<4x8xf32>, vector<256x8xf32> -> vector<256x8xf32>
    %c0_39 = arith.constant 0 : index
    %c0_40 = arith.constant 0 : index
    %121 = vector.load %arg11[%c0_39, %c0_40] : memref<1x8xf32, #tpu.memory_space<vmem>>, vector<1x8xf32>
    %122 = vector.broadcast %121 : vector<1x8xf32> to vector<256x8xf32>
    %123 = arith.addf %120, %122 : vector<256x8xf32>
    %124 = arith.addf %118, %123 : vector<256x8xf32>
    %125 = vector.shape_cast %124 : vector<256x8xf32> to vector<16x16x8xf32>
    %c0_41 = arith.constant 0 : index
    %c0_42 = arith.constant 0 : index
    %c0_43 = arith.constant 0 : index
    %c0_44 = arith.constant 0 : index
    %126 = vector.load %arg12[%c0_41, %c0_42, %c0_43, %c0_44] : memref<1x16x16x8xf32, #tpu.memory_space<vmem>>, vector<1x16x16x8xf32>
    %127 = vector.shape_cast %126 : vector<1x16x16x8xf32> to vector<16x16x8xf32>
    %128 = vector.shape_cast %125 : vector<16x16x8xf32> to vector<1x16x16x8xf32>
    tpu.vector_store %arg12[%c0_41, %c0_42, %c0_43, %c0_44], %128 {strides = array<i32>} : memref<1x16x16x8xf32, #tpu.memory_space<vmem>>, vector<1x16x16x8xf32>,
    return
  }
  func.func @transform_0(%arg0: i32) -> (i32, i32, i32, i32) {
    %c0_i32 = arith.constant 0 : i32
    %c0_i32_0 = arith.constant 0 : i32
    %c0_i32_1 = arith.constant 0 : i32
    %c0_i32_2 = arith.constant 0 : i32
    return %arg0, %c0_i32, %c0_i32_0, %c0_i32_1 : i32, i32, i32, i32
  }
  func.func @transform_1(%arg0: i32) -> (i32, i32) {
    %c0_i32 = arith.constant 0 : i32
    %c0_i32_0 = arith.constant 0 : i32
    %c0_i32_1 = arith.constant 0 : i32
    return %c0_i32, %c0_i32_0 : i32, i32
  }
  func.func @transform_2(%arg0: i32) -> (i32, i32) {
    %c0_i32 = arith.constant 0 : i32
    %c0_i32_0 = arith.constant 0 : i32
    %c0_i32_1 = arith.constant 0 : i32
    return %c0_i32, %c0_i32_0 : i32, i32
  }
  func.func @transform_3(%arg0: i32) -> (i32, i32) {
    %c0_i32 = arith.constant 0 : i32
    %c0_i32_0 = arith.constant 0 : i32
    %c0_i32_1 = arith.constant 0 : i32
    return %c0_i32, %c0_i32_0 : i32, i32
  }
  func.func @transform_4(%arg0: i32) -> (i32, i32) {
    %c0_i32 = arith.constant 0 : i32
    %c0_i32_0 = arith.constant 0 : i32
    %c0_i32_1 = arith.constant 0 : i32
    return %c0_i32, %c0_i32_0 : i32, i32
  }
  func.func @transform_5(%arg0: i32) -> (i32, i32) {
    %c0_i32 = arith.constant 0 : i32
    %c0_i32_0 = arith.constant 0 : i32
    %c0_i32_1 = arith.constant 0 : i32
    return %c0_i32, %c0_i32_0 : i32, i32
  }
  func.func @transform_6(%arg0: i32) -> (i32, i32) {
    %c0_i32 = arith.constant 0 : i32
    %c0_i32_0 = arith.constant 0 : i32
    %c0_i32_1 = arith.constant 0 : i32
    return %c0_i32, %c0_i32_0 : i32, i32
  }
  func.func @transform_7(%arg0: i32) -> (i32, i32) {
    %c0_i32 = arith.constant 0 : i32
    %c0_i32_0 = arith.constant 0 : i32
    %c0_i32_1 = arith.constant 0 : i32
    return %c0_i32, %c0_i32_0 : i32, i32
  }
  func.func @transform_8(%arg0: i32) -> (i32, i32) {
    %c0_i32 = arith.constant 0 : i32
    %c0_i32_0 = arith.constant 0 : i32
    %c0_i32_1 = arith.constant 0 : i32
    return %c0_i32, %c0_i32_0 : i32, i32
  }
  func.func @transform_9(%arg0: i32) -> (i32, i32) {
    %c0_i32 = arith.constant 0 : i32
    %c0_i32_0 = arith.constant 0 : i32
    %c0_i32_1 = arith.constant 0 : i32
    return %c0_i32, %c0_i32_0 : i32, i32
  }
  func.func @transform_10(%arg0: i32) -> (i32, i32) {
    %c0_i32 = arith.constant 0 : i32
    %c0_i32_0 = arith.constant 0 : i32
    %c0_i32_1 = arith.constant 0 : i32
    return %c0_i32, %c0_i32_0 : i32, i32
  }
  func.func @transform_11(%arg0: i32) -> (i32, i32, i32, i32) {
    %c0_i32 = arith.constant 0 : i32
    %c0_i32_0 = arith.constant 0 : i32
    %c0_i32_1 = arith.constant 0 : i32
    %c0_i32_2 = arith.constant 0 : i32
    return %arg0, %c0_i32, %c0_i32_0, %c0_i32_1 : i32, i32, i32, i32
  }
}

</mosaic_0001>

<llo_original>
// kernel: tpu_custom_call.1
$region0: #{tpu_custom_call.1}
  #allocation0 [shape = 'u32[]', space=smem, size = 0x4, offset = 0x4, fixed_abs, tag = 'smem constant byte address 0x4 - core index']
  #allocation1 [shape = 'u32[144,128]{1,0:T(1,128)}', space=vmem, size = 0x12000, scoped, tag = 'internal scratch']
  %s0 = inlined_call_operand.vmem [shape: f32[2,16,16,4], index: 0, kind: input, shape index: {}]
  %s1 = inlined_call_operand.vmem [shape: f32[1,4], index: 1, kind: input, shape index: {}]
  %s2 = inlined_call_operand.vmem [shape: f32[1,4], index: 2, kind: input, shape index: {}]
  %s3 = inlined_call_operand.vmem [shape: f32[36,8], index: 3, kind: input, shape index: {}]
  %s4 = inlined_call_operand.vmem [shape: f32[1,8], index: 4, kind: input, shape index: {}]
  %s5 = inlined_call_operand.vmem [shape: f32[1,8], index: 5, kind: input, shape index: {}]
  %s6 = inlined_call_operand.vmem [shape: f32[1,8], index: 6, kind: input, shape index: {}]
  %s7 = inlined_call_operand.vmem [shape: f32[72,8], index: 7, kind: input, shape index: {}]
  %s8 = inlined_call_operand.vmem [shape: f32[1,8], index: 8, kind: input, shape index: {}]
  %s9 = inlined_call_operand.vmem [shape: f32[4,8], index: 9, kind: input, shape index: {}]
  %s10 = inlined_call_operand.vmem [shape: f32[1,8], index: 10, kind: input, shape index: {}]
  %s11 = inlined_call_operand.vmem [shape: f32[2,16,16,8], index: 11, kind: output, shape index: {}]
  %s12 = sld [smem:[#allocation0]]
  $region77: #{tpu_custom_call.1} parent=0
    _
  %s14 = ssub.s32 1, %s12
  %s15 = scalar_select 0, %s14, %s12
  loop: start=0, step=1, limit=4
  $region2: #{tpu_custom_call.1} parent=0 // loop_pre_header
    _
  $region3: #{tpu_custom_call.1} parent=0 // loop_header
    %s17 = sphi 0, %s21
    %p18 = scmp.ge.s32.totalorder %s17, 4
    %s27 = sphi 0, %s29
    %s30 = sphi 0, %s27
    %s31 = sphi 0, %s30
    %s47 = sphi 0, %s31
    %s51 = sphi 0, %s51
    %s53 = sphi 0, %s51
    %s54 = sphi 0, %s53
    %s68 = sphi 0, %s54
    %s72 = sphi 0, %s72
    %s74 = sphi 0, %s72
    %s75 = sphi 0, %s74
    %s89 = sphi 0, %s75
    %s93 = sphi 0, %s93
    %s95 = sphi 0, %s93
    %s96 = sphi 0, %s95
    %s110 = sphi 0, %s96
    %s114 = sphi 0, %s114
    %s116 = sphi 0, %s114
    %s117 = sphi 0, %s116
    %s131 = sphi 0, %s117
    %s135 = sphi 0, %s135
    %s137 = sphi 0, %s135
    %s138 = sphi 0, %s137
    %s152 = sphi 0, %s138
    %s156 = sphi 0, %s156
    %s158 = sphi 0, %s156
    %s159 = sphi 0, %s158
    %s173 = sphi 0, %s159
    %s177 = sphi 0, %s177
    %s179 = sphi 0, %s177
    %s180 = sphi 0, %s179
    %s194 = sphi 0, %s180
    %s198 = sphi 0, %s198
    %s200 = sphi 0, %s198
    %s201 = sphi 0, %s200
    %s215 = sphi 0, %s201
    %s219 = sphi 0, %s219
    %s221 = sphi 0, %s219
    %s222 = sphi 0, %s221
    %s236 = sphi 0, %s222
    %s240 = sphi 0, %s240
    %s242 = sphi 0, %s240
    %s243 = sphi 0, %s242
    %s257 = sphi 0, %s243
    %s263 = sphi 0, %s265
    %s266 = sphi 0, %s263
    %s267 = sphi 0, %s266
    %s283 = sphi 0, %s267
  $region4: #{tpu_custom_call.1} parent=0 // loop_header_branch
    %20 = sbr.rel (%p18) target = $region8
  $region5: #{tpu_custom_call.1} parent=0 // loop_body
    %s22 = ssub.s32 %s17, 1
    %s23 = ssub.s32 %s17, 2
    %s24 = sadd.s32 %s17, 1
    %s25 = ssub.s32 %s17, %s24
    %p26 = scmp.eq.s32.totalorder %s25, 0
    %s28 = sadd.s32 %s27, 1
    %s29 = scalar_select %p26, %s27, %s28
    %p32 = pneg %p26
    %p33 = scmp.eq.s32.totalorder %s17, 1
    %p34 = por %p32, %p33
    %p35 = scmp.ne.s32.totalorder %s27, %s30
    %p36 = scmp.eq.s32.totalorder %s17, 0
    %p37 = por %p35, %p36
    %p38 = scmp.ne.s32.totalorder %s27, %s30
    %p39 = scmp.eq.s32.totalorder %s22, 1
    %p40 = por %p38, %p39
    %p41 = scmp.ne.s32.totalorder %s30, %s31
    %p42 = scmp.eq.s32.totalorder %s22, 0
    %p43 = por %p41, %p42
    %p44 = scmp.ne.s32.totalorder %s30, %s31
    %p45 = scmp.eq.s32.totalorder %s23, 1
    %p46 = por %p44, %p45
    %p48 = scmp.ne.s32.totalorder %s31, %s47
    %p49 = scmp.eq.s32.totalorder %s23, 0
    %p50 = por %p48, %p49
    %s52 = sadd.s32 %s51, 1
    %p55 = scmp.eq.s32.totalorder %s17, 1
    %p56 = scmp.ne.s32.totalorder %s51, %s53
    %p57 = scmp.eq.s32.totalorder %s17, 0
    %p58 = por %p56, %p57
    %p59 = scmp.ne.s32.totalorder %s51, %s53
    %p60 = scmp.eq.s32.totalorder %s22, 1
    %p61 = por %p59, %p60
    %p62 = scmp.ne.s32.totalorder %s53, %s54
    %p63 = scmp.eq.s32.totalorder %s22, 0
    %p64 = por %p62, %p63
    %p65 = scmp.ne.s32.totalorder %s53, %s54
    %p66 = scmp.eq.s32.totalorder %s23, 1
    %p67 = por %p65, %p66
    %p69 = scmp.ne.s32.totalorder %s54, %s68
    %p70 = scmp.eq.s32.totalorder %s23, 0
    %p71 = por %p69, %p70
    %s73 = sadd.s32 %s72, 1
    %p76 = scmp.eq.s32.totalorder %s17, 1
    %p77 = scmp.ne.s32.totalorder %s72, %s74
    %p78 = scmp.eq.s32.totalorder %s17, 0
    %p79 = por %p77, %p78
    %p80 = scmp.ne.s32.totalorder %s72, %s74
    %p81 = scmp.eq.s32.totalorder %s22, 1
    %p82 = por %p80, %p81
    %p83 = scmp.ne.s32.totalorder %s74, %s75
    %p84 = scmp.eq.s32.totalorder %s22, 0
    %p85 = por %p83, %p84
    %p86 = scmp.ne.s32.totalorder %s74, %s75
    %p87 = scmp.eq.s32.totalorder %s23, 1
    %p88 = por %p86, %p87
    %p90 = scmp.ne.s32.totalorder %s75, %s89
    %p91 = scmp.eq.s32.totalorder %s23, 0
    %p92 = por %p90, %p91
    %s94 = sadd.s32 %s93, 1
    %p97 = scmp.eq.s32.totalorder %s17, 1
    %p98 = scmp.ne.s32.totalorder %s93, %s95
    %p99 = scmp.eq.s32.totalorder %s17, 0
    %p100 = por %p98, %p99
    %p101 = scmp.ne.s32.totalorder %s93, %s95
    %p102 = scmp.eq.s32.totalorder %s22, 1
    %p103 = por %p101, %p102
    %p104 = scmp.ne.s32.totalorder %s95, %s96
    %p105 = scmp.eq.s32.totalorder %s22, 0
    %p106 = por %p104, %p105
    %p107 = scmp.ne.s32.totalorder %s95, %s96
    %p108 = scmp.eq.s32.totalorder %s23, 1
    %p109 = por %p107, %p108
    %p111 = scmp.ne.s32.totalorder %s96, %s110
    %p112 = scmp.eq.s32.totalorder %s23, 0
    %p113 = por %p111, %p112
    %s115 = sadd.s32 %s114, 1
    %p118 = scmp.eq.s32.totalorder %s17, 1
    %p119 = scmp.ne.s32.totalorder %s114, %s116
    %p120 = scmp.eq.s32.totalorder %s17, 0
    %p121 = por %p119, %p120
    %p122 = scmp.ne.s32.totalorder %s114, %s116
    %p123 = scmp.eq.s32.totalorder %s22, 1
    %p124 = por %p122, %p123
    %p125 = scmp.ne.s32.totalorder %s116, %s117
    %p126 = scmp.eq.s32.totalorder %s22, 0
    %p127 = por %p125, %p126
    %p128 = scmp.ne.s32.totalorder %s116, %s117
    %p129 = scmp.eq.s32.totalorder %s23, 1
    %p130 = por %p128, %p129
    %p132 = scmp.ne.s32.totalorder %s117, %s131
    %p133 = scmp.eq.s32.totalorder %s23, 0
    %p134 = por %p132, %p133
    %s136 = sadd.s32 %s135, 1
    %p139 = scmp.eq.s32.totalorder %s17, 1
    %p140 = scmp.ne.s32.totalorder %s135, %s137
    %p141 = scmp.eq.s32.totalorder %s17, 0
    %p142 = por %p140, %p141
    %p143 = scmp.ne.s32.totalorder %s135, %s137
    %p144 = scmp.eq.s32.totalorder %s22, 1
    %p145 = por %p143, %p144
    %p146 = scmp.ne.s32.totalorder %s137, %s138
    %p147 = scmp.eq.s32.totalorder %s22, 0
    %p148 = por %p146, %p147
    %p149 = scmp.ne.s32.totalorder %s137, %s138
    %p150 = scmp.eq.s32.totalorder %s23, 1
    %p151 = por %p149, %p150
    %p153 = scmp.ne.s32.totalorder %s138, %s152
    %p154 = scmp.eq.s32.totalorder %s23, 0
    %p155 = por %p153, %p154
    %s157 = sadd.s32 %s156, 1
    %p160 = scmp.eq.s32.totalorder %s17, 1
    %p161 = scmp.ne.s32.totalorder %s156, %s158
    %p162 = scmp.eq.s32.totalorder %s17, 0
    %p163 = por %p161, %p162
    %p164 = scmp.ne.s32.totalorder %s156, %s158
    %p165 = scmp.eq.s32.totalorder %s22, 1
    %p166 = por %p164, %p165
    %p167 = scmp.ne.s32.totalorder %s158, %s159
    %p168 = scmp.eq.s32.totalorder %s22, 0
    %p169 = por %p167, %p168
    %p170 = scmp.ne.s32.totalorder %s158, %s159
    %p171 = scmp.eq.s32.totalorder %s23, 1
    %p172 = por %p170, %p171
    %p174 = scmp.ne.s32.totalorder %s159, %s173
    %p175 = scmp.eq.s32.totalorder %s23, 0
    %p176 = por %p174, %p175
    %s178 = sadd.s32 %s177, 1
    %p181 = scmp.eq.s32.totalorder %s17, 1
    %p182 = scmp.ne.s32.totalorder %s177, %s179
    %p183 = scmp.eq.s32.totalorder %s17, 0
    %p184 = por %p182, %p183
    %p185 = scmp.ne.s32.totalorder %s177, %s179
    %p186 = scmp.eq.s32.totalorder %s22, 1
    %p187 = por %p185, %p186
    %p188 = scmp.ne.s32.totalorder %s179, %s180
    %p189 = scmp.eq.s32.totalorder %s22, 0
    %p190 = por %p188, %p189
    %p191 = scmp.ne.s32.totalorder %s179, %s180
    %p192 = scmp.eq.s32.totalorder %s23, 1
    %p193 = por %p191, %p192
    %p195 = scmp.ne.s32.totalorder %s180, %s194
    %p196 = scmp.eq.s32.totalorder %s23, 0
    %p197 = por %p195, %p196
    %s199 = sadd.s32 %s198, 1
    %p202 = scmp.eq.s32.totalorder %s17, 1
    %p203 = scmp.ne.s32.totalorder %s198, %s200
    %p204 = scmp.eq.s32.totalorder %s17, 0
    %p205 = por %p203, %p204
    %p206 = scmp.ne.s32.totalorder %s198, %s200
    %p207 = scmp.eq.s32.totalorder %s22, 1
    %p208 = por %p206, %p207
    %p209 = scmp.ne.s32.totalorder %s200, %s201
    %p210 = scmp.eq.s32.totalorder %s22, 0
    %p211 = por %p209, %p210
    %p212 = scmp.ne.s32.totalorder %s200, %s201
    %p213 = scmp.eq.s32.totalorder %s23, 1
    %p214 = por %p212, %p213
    %p216 = scmp.ne.s32.totalorder %s201, %s215
    %p217 = scmp.eq.s32.totalorder %s23, 0
    %p218 = por %p216, %p217
    %s220 = sadd.s32 %s219, 1
    %p223 = scmp.eq.s32.totalorder %s17, 1
    %p224 = scmp.ne.s32.totalorder %s219, %s221
    %p225 = scmp.eq.s32.totalorder %s17, 0
    %p226 = por %p224, %p225
    %p227 = scmp.ne.s32.totalorder %s219, %s221
    %p228 = scmp.eq.s32.totalorder %s22, 1
    %p229 = por %p227, %p228
    %p230 = scmp.ne.s32.totalorder %s221, %s222
    %p231 = scmp.eq.s32.totalorder %s22, 0
    %p232 = por %p230, %p231
    %p233 = scmp.ne.s32.totalorder %s221, %s222
    %p234 = scmp.eq.s32.totalorder %s23, 1
    %p235 = por %p233, %p234
    %p237 = scmp.ne.s32.totalorder %s222, %s236
    %p238 = scmp.eq.s32.totalorder %s23, 0
    %p239 = por %p237, %p238
    %s241 = sadd.s32 %s240, 1
    %p244 = scmp.eq.s32.totalorder %s17, 1
    %p245 = scmp.ne.s32.totalorder %s240, %s242
    %p246 = scmp.eq.s32.totalorder %s17, 0
    %p247 = por %p245, %p246
    %p248 = scmp.ne.s32.totalorder %s240, %s242
    %p249 = scmp.eq.s32.totalorder %s22, 1
    %p250 = por %p248, %p249
    %p251 = scmp.ne.s32.totalorder %s242, %s243
    %p252 = scmp.eq.s32.totalorder %s22, 0
    %p253 = por %p251, %p252
    %p254 = scmp.ne.s32.totalorder %s242, %s243
    %p255 = scmp.eq.s32.totalorder %s23, 1
    %p256 = por %p254, %p255
    %p258 = scmp.ne.s32.totalorder %s243, %s257
    %p259 = scmp.eq.s32.totalorder %s23, 0
    %p260 = por %p258, %p259
    %s261 = ssub.s32 %s17, %s24
    %p262 = scmp.eq.s32.totalorder %s261, 0
    %s264 = sadd.s32 %s263, 1
    %s265 = scalar_select %p262, %s263, %s264
    %p268 = pneg %p262
    %p269 = scmp.eq.s32.totalorder %s17, 1
    %p270 = por %p268, %p269
    %p271 = scmp.ne.s32.totalorder %s263, %s266
    %p272 = scmp.eq.s32.totalorder %s17, 0
    %p273 = por %p271, %p272
    %p274 = scmp.ne.s32.totalorder %s263, %s266
    %p275 = scmp.eq.s32.totalorder %s22, 1
    %p276 = por %p274, %p275
    %p277 = scmp.ne.s32.totalorder %s266, %s267
    %p278 = scmp.eq.s32.totalorder %s22, 0
    %p279 = por %p277, %p278
    %p280 = scmp.ne.s32.totalorder %s266, %s267
    %p281 = scmp.eq.s32.totalorder %s23, 1
    %p282 = por %p280, %p281
    %p284 = scmp.ne.s32.totalorder %s267, %s283
    %p285 = scmp.eq.s32.totalorder %s23, 0
    %p286 = por %p284, %p285
    %p287 = scmp.le.s32.totalorder 1, %s17
    %p288 = scmp.lt.s32.totalorder %s17, 3
    %p289 = pnand %p287, %p288
    %p290 = pneg %p289
    // Predicated region
    $region9: #{tpu_custom_call.1} parent=5 // pred_check
      _
    $region10: #{tpu_custom_call.1} parent=5 // pred_check_branch
      %292 = sbr.rel (%p289) target = $region12
    $region11: #{tpu_custom_call.1} parent=5 // pred_region
      %s293 = ssub.s32 %s17, 1
      // Predicated region
      $region13: #{tpu_custom_call.1} parent=11 // pred_check
        %p294 = pneg %p64
      $region14: #{tpu_custom_call.1} parent=11 // pred_check_branch
        %296 = sbr.rel (%p294) target = $region16
      $region15: #{tpu_custom_call.1} parent=11 // pred_region
        _
      $region16: #{tpu_custom_call.1} parent=11 // pred_fallthru
        _
      // Predicated region
      $region17: #{tpu_custom_call.1} parent=11 // pred_check
        %p297 = pneg %p85
      $region18: #{tpu_custom_call.1} parent=11 // pred_check_branch
        %299 = sbr.rel (%p297) target = $region20
      $region19: #{tpu_custom_call.1} parent=11 // pred_region
        _
      $region20: #{tpu_custom_call.1} parent=11 // pred_fallthru
        _
      // Predicated region
      $region21: #{tpu_custom_call.1} parent=11 // pred_check
        %p300 = pneg %p106
      $region22: #{tpu_custom_call.1} parent=11 // pred_check_branch
        %302 = sbr.rel (%p300) target = $region24
      $region23: #{tpu_custom_call.1} parent=11 // pred_region
        _
      $region24: #{tpu_custom_call.1} parent=11 // pred_fallthru
        _
      // Predicated region
      $region25: #{tpu_custom_call.1} parent=11 // pred_check
        %p303 = pneg %p127
      $region26: #{tpu_custom_call.1} parent=11 // pred_check_branch
        %305 = sbr.rel (%p303) target = $region28
      $region27: #{tpu_custom_call.1} parent=11 // pred_region
        _
      $region28: #{tpu_custom_call.1} parent=11 // pred_fallthru
        _
      // Predicated region
      $region29: #{tpu_custom_call.1} parent=11 // pred_check
        %p306 = pneg %p148
      $region30: #{tpu_custom_call.1} parent=11 // pred_check_branch
        %308 = sbr.rel (%p306) target = $region32
      $region31: #{tpu_custom_call.1} parent=11 // pred_region
        _
      $region32: #{tpu_custom_call.1} parent=11 // pred_fallthru
        _
      // Predicated region
      $region33: #{tpu_custom_call.1} parent=11 // pred_check
        %p309 = pneg %p169
      $region34: #{tpu_custom_call.1} parent=11 // pred_check_branch
        %311 = sbr.rel (%p309) target = $region36
      $region35: #{tpu_custom_call.1} parent=11 // pred_region
        _
      $region36: #{tpu_custom_call.1} parent=11 // pred_fallthru
        _
      // Predicated region
      $region37: #{tpu_custom_call.1} parent=11 // pred_check
        %p312 = pneg %p190
      $region38: #{tpu_custom_call.1} parent=11 // pred_check_branch
        %314 = sbr.rel (%p312) target = $region40
      $region39: #{tpu_custom_call.1} parent=11 // pred_region
        _
      $region40: #{tpu_custom_call.1} parent=11 // pred_fallthru
        _
      // Predicated region
      $region41: #{tpu_custom_call.1} parent=11 // pred_check
        %p315 = pneg %p211
      $region42: #{tpu_custom_call.1} parent=11 // pred_check_branch
        %317 = sbr.rel (%p315) target = $region44
      $region43: #{tpu_custom_call.1} parent=11 // pred_region
        _
      $region44: #{tpu_custom_call.1} parent=11 // pred_fallthru
        _
      // Predicated region
      $region45: #{tpu_custom_call.1} parent=11 // pred_check
        %p318 = pneg %p232
      $region46: #{tpu_custom_call.1} parent=11 // pred_check_branch
        %320 = sbr.rel (%p318) target = $region48
      $region47: #{tpu_custom_call.1} parent=11 // pred_region
        _
      $region48: #{tpu_custom_call.1} parent=11 // pred_fallthru
        _
      // Predicated region
      $region49: #{tpu_custom_call.1} parent=11 // pred_check
        %p321 = pneg %p253
      $region50: #{tpu_custom_call.1} parent=11 // pred_check_branch
        %323 = sbr.rel (%p321) target = $region52
      $region51: #{tpu_custom_call.1} parent=11 // pred_region
        _
      $region52: #{tpu_custom_call.1} parent=11 // pred_fallthru
        _
    $region12: #{tpu_custom_call.1} parent=5 // pred_fallthru
      _
    %p324 = scmp.lt.s32.totalorder %s17, 2
    // Predicated region
    $region53: #{tpu_custom_call.1} parent=5 // pred_check
      %p325 = pneg %p324
    $region54: #{tpu_custom_call.1} parent=5 // pred_check_branch
      %327 = sbr.rel (%p325) target = $region56
    $region55: #{tpu_custom_call.1} parent=5 // pred_region
      // Predicated region
      $region57: #{tpu_custom_call.1} parent=55 // pred_check
        %p328 = pneg %p37
      $region58: #{tpu_custom_call.1} parent=55 // pred_check_branch
        %330 = sbr.rel (%p328) target = $region60
      $region59: #{tpu_custom_call.1} parent=55 // pred_region
        %p331 = scmp.lt.s32.totalorder %s17, 1
        %s332 = scalar_select %p331, %s17, 1
        %s333 = smul.addr %s332, 32
        %s334 = smul.addr %s333, 8
        %s335 = scalar_lea.vmem %s0, %s334
      $region60: #{tpu_custom_call.1} parent=55 // pred_fallthru
        _
    $region56: #{tpu_custom_call.1} parent=5 // pred_fallthru
      _
    %p336 = scmp.le.s32.totalorder 1, %s17
    %p337 = scmp.lt.s32.totalorder %s17, 3
    %p338 = pnand %p336, %p337
    %p339 = pneg %p338
    // Predicated region
    $region61: #{tpu_custom_call.1} parent=5 // pred_check
      _
    $region62: #{tpu_custom_call.1} parent=5 // pred_check_branch
      %341 = sbr.rel (%p338) target = $region64
    $region63: #{tpu_custom_call.1} parent=5 // pred_region
      %s342 = ssub.s32 %s17, 1
      %p343 = scmp.lt.s32.totalorder %s22, 1
      %s344 = scalar_select %p343, %s22, 1
      %s345 = smul.addr %s344, 32
      %s346 = smul.addr %s345, 8
      %s347 = scalar_lea.vmem %s0, %s346
      %p348 = pneg %p43
      %p349 = pneg %p40
      %p350 = pneg %p64
      %p351 = pneg %p61
      %p352 = pneg %p85
      %p353 = pneg %p82
      %p354 = pneg %p106
      %p355 = pneg %p103
      %p356 = pneg %p127
      %p357 = pneg %p124
      %p358 = pneg %p148
      %p359 = pneg %p145
      %p360 = pneg %p169
      %p361 = pneg %p166
      %p362 = pneg %p190
      %p363 = pneg %p187
      %p364 = pneg %p211
      %p365 = pneg %p208
      %p366 = pneg %p232
      %p367 = pneg %p229
      %p368 = pneg %p253
      %p369 = pneg %p250
      %p370 = pneg %p279
      %p371 = pneg %p276
      %p372 = scmp.lt.s32.totalorder %s22, 1
      %s373 = scalar_select %p372, %s22, 1
      %s374 = smul.addr %s373, 32
      %s375 = smul.addr %s374, 8
      %s376 = scalar_lea.vmem %s11, %s375
      %p377 = scmp.lt.s32.totalorder %s22, 1
      %s378 = scalar_select %p377, %s22, 1
      %s379 = smul.addr %s378, 32
      %s380 = smul.addr %s379, 8
      %s381 = scalar_lea.vmem %s0, %s380
      %p382 = scmp.lt.s32.totalorder %s22, 1
      %s383 = scalar_select %p382, %s22, 1
      %s384 = smul.addr %s383, 32
      %s385 = smul.addr %s384, 8
      %s386 = scalar_lea.vmem %s11, %s385
      %v387 = vld [vmem:[%s381] sm:$0xff]
      %v388 = vld [vmem:[%s381 + $0x8] sm:$0xff]
      %v389 = vld [vmem:[%s381 + $0x10] sm:$0xff]
      %v390 = vld [vmem:[%s381 + $0x18] sm:$0xff]
      %v391 = vld [vmem:[%s381 + $0x20] sm:$0xff]
      %v392 = vld [vmem:[%s381 + $0x28] sm:$0xff]
      %v393 = vld [vmem:[%s381 + $0x30] sm:$0xff]
      %v394 = vld [vmem:[%s381 + $0x38] sm:$0xff]
      %v395 = vld [vmem:[%s381 + $0x40] sm:$0xff]
      %v396 = vld [vmem:[%s381 + $0x48] sm:$0xff]
      %v397 = vld [vmem:[%s381 + $0x50] sm:$0xff]
      %v398 = vld [vmem:[%s381 + $0x58] sm:$0xff]
      %v399 = vld [vmem:[%s381 + $0x60] sm:$0xff]
      %v400 = vld [vmem:[%s381 + $0x68] sm:$0xff]
      %v401 = vld [vmem:[%s381 + $0x70] sm:$0xff]
      %v402 = vld [vmem:[%s381 + $0x78] sm:$0xff]
      %v403 = vld [vmem:[%s381 + $0x80] sm:$0xff]
      %v404 = vld [vmem:[%s381 + $0x88] sm:$0xff]
      %v405 = vld [vmem:[%s381 + $0x90] sm:$0xff]
      %v406 = vld [vmem:[%s381 + $0x98] sm:$0xff]
      %v407 = vld [vmem:[%s381 + $0xa0] sm:$0xff]
      %v408 = vld [vmem:[%s381 + $0xa8] sm:$0xff]
      %v409 = vld [vmem:[%s381 + $0xb0] sm:$0xff]
      %v410 = vld [vmem:[%s381 + $0xb8] sm:$0xff]
      %v411 = vld [vmem:[%s381 + $0xc0] sm:$0xff]
      %v412 = vld [vmem:[%s381 + $0xc8] sm:$0xff]
      %v413 = vld [vmem:[%s381 + $0xd0] sm:$0xff]
      %v414 = vld [vmem:[%s381 + $0xd8] sm:$0xff]
      %v415 = vld [vmem:[%s381 + $0xe0] sm:$0xff]
      %v416 = vld [vmem:[%s381 + $0xe8] sm:$0xff]
      %v417 = vld [vmem:[%s381 + $0xf0] sm:$0xff]
      %v418 = vld [vmem:[%s381 + $0xf8] sm:$0xff]
      %v419 = vld [vmem:[%s1] sm:$0x1]
      %v420 = vld [vmem:[%s2] sm:$0x1]
      %vm421 = vcmask 31744
      %v422 = vsel %vm421, %v387, 0.0
      %v423 = vsel %vm421, %v388, 0.0
      %v424 = vadd.f32 %v422, %v423
      %v425 = vsel %vm421, %v389, 0.0
      %v426 = vadd.f32 %v424, %v425
      %v427 = vsel %vm421, %v390, 0.0
      %v428 = vadd.f32 %v426, %v427
      %v429 = vsel %vm421, %v391, 0.0
      %v430 = vadd.f32 %v428, %v429
      %v431 = vsel %vm421, %v392, 0.0
      %v432 = vadd.f32 %v430, %v431
      %v433 = vsel %vm421, %v393, 0.0
      %v434 = vadd.f32 %v432, %v433
      %v435 = vsel %vm421, %v394, 0.0
      %v436 = vadd.f32 %v434, %v435
      %v437 = vsel %vm421, %v395, 0.0
      %v438 = vadd.f32 %v436, %v437
      %v439 = vsel %vm421, %v396, 0.0
      %v440 = vadd.f32 %v438, %v439
      %v441 = vsel %vm421, %v397, 0.0
      %v442 = vadd.f32 %v440, %v441
      %v443 = vsel %vm421, %v398, 0.0
      %v444 = vadd.f32 %v442, %v443
      %v445 = vsel %vm421, %v399, 0.0
      %v446 = vadd.f32 %v444, %v445
      %v447 = vsel %vm421, %v400, 0.0
      %v448 = vadd.f32 %v446, %v447
      %v449 = vsel %vm421, %v401, 0.0
      %v450 = vadd.f32 %v448, %v449
      %v451 = vsel %vm421, %v402, 0.0
      %v452 = vadd.f32 %v450, %v451
      %v453 = vsel %vm421, %v403, 0.0
      %v454 = vadd.f32 %v452, %v453
      %v455 = vsel %vm421, %v404, 0.0
      %v456 = vadd.f32 %v454, %v455
      %v457 = vsel %vm421, %v405, 0.0
      %v458 = vadd.f32 %v456, %v457
      %v459 = vsel %vm421, %v406, 0.0
      %v460 = vadd.f32 %v458, %v459
      %v461 = vsel %vm421, %v407, 0.0
      %v462 = vadd.f32 %v460, %v461
      %v463 = vsel %vm421, %v408, 0.0
      %v464 = vadd.f32 %v462, %v463
      %v465 = vsel %vm421, %v409, 0.0
      %v466 = vadd.f32 %v464, %v465
      %v467 = vsel %vm421, %v410, 0.0
      %v468 = vadd.f32 %v466, %v467
      %v469 = vsel %vm421, %v411, 0.0
      %v470 = vadd.f32 %v468, %v469
      %v471 = vsel %vm421, %v412, 0.0
      %v472 = vadd.f32 %v470, %v471
      %v473 = vsel %vm421, %v413, 0.0
      %v474 = vadd.f32 %v472, %v473
      %v475 = vsel %vm421, %v414, 0.0
      %v476 = vadd.f32 %v474, %v475
      %v477 = vsel %vm421, %v415, 0.0
      %v478 = vadd.f32 %v476, %v477
      %v479 = vsel %vm421, %v416, 0.0
      %v480 = vadd.f32 %v478, %v479
      %v481 = vsel %vm421, %v417, 0.0
      %v482 = vadd.f32 %v480, %v481
      %v483 = vsel %vm421, %v418, 0.0
      %v484 = vadd.f32 %v482, %v483
      %485 = vadd.xlane.f32.xlu0 %v484
      %v486 = vpop.xlane.xlu0 %485
      %v487 = vrot.slane %v486, 4
      %v488 = vadd.f32 %v486, %v487
      %v489 = vrot.slane %v488, 2
      %v490 = vadd.f32 %v488, %v489
      %v491 = vrot.slane %v490, 1
      %v492 = vadd.f32 %v490, %v491
      %s493 = vtos %v492
      %v494 = vrcp.pop 1024.0
      %s495 = vtos %v494
      %s496 = smul.f32 %s493, %s495
      %v497 = vstv %s496
      %v498 = vsub.f32 %v387, %v497
      %v499 = vsub.f32 %v388, %v497
      %v500 = vsub.f32 %v389, %v497
      %v501 = vsub.f32 %v390, %v497
      %v502 = vsub.f32 %v391, %v497
      %v503 = vsub.f32 %v392, %v497
      %v504 = vsub.f32 %v393, %v497
      %v505 = vsub.f32 %v394, %v497
      %v506 = vsub.f32 %v395, %v497
      %v507 = vsub.f32 %v396, %v497
      %v508 = vsub.f32 %v397, %v497
      %v509 = vsub.f32 %v398, %v497
      %v510 = vsub.f32 %v399, %v497
      %v511 = vsub.f32 %v400, %v497
      %v512 = vsub.f32 %v401, %v497
      %v513 = vsub.f32 %v402, %v497
      %v514 = vsub.f32 %v403, %v497
      %v515 = vsub.f32 %v404, %v497
      %v516 = vsub.f32 %v405, %v497
      %v517 = vsub.f32 %v406, %v497
      %v518 = vsub.f32 %v407, %v497
      %v519 = vsub.f32 %v408, %v497
      %v520 = vsub.f32 %v409, %v497
      %v521 = vsub.f32 %v410, %v497
      %v522 = vsub.f32 %v411, %v497
      %v523 = vsub.f32 %v412, %v497
      %v524 = vsub.f32 %v413, %v497
      %v525 = vsub.f32 %v414, %v497
      %v526 = vsub.f32 %v415, %v497
      %v527 = vsub.f32 %v416, %v497
      %v528 = vsub.f32 %v417, %v497
      %v529 = vsub.f32 %v418, %v497
      %v530 = vmul.f32 %v498, %v498
      %v531 = vmul.f32 %v499, %v499
      %v532 = vmul.f32 %v500, %v500
      %v533 = vmul.f32 %v501, %v501
      %v534 = vmul.f32 %v502, %v502
      %v535 = vmul.f32 %v503, %v503
      %v536 = vmul.f32 %v504, %v504
      %v537 = vmul.f32 %v505, %v505
      %v538 = vmul.f32 %v506, %v506
      %v539 = vmul.f32 %v507, %v507
      %v540 = vmul.f32 %v508, %v508
      %v541 = vmul.f32 %v509, %v509
      %v542 = vmul.f32 %v510, %v510
      %v543 = vmul.f32 %v511, %v511
      %v544 = vmul.f32 %v512, %v512
      %v545 = vmul.f32 %v513, %v513
      %v546 = vmul.f32 %v514, %v514
      %v547 = vmul.f32 %v515, %v515
      %v548 = vmul.f32 %v516, %v516
      %v549 = vmul.f32 %v517, %v517
      %v550 = vmul.f32 %v518, %v518
      %v551 = vmul.f32 %v519, %v519
      %v552 = vmul.f32 %v520, %v520
      %v553 = vmul.f32 %v521, %v521
      %v554 = vmul.f32 %v522, %v522
      %v555 = vmul.f32 %v523, %v523
      %v556 = vmul.f32 %v524, %v524
      %v557 = vmul.f32 %v525, %v525
      %v558 = vmul.f32 %v526, %v526
      %v559 = vmul.f32 %v527, %v527
      %v560 = vmul.f32 %v528, %v528
      %v561 = vmul.f32 %v529, %v529
      %v562 = vsel %vm421, %v530, 0.0
      %v563 = vsel %vm421, %v531, 0.0
      %v564 = vadd.f32 %v562, %v563
      %v565 = vsel %vm421, %v532, 0.0
      %v566 = vadd.f32 %v564, %v565
      %v567 = vsel %vm421, %v533, 0.0
      %v568 = vadd.f32 %v566, %v567
      %v569 = vsel %vm421, %v534, 0.0
      %v570 = vadd.f32 %v568, %v569
      %v571 = vsel %vm421, %v535, 0.0
      %v572 = vadd.f32 %v570, %v571
      %v573 = vsel %vm421, %v536, 0.0
      %v574 = vadd.f32 %v572, %v573
      %v575 = vsel %vm421, %v537, 0.0
      %v576 = vadd.f32 %v574, %v575
      %v577 = vsel %vm421, %v538, 0.0
      %v578 = vadd.f32 %v576, %v577
      %v579 = vsel %vm421, %v539, 0.0
      %v580 = vadd.f32 %v578, %v579
      %v581 = vsel %vm421, %v540, 0.0
      %v582 = vadd.f32 %v580, %v581
      %v583 = vsel %vm421, %v541, 0.0
      %v584 = vadd.f32 %v582, %v583
      %v585 = vsel %vm421, %v542, 0.0
      %v586 = vadd.f32 %v584, %v585
      %v587 = vsel %vm421, %v543, 0.0
      %v588 = vadd.f32 %v586, %v587
      %v589 = vsel %vm421, %v544, 0.0
      %v590 = vadd.f32 %v588, %v589
      %v591 = vsel %vm421, %v545, 0.0
      %v592 = vadd.f32 %v590, %v591
      %v593 = vsel %vm421, %v546, 0.0
      %v594 = vadd.f32 %v592, %v593
      %v595 = vsel %vm421, %v547, 0.0
      %v596 = vadd.f32 %v594, %v595
      %v597 = vsel %vm421, %v548, 0.0
      %v598 = vadd.f32 %v596, %v597
      %v599 = vsel %vm421, %v549, 0.0
      %v600 = vadd.f32 %v598, %v599
      %v601 = vsel %vm421, %v550, 0.0
      %v602 = vadd.f32 %v600, %v601
      %v603 = vsel %vm421, %v551, 0.0
      %v604 = vadd.f32 %v602, %v603
      %v605 = vsel %vm421, %v552, 0.0
      %v606 = vadd.f32 %v604, %v605
      %v607 = vsel %vm421, %v553, 0.0
      %v608 = vadd.f32 %v606, %v607
      %v609 = vsel %vm421, %v554, 0.0
      %v610 = vadd.f32 %v608, %v609
      %v611 = vsel %vm421, %v555, 0.0
      %v612 = vadd.f32 %v610, %v611
      %v613 = vsel %vm421, %v556, 0.0
      %v614 = vadd.f32 %v612, %v613
      %v615 = vsel %vm421, %v557, 0.0
      %v616 = vadd.f32 %v614, %v615
      %v617 = vsel %vm421, %v558, 0.0
      %v618 = vadd.f32 %v616, %v617
      %v619 = vsel %vm421, %v559, 0.0
      %v620 = vadd.f32 %v618, %v619
      %v621 = vsel %vm421, %v560, 0.0
      %v622 = vadd.f32 %v620, %v621
      %v623 = vsel %vm421, %v561, 0.0
      %v624 = vadd.f32 %v622, %v623
      %625 = vadd.xlane.f32.xlu0 %v624
      %v626 = vpop.xlane.xlu0 %625
      %v627 = vrot.slane %v626, 4
      %v628 = vadd.f32 %v626, %v627
      %v629 = vrot.slane %v628, 2
      %v630 = vadd.f32 %v628, %v629
      %v631 = vrot.slane %v630, 1
      %v632 = vadd.f32 %v630, %v631
      %s633 = vtos %v632
      %v634 = vrcp.pop 1024.0
      %s635 = vtos %v634
      %s636 = smul.f32 %s633, %s635
      %s637 = sadd.f32 %s636, 1e-06
      %v638 = vstv %s637
      %v639 = vrsqrt.pop %v638
      %s640 = vtos %v639
      %v641 = vstv %s640
      %v642 = vmul.f32 %v498, %v641
      %v643 = vmul.f32 %v499, %v641
      %v644 = vmul.f32 %v500, %v641
      %v645 = vmul.f32 %v501, %v641
      %v646 = vmul.f32 %v502, %v641
      %v647 = vmul.f32 %v503, %v641
      %v648 = vmul.f32 %v504, %v641
      %v649 = vmul.f32 %v505, %v641
      %v650 = vmul.f32 %v506, %v641
      %v651 = vmul.f32 %v507, %v641
      %v652 = vmul.f32 %v508, %v641
      %v653 = vmul.f32 %v509, %v641
      %v654 = vmul.f32 %v510, %v641
      %v655 = vmul.f32 %v511, %v641
      %v656 = vmul.f32 %v512, %v641
      %v657 = vmul.f32 %v513, %v641
      %v658 = vmul.f32 %v514, %v641
      %v659 = vmul.f32 %v515, %v641
      %v660 = vmul.f32 %v516, %v641
      %v661 = vmul.f32 %v517, %v641
      %v662 = vmul.f32 %v518, %v641
      %v663 = vmul.f32 %v519, %v641
      %v664 = vmul.f32 %v520, %v641
      %v665 = vmul.f32 %v521, %v641
      %v666 = vmul.f32 %v522, %v641
      %v667 = vmul.f32 %v523, %v641
      %v668 = vmul.f32 %v524, %v641
      %v669 = vmul.f32 %v525, %v641
      %v670 = vmul.f32 %v526, %v641
      %v671 = vmul.f32 %v527, %v641
      %v672 = vmul.f32 %v528, %v641
      %v673 = vmul.f32 %v529, %v641
      %v675 = vlaneseq
      %v676 = vshrl.u32 %v675, 7
      %v677 = vsub.s32 0, %v676
      %v678 = vrot.slane %v419, %v677
      %v680 = vmul.f32 %v642, %v678
      %v681 = vmul.f32 %v643, %v678
      %v682 = vmul.f32 %v644, %v678
      %v683 = vmul.f32 %v645, %v678
      %v684 = vmul.f32 %v646, %v678
      %v685 = vmul.f32 %v647, %v678
      %v686 = vmul.f32 %v648, %v678
      %v687 = vmul.f32 %v649, %v678
      %v688 = vmul.f32 %v650, %v678
      %v689 = vmul.f32 %v651, %v678
      %v690 = vmul.f32 %v652, %v678
      %v691 = vmul.f32 %v653, %v678
      %v692 = vmul.f32 %v654, %v678
      %v693 = vmul.f32 %v655, %v678
      %v694 = vmul.f32 %v656, %v678
      %v695 = vmul.f32 %v657, %v678
      %v696 = vmul.f32 %v658, %v678
      %v697 = vmul.f32 %v659, %v678
      %v698 = vmul.f32 %v660, %v678
      %v699 = vmul.f32 %v661, %v678
      %v700 = vmul.f32 %v662, %v678
      %v701 = vmul.f32 %v663, %v678
      %v702 = vmul.f32 %v664, %v678
      %v703 = vmul.f32 %v665, %v678
      %v704 = vmul.f32 %v666, %v678
      %v705 = vmul.f32 %v667, %v678
      %v706 = vmul.f32 %v668, %v678
      %v707 = vmul.f32 %v669, %v678
      %v708 = vmul.f32 %v670, %v678
      %v709 = vmul.f32 %v671, %v678
      %v710 = vmul.f32 %v672, %v678
      %v711 = vmul.f32 %v673, %v678
      %v713 = vlaneseq
      %v714 = vshrl.u32 %v713, 7
      %v715 = vsub.s32 0, %v714
      %v716 = vrot.slane %v420, %v715
      %v718 = vadd.f32 %v680, %v716
      %v719 = vadd.f32 %v681, %v716
      %v720 = vadd.f32 %v682, %v716
      %v721 = vadd.f32 %v683, %v716
      %v722 = vadd.f32 %v684, %v716
      %v723 = vadd.f32 %v685, %v716
      %v724 = vadd.f32 %v686, %v716
      %v725 = vadd.f32 %v687, %v716
      %v726 = vadd.f32 %v688, %v716
      %v727 = vadd.f32 %v689, %v716
      %v728 = vadd.f32 %v690, %v716
      %v729 = vadd.f32 %v691, %v716
      %v730 = vadd.f32 %v692, %v716
      %v731 = vadd.f32 %v693, %v716
      %v732 = vadd.f32 %v694, %v716
      %v733 = vadd.f32 %v695, %v716
      %v734 = vadd.f32 %v696, %v716
      %v735 = vadd.f32 %v697, %v716
      %v736 = vadd.f32 %v698, %v716
      %v737 = vadd.f32 %v699, %v716
      %v738 = vadd.f32 %v700, %v716
      %v739 = vadd.f32 %v701, %v716
      %v740 = vadd.f32 %v702, %v716
      %v741 = vadd.f32 %v703, %v716
      %v742 = vadd.f32 %v704, %v716
      %v743 = vadd.f32 %v705, %v716
      %v744 = vadd.f32 %v706, %v716
      %v745 = vadd.f32 %v707, %v716
      %v746 = vadd.f32 %v708, %v716
      %v747 = vadd.f32 %v709, %v716
      %v748 = vadd.f32 %v710, %v716
      %v749 = vadd.f32 %v711, %v716
      %v750 = vxor.u32 %v718, 2147483648
      %v751 = vxor.u32 %v719, 2147483648
      %v752 = vxor.u32 %v720, 2147483648
      %v753 = vxor.u32 %v721, 2147483648
      %v754 = vxor.u32 %v722, 2147483648
      %v755 = vxor.u32 %v723, 2147483648
      %v756 = vxor.u32 %v724, 2147483648
      %v757 = vxor.u32 %v725, 2147483648
      %v758 = vxor.u32 %v726, 2147483648
      %v759 = vxor.u32 %v727, 2147483648
      %v760 = vxor.u32 %v728, 2147483648
      %v761 = vxor.u32 %v729, 2147483648
      %v762 = vxor.u32 %v730, 2147483648
      %v763 = vxor.u32 %v731, 2147483648
      %v764 = vxor.u32 %v732, 2147483648
      %v765 = vxor.u32 %v733, 2147483648
      %v766 = vxor.u32 %v734, 2147483648
      %v767 = vxor.u32 %v735, 2147483648
      %v768 = vxor.u32 %v736, 2147483648
      %v769 = vxor.u32 %v737, 2147483648
      %v770 = vxor.u32 %v738, 2147483648
      %v771 = vxor.u32 %v739, 2147483648
      %v772 = vxor.u32 %v740, 2147483648
      %v773 = vxor.u32 %v741, 2147483648
      %v774 = vxor.u32 %v742, 2147483648
      %v775 = vxor.u32 %v743, 2147483648
      %v776 = vxor.u32 %v744, 2147483648
      %v777 = vxor.u32 %v745, 2147483648
      %v778 = vxor.u32 %v746, 2147483648
      %v779 = vxor.u32 %v747, 2147483648
      %v780 = vxor.u32 %v748, 2147483648
      %v781 = vxor.u32 %v749, 2147483648
      %v782 = vmul.f32 %v750, 1.442695
      %v783 = vpow.pop %v782
      %v784 = vmul.f32 %v751, 1.442695
      %v785 = vpow.pop %v784
      %v786 = vmul.f32 %v752, 1.442695
      %v787 = vpow.pop %v786
      %v788 = vmul.f32 %v753, 1.442695
      %v789 = vpow.pop %v788
      %v790 = vmul.f32 %v754, 1.442695
      %v791 = vpow.pop %v790
      %v792 = vmul.f32 %v755, 1.442695
      %v793 = vpow.pop %v792
      %v794 = vmul.f32 %v756, 1.442695
      %v795 = vpow.pop %v794
      %v796 = vmul.f32 %v757, 1.442695
      %v797 = vpow.pop %v796
      %v798 = vmul.f32 %v758, 1.442695
      %v799 = vpow.pop %v798
      %v800 = vmul.f32 %v759, 1.442695
      %v801 = vpow.pop %v800
      %v802 = vmul.f32 %v760, 1.442695
      %v803 = vpow.pop %v802
      %v804 = vmul.f32 %v761, 1.442695
      %v805 = vpow.pop %v804
      %v806 = vmul.f32 %v762, 1.442695
      %v807 = vpow.pop %v806
      %v808 = vmul.f32 %v763, 1.442695
      %v809 = vpow.pop %v808
      %v810 = vmul.f32 %v764, 1.442695
      %v811 = vpow.pop %v810
      %v812 = vmul.f32 %v765, 1.442695
      %v813 = vpow.pop %v812
      %v814 = vmul.f32 %v766, 1.442695
      %v815 = vpow.pop %v814
      %v816 = vmul.f32 %v767, 1.442695
      %v817 = vpow.pop %v816
      %v818 = vmul.f32 %v768, 1.442695
      %v819 = vpow.pop %v818
      %v820 = vmul.f32 %v769, 1.442695
      %v821 = vpow.pop %v820
      %v822 = vmul.f32 %v770, 1.442695
      %v823 = vpow.pop %v822
      %v824 = vmul.f32 %v771, 1.442695
      %v825 = vpow.pop %v824
      %v826 = vmul.f32 %v772, 1.442695
      %v827 = vpow.pop %v826
      %v828 = vmul.f32 %v773, 1.442695
      %v829 = vpow.pop %v828
      %v830 = vmul.f32 %v774, 1.442695
      %v831 = vpow.pop %v830
      %v832 = vmul.f32 %v775, 1.442695
      %v833 = vpow.pop %v832
      %v834 = vmul.f32 %v776, 1.442695
      %v835 = vpow.pop %v834
      %v836 = vmul.f32 %v777, 1.442695
      %v837 = vpow.pop %v836
      %v838 = vmul.f32 %v778, 1.442695
      %v839 = vpow.pop %v838
      %v840 = vmul.f32 %v779, 1.442695
      %v841 = vpow.pop %v840
      %v842 = vmul.f32 %v780, 1.442695
      %v843 = vpow.pop %v842
      %v844 = vmul.f32 %v781, 1.442695
      %v845 = vpow.pop %v844
      %v846 = vadd.f32 %v783, 1.0
      %v847 = vadd.f32 %v785, 1.0
      %v848 = vadd.f32 %v787, 1.0
      %v849 = vadd.f32 %v789, 1.0
      %v850 = vadd.f32 %v791, 1.0
      %v851 = vadd.f32 %v793, 1.0
      %v852 = vadd.f32 %v795, 1.0
      %v853 = vadd.f32 %v797, 1.0
      %v854 = vadd.f32 %v799, 1.0
      %v855 = vadd.f32 %v801, 1.0
      %v856 = vadd.f32 %v803, 1.0
      %v857 = vadd.f32 %v805, 1.0
      %v858 = vadd.f32 %v807, 1.0
      %v859 = vadd.f32 %v809, 1.0
      %v860 = vadd.f32 %v811, 1.0
      %v861 = vadd.f32 %v813, 1.0
      %v862 = vadd.f32 %v815, 1.0
      %v863 = vadd.f32 %v817, 1.0
      %v864 = vadd.f32 %v819, 1.0
      %v865 = vadd.f32 %v821, 1.0
      %v866 = vadd.f32 %v823, 1.0
      %v867 = vadd.f32 %v825, 1.0
      %v868 = vadd.f32 %v827, 1.0
      %v869 = vadd.f32 %v829, 1.0
      %v870 = vadd.f32 %v831, 1.0
      %v871 = vadd.f32 %v833, 1.0
      %v872 = vadd.f32 %v835, 1.0
      %v873 = vadd.f32 %v837, 1.0
      %v874 = vadd.f32 %v839, 1.0
      %v875 = vadd.f32 %v841, 1.0
      %v876 = vadd.f32 %v843, 1.0
      %v877 = vadd.f32 %v845, 1.0
      %v878 = vrcp.pop %v846
      %v879 = vmul.f32 1.0, %v878
      %v880 = vrcp.pop %v847
      %v881 = vmul.f32 1.0, %v880
      %v882 = vrcp.pop %v848
      %v883 = vmul.f32 1.0, %v882
      %v884 = vrcp.pop %v849
      %v885 = vmul.f32 1.0, %v884
      %v886 = vrcp.pop %v850
      %v887 = vmul.f32 1.0, %v886
      %v888 = vrcp.pop %v851
      %v889 = vmul.f32 1.0, %v888
      %v890 = vrcp.pop %v852
      %v891 = vmul.f32 1.0, %v890
      %v892 = vrcp.pop %v853
      %v893 = vmul.f32 1.0, %v892
      %v894 = vrcp.pop %v854
      %v895 = vmul.f32 1.0, %v894
      %v896 = vrcp.pop %v855
      %v897 = vmul.f32 1.0, %v896
      %v898 = vrcp.pop %v856
      %v899 = vmul.f32 1.0, %v898
      %v900 = vrcp.pop %v857
      %v901 = vmul.f32 1.0, %v900
      %v902 = vrcp.pop %v858
      %v903 = vmul.f32 1.0, %v902
      %v904 = vrcp.pop %v859
      %v905 = vmul.f32 1.0, %v904
      %v906 = vrcp.pop %v860
      %v907 = vmul.f32 1.0, %v906
      %v908 = vrcp.pop %v861
      %v909 = vmul.f32 1.0, %v908
      %v910 = vrcp.pop %v862
      %v911 = vmul.f32 1.0, %v910
      %v912 = vrcp.pop %v863
      %v913 = vmul.f32 1.0, %v912
      %v914 = vrcp.pop %v864
      %v915 = vmul.f32 1.0, %v914
      %v916 = vrcp.pop %v865
      %v917 = vmul.f32 1.0, %v916
      %v918 = vrcp.pop %v866
      %v919 = vmul.f32 1.0, %v918
      %v920 = vrcp.pop %v867
      %v921 = vmul.f32 1.0, %v920
      %v922 = vrcp.pop %v868
      %v923 = vmul.f32 1.0, %v922
      %v924 = vrcp.pop %v869
      %v925 = vmul.f32 1.0, %v924
      %v926 = vrcp.pop %v870
      %v927 = vmul.f32 1.0, %v926
      %v928 = vrcp.pop %v871
      %v929 = vmul.f32 1.0, %v928
      %v930 = vrcp.pop %v872
      %v931 = vmul.f32 1.0, %v930
      %v932 = vrcp.pop %v873
      %v933 = vmul.f32 1.0, %v932
      %v934 = vrcp.pop %v874
      %v935 = vmul.f32 1.0, %v934
      %v936 = vrcp.pop %v875
      %v937 = vmul.f32 1.0, %v936
      %v938 = vrcp.pop %v876
      %v939 = vmul.f32 1.0, %v938
      %v940 = vrcp.pop %v877
      %v941 = vmul.f32 1.0, %v940
      %v942 = vmul.f32 %v718, %v879
      %v943 = vmul.f32 %v719, %v881
      %v944 = vmul.f32 %v720, %v883
      %v945 = vmul.f32 %v721, %v885
      %v946 = vmul.f32 %v722, %v887
      %v947 = vmul.f32 %v723, %v889
      %v948 = vmul.f32 %v724, %v891
      %v949 = vmul.f32 %v725, %v893
      %v950 = vmul.f32 %v726, %v895
      %v951 = vmul.f32 %v727, %v897
      %v952 = vmul.f32 %v728, %v899
      %v953 = vmul.f32 %v729, %v901
      %v954 = vmul.f32 %v730, %v903
      %v955 = vmul.f32 %v731, %v905
      %v956 = vmul.f32 %v732, %v907
      %v957 = vmul.f32 %v733, %v909
      %v958 = vmul.f32 %v734, %v911
      %v959 = vmul.f32 %v735, %v913
      %v960 = vmul.f32 %v736, %v915
      %v961 = vmul.f32 %v737, %v917
      %v962 = vmul.f32 %v738, %v919
      %v963 = vmul.f32 %v739, %v921
      %v964 = vmul.f32 %v740, %v923
      %v965 = vmul.f32 %v741, %v925
      %v966 = vmul.f32 %v742, %v927
      %v967 = vmul.f32 %v743, %v929
      %v968 = vmul.f32 %v744, %v931
      %v969 = vmul.f32 %v745, %v933
      %v970 = vmul.f32 %v746, %v935
      %v971 = vmul.f32 %v747, %v937
      %v972 = vmul.f32 %v748, %v939
      %v973 = vmul.f32 %v749, %v941
      %v974 = vld [vmem:[%s3] sm:$0xff]
      %v975 = vld [vmem:[%s3 + $0x8] sm:$0xff]
      %v976 = vld [vmem:[%s3 + $0x10] sm:$0xff]
      %v977 = vld [vmem:[%s3 + $0x18] sm:$0xff]
      %v978 = vld [vmem:[%s3 + $0x20] sm:$0xf]
      %v979 = vld [vmem:[%s4] sm:$0x1]
      %vm1012 = vcmask 1040384
      %v1013 = vrot.slane %v942, 7
      %v1014 = vrot.slane %v943, 7
      %v1015 = vsel %vm1012, %v1013, %v1014
      %v1016 = vrot.slane %v944, 7
      %v1017 = vrot.slane %v945, 7
      %v1018 = vsel %vm1012, %v1016, %v1017
      %v1019 = vrot.slane %v946, 7
      %v1020 = vrot.slane %v947, 7
      %v1021 = vsel %vm1012, %v1019, %v1020
      %v1022 = vrot.slane %v948, 7
      %v1023 = vrot.slane %v949, 7
      %v1024 = vsel %vm1012, %v1022, %v1023
      %v1025 = vrot.slane %v950, 7
      %v1026 = vrot.slane %v951, 7
      %v1027 = vsel %vm1012, %v1025, %v1026
      %v1028 = vrot.slane %v952, 7
      %v1029 = vrot.slane %v953, 7
      %v1030 = vsel %vm1012, %v1028, %v1029
      %v1031 = vrot.slane %v954, 7
      %v1032 = vrot.slane %v955, 7
      %v1033 = vsel %vm1012, %v1031, %v1032
      %v1034 = vrot.slane %v956, 7
      %v1035 = vrot.slane %v957, 7
      %v1036 = vsel %vm1012, %v1034, %v1035
      %v1037 = vrot.slane %v958, 7
      %v1038 = vrot.slane %v959, 7
      %v1039 = vsel %vm1012, %v1037, %v1038
      %v1040 = vrot.slane %v960, 7
      %v1041 = vrot.slane %v961, 7
      %v1042 = vsel %vm1012, %v1040, %v1041
      %v1043 = vrot.slane %v962, 7
      %v1044 = vrot.slane %v963, 7
      %v1045 = vsel %vm1012, %v1043, %v1044
      %v1046 = vrot.slane %v964, 7
      %v1047 = vrot.slane %v965, 7
      %v1048 = vsel %vm1012, %v1046, %v1047
      %v1049 = vrot.slane %v966, 7
      %v1050 = vrot.slane %v967, 7
      %v1051 = vsel %vm1012, %v1049, %v1050
      %v1052 = vrot.slane %v968, 7
      %v1053 = vrot.slane %v969, 7
      %v1054 = vsel %vm1012, %v1052, %v1053
      %v1055 = vrot.slane %v970, 7
      %v1056 = vrot.slane %v971, 7
      %v1057 = vsel %vm1012, %v1055, %v1056
      %v1058 = vrot.slane %v972, 7
      %v1059 = vrot.slane %v973, 7
      %v1060 = vsel %vm1012, %v1058, %v1059
      %v1108 = vsel %vm1012, 0.0, %v1013
      %v1109 = vsel %vm1012, 0.0, %v1016
      %v1110 = vsel %vm1012, 0.0, %v1019
      %v1111 = vsel %vm1012, 0.0, %v1022
      %v1112 = vsel %vm1012, 0.0, %v1025
      %v1113 = vsel %vm1012, 0.0, %v1028
      %v1114 = vsel %vm1012, 0.0, %v1031
      %v1115 = vsel %vm1012, 0.0, %v1034
      %v1116 = vsel %vm1012, 0.0, %v1037
      %v1117 = vsel %vm1012, 0.0, %v1040
      %v1118 = vsel %vm1012, 0.0, %v1043
      %v1119 = vsel %vm1012, 0.0, %v1046
      %v1120 = vsel %vm1012, 0.0, %v1049
      %v1121 = vsel %vm1012, 0.0, %v1052
      %v1122 = vsel %vm1012, 0.0, %v1055
      %v1123 = vsel %vm1012, 0.0, %v1058
      %v1124 = vsel %vm1012, %v1014, 0.0
      %v1125 = vsel %vm1012, %v1017, 0.0
      %v1126 = vsel %vm1012, %v1020, 0.0
      %v1127 = vsel %vm1012, %v1023, 0.0
      %v1128 = vsel %vm1012, %v1026, 0.0
      %v1129 = vsel %vm1012, %v1029, 0.0
      %v1130 = vsel %vm1012, %v1032, 0.0
      %v1131 = vsel %vm1012, %v1035, 0.0
      %v1132 = vsel %vm1012, %v1038, 0.0
      %v1133 = vsel %vm1012, %v1041, 0.0
      %v1134 = vsel %vm1012, %v1044, 0.0
      %v1135 = vsel %vm1012, %v1047, 0.0
      %v1136 = vsel %vm1012, %v1050, 0.0
      %v1137 = vsel %vm1012, %v1053, 0.0
      %v1138 = vsel %vm1012, %v1056, 0.0
      %v1139 = vsel %vm1012, %v1059, 0.0
      %vm1171 = vcmask 1046528
      %v1172 = vrot.slane 0.0, 1
      %v1173 = vsel %vm1171, %v1172, %v1172
      %v1174 = vrot.slane %v1108, 1
      %v1175 = vrot.slane %v1015, 1
      %v1176 = vsel %vm1171, %v1174, %v1175
      %v1177 = vrot.slane %v1124, 1
      %v1178 = vsel %vm1171, %v1175, %v1177
      %v1179 = vrot.slane %v1109, 1
      %v1180 = vrot.slane %v1018, 1
      %v1181 = vsel %vm1171, %v1179, %v1180
      %v1182 = vrot.slane %v1125, 1
      %v1183 = vsel %vm1171, %v1180, %v1182
      %v1184 = vrot.slane %v1110, 1
      %v1185 = vrot.slane %v1021, 1
      %v1186 = vsel %vm1171, %v1184, %v1185
      %v1187 = vrot.slane %v1126, 1
      %v1188 = vsel %vm1171, %v1185, %v1187
      %v1189 = vrot.slane %v1111, 1
      %v1190 = vrot.slane %v1024, 1
      %v1191 = vsel %vm1171, %v1189, %v1190
      %v1192 = vrot.slane %v1127, 1
      %v1193 = vsel %vm1171, %v1190, %v1192
      %v1194 = vrot.slane %v1112, 1
      %v1195 = vrot.slane %v1027, 1
      %v1196 = vsel %vm1171, %v1194, %v1195
      %v1197 = vrot.slane %v1128, 1
      %v1198 = vsel %vm1171, %v1195, %v1197
      %v1199 = vrot.slane %v1113, 1
      %v1200 = vrot.slane %v1030, 1
      %v1201 = vsel %vm1171, %v1199, %v1200
      %v1202 = vrot.slane %v1129, 1
      %v1203 = vsel %vm1171, %v1200, %v1202
      %v1204 = vrot.slane %v1114, 1
      %v1205 = vrot.slane %v1033, 1
      %v1206 = vsel %vm1171, %v1204, %v1205
      %v1207 = vrot.slane %v1130, 1
      %v1208 = vsel %vm1171, %v1205, %v1207
      %v1209 = vrot.slane %v1115, 1
      %v1210 = vrot.slane %v1036, 1
      %v1211 = vsel %vm1171, %v1209, %v1210
      %v1212 = vrot.slane %v1131, 1
      %v1213 = vsel %vm1171, %v1210, %v1212
      %v1214 = vrot.slane %v1116, 1
      %v1215 = vrot.slane %v1039, 1
      %v1216 = vsel %vm1171, %v1214, %v1215
      %v1217 = vrot.slane %v1132, 1
      %v1218 = vsel %vm1171, %v1215, %v1217
      %v1219 = vrot.slane %v1117, 1
      %v1220 = vrot.slane %v1042, 1
      %v1221 = vsel %vm1171, %v1219, %v1220
      %v1222 = vrot.slane %v1133, 1
      %v1223 = vsel %vm1171, %v1220, %v1222
      %v1224 = vrot.slane %v1118, 1
      %v1225 = vrot.slane %v1045, 1
      %v1226 = vsel %vm1171, %v1224, %v1225
      %v1227 = vrot.slane %v1134, 1
      %v1228 = vsel %vm1171, %v1225, %v1227
      %v1229 = vrot.slane %v1119, 1
      %v1230 = vrot.slane %v1048, 1
      %v1231 = vsel %vm1171, %v1229, %v1230
      %v1232 = vrot.slane %v1135, 1
      %v1233 = vsel %vm1171, %v1230, %v1232
      %v1234 = vrot.slane %v1120, 1
      %v1235 = vrot.slane %v1051, 1
      %v1236 = vsel %vm1171, %v1234, %v1235
      %v1237 = vrot.slane %v1136, 1
      %v1238 = vsel %vm1171, %v1235, %v1237
      %v1239 = vrot.slane %v1121, 1
      %v1240 = vrot.slane %v1054, 1
      %v1241 = vsel %vm1171, %v1239, %v1240
      %v1242 = vrot.slane %v1137, 1
      %v1243 = vsel %vm1171, %v1240, %v1242
      %v1244 = vrot.slane %v1122, 1
      %v1245 = vrot.slane %v1057, 1
      %v1246 = vsel %vm1171, %v1244, %v1245
      %v1247 = vrot.slane %v1138, 1
      %v1248 = vsel %vm1171, %v1245, %v1247
      %vm1249 = vcmask 1045504
      %v1250 = vrot.slane 0.0, 2
      %v1251 = vsel %vm1249, %v1250, %v1250
      %v1252 = vrot.slane %v1108, 2
      %v1253 = vrot.slane %v1015, 2
      %v1254 = vsel %vm1249, %v1252, %v1253
      %v1255 = vrot.slane %v1124, 2
      %v1256 = vsel %vm1249, %v1253, %v1255
      %v1257 = vrot.slane %v1109, 2
      %v1258 = vrot.slane %v1018, 2
      %v1259 = vsel %vm1249, %v1257, %v1258
      %v1260 = vrot.slane %v1125, 2
      %v1261 = vsel %vm1249, %v1258, %v1260
      %v1262 = vrot.slane %v1110, 2
      %v1263 = vrot.slane %v1021, 2
      %v1264 = vsel %vm1249, %v1262, %v1263
      %v1265 = vrot.slane %v1126, 2
      %v1266 = vsel %vm1249, %v1263, %v1265
      %v1267 = vrot.slane %v1111, 2
      %v1268 = vrot.slane %v1024, 2
      %v1269 = vsel %vm1249, %v1267, %v1268
      %v1270 = vrot.slane %v1127, 2
      %v1271 = vsel %vm1249, %v1268, %v1270
      %v1272 = vrot.slane %v1112, 2
      %v1273 = vrot.slane %v1027, 2
      %v1274 = vsel %vm1249, %v1272, %v1273
      %v1275 = vrot.slane %v1128, 2
      %v1276 = vsel %vm1249, %v1273, %v1275
      %v1277 = vrot.slane %v1113, 2
      %v1278 = vrot.slane %v1030, 2
      %v1279 = vsel %vm1249, %v1277, %v1278
      %v1280 = vrot.slane %v1129, 2
      %v1281 = vsel %vm1249, %v1278, %v1280
      %v1282 = vrot.slane %v1114, 2
      %v1283 = vrot.slane %v1033, 2
      %v1284 = vsel %vm1249, %v1282, %v1283
      %v1285 = vrot.slane %v1130, 2
      %v1286 = vsel %vm1249, %v1283, %v1285
      %v1287 = vrot.slane %v1115, 2
      %v1288 = vrot.slane %v1036, 2
      %v1289 = vsel %vm1249, %v1287, %v1288
      %v1290 = vrot.slane %v1131, 2
      %v1291 = vsel %vm1249, %v1288, %v1290
      %v1292 = vrot.slane %v1116, 2
      %v1293 = vrot.slane %v1039, 2
      %v1294 = vsel %vm1249, %v1292, %v1293
      %v1295 = vrot.slane %v1132, 2
      %v1296 = vsel %vm1249, %v1293, %v1295
      %v1297 = vrot.slane %v1117, 2
      %v1298 = vrot.slane %v1042, 2
      %v1299 = vsel %vm1249, %v1297, %v1298
      %v1300 = vrot.slane %v1133, 2
      %v1301 = vsel %vm1249, %v1298, %v1300
      %v1302 = vrot.slane %v1118, 2
      %v1303 = vrot.slane %v1045, 2
      %v1304 = vsel %vm1249, %v1302, %v1303
      %v1305 = vrot.slane %v1134, 2
      %v1306 = vsel %vm1249, %v1303, %v1305
      %v1307 = vrot.slane %v1119, 2
      %v1308 = vrot.slane %v1048, 2
      %v1309 = vsel %vm1249, %v1307, %v1308
      %v1310 = vrot.slane %v1135, 2
      %v1311 = vsel %vm1249, %v1308, %v1310
      %v1312 = vrot.slane %v1120, 2
      %v1313 = vrot.slane %v1051, 2
      %v1314 = vsel %vm1249, %v1312, %v1313
      %v1315 = vrot.slane %v1136, 2
      %v1316 = vsel %vm1249, %v1313, %v1315
      %v1317 = vrot.slane %v1121, 2
      %v1318 = vrot.slane %v1054, 2
      %v1319 = vsel %vm1249, %v1317, %v1318
      %v1320 = vrot.slane %v1137, 2
      %v1321 = vsel %vm1249, %v1318, %v1320
      %v1322 = vrot.slane %v1122, 2
      %v1323 = vrot.slane %v1057, 2
      %v1324 = vsel %vm1249, %v1322, %v1323
      %v1325 = vrot.slane %v1138, 2
      %v1326 = vsel %vm1249, %v1323, %v1325
      %v1329 = vrot.slane %v1123, 1
      %v1330 = vrot.slane %v1060, 1
      %v1331 = vsel %vm1171, %v1329, %v1330
      %v1332 = vrot.slane %v1139, 1
      %v1333 = vsel %vm1171, %v1330, %v1332
      %v1334 = vrot.slane %v1123, 2
      %v1335 = vrot.slane %v1060, 2
      %v1336 = vsel %vm1249, %v1334, %v1335
      %v1337 = vrot.slane %v1139, 2
      %v1338 = vsel %vm1249, %v1335, %v1337
      %1339 = vrot.lane.b32.xlu0 %v1173, 4
      %v1340 = vpop.permute.xlu0 %1339
      %1341 = vrot.lane.b32.xlu0 %v1176, 4
      %v1342 = vpop.permute.xlu0 %1341
      %1343 = vrot.lane.b32.xlu0 %v1178, 4
      %v1344 = vpop.permute.xlu0 %1343
      %1345 = vrot.lane.b32.xlu0 %v1181, 4
      %v1346 = vpop.permute.xlu0 %1345
      %1347 = vrot.lane.b32.xlu0 %v1183, 4
      %v1348 = vpop.permute.xlu0 %1347
      %1349 = vrot.lane.b32.xlu0 %v1186, 4
      %v1350 = vpop.permute.xlu0 %1349
      %1351 = vrot.lane.b32.xlu0 %v1188, 4
      %v1352 = vpop.permute.xlu0 %1351
      %1353 = vrot.lane.b32.xlu0 %v1191, 4
      %v1354 = vpop.permute.xlu0 %1353
      %1355 = vrot.lane.b32.xlu0 %v1193, 4
      %v1356 = vpop.permute.xlu0 %1355
      %1357 = vrot.lane.b32.xlu0 %v1196, 4
      %v1358 = vpop.permute.xlu0 %1357
      %1359 = vrot.lane.b32.xlu0 %v1198, 4
      %v1360 = vpop.permute.xlu0 %1359
      %1361 = vrot.lane.b32.xlu0 %v1201, 4
      %v1362 = vpop.permute.xlu0 %1361
      %1363 = vrot.lane.b32.xlu0 %v1203, 4
      %v1364 = vpop.permute.xlu0 %1363
      %1365 = vrot.lane.b32.xlu0 %v1206, 4
      %v1366 = vpop.permute.xlu0 %1365
      %1367 = vrot.lane.b32.xlu0 %v1208, 4
      %v1368 = vpop.permute.xlu0 %1367
      %1369 = vrot.lane.b32.xlu0 %v1211, 4
      %v1370 = vpop.permute.xlu0 %1369
      %1371 = vrot.lane.b32.xlu0 %v1213, 4
      %v1372 = vpop.permute.xlu0 %1371
      %1373 = vrot.lane.b32.xlu0 %v1216, 4
      %v1374 = vpop.permute.xlu0 %1373
      %1375 = vrot.lane.b32.xlu0 %v1218, 4
      %v1376 = vpop.permute.xlu0 %1375
      %1377 = vrot.lane.b32.xlu0 %v1221, 4
      %v1378 = vpop.permute.xlu0 %1377
      %1379 = vrot.lane.b32.xlu0 %v1223, 4
      %v1380 = vpop.permute.xlu0 %1379
      %1381 = vrot.lane.b32.xlu0 %v1226, 4
      %v1382 = vpop.permute.xlu0 %1381
      %1383 = vrot.lane.b32.xlu0 %v1228, 4
      %v1384 = vpop.permute.xlu0 %1383
      %1385 = vrot.lane.b32.xlu0 %v1231, 4
      %v1386 = vpop.permute.xlu0 %1385
      %1387 = vrot.lane.b32.xlu0 %v1233, 4
      %v1388 = vpop.permute.xlu0 %1387
      %1389 = vrot.lane.b32.xlu0 %v1236, 4
      %v1390 = vpop.permute.xlu0 %1389
      %1391 = vrot.lane.b32.xlu0 %v1238, 4
      %v1392 = vpop.permute.xlu0 %1391
      %1393 = vrot.lane.b32.xlu0 %v1241, 4
      %v1394 = vpop.permute.xlu0 %1393
      %1395 = vrot.lane.b32.xlu0 %v1243, 4
      %v1396 = vpop.permute.xlu0 %1395
      %1397 = vrot.lane.b32.xlu0 %v1246, 4
      %v1398 = vpop.permute.xlu0 %1397
      %1399 = vrot.lane.b32.xlu0 %v1248, 4
      %v1400 = vpop.permute.xlu0 %1399
      %1432 = vrot.lane.b32.xlu0 %v1251, 8
      %v1433 = vpop.permute.xlu0 %1432
      %1434 = vrot.lane.b32.xlu0 %v1254, 8
      %v1435 = vpop.permute.xlu0 %1434
      %1436 = vrot.lane.b32.xlu0 %v1256, 8
      %v1437 = vpop.permute.xlu0 %1436
      %1438 = vrot.lane.b32.xlu0 %v1259, 8
      %v1439 = vpop.permute.xlu0 %1438
      %1440 = vrot.lane.b32.xlu0 %v1261, 8
      %v1441 = vpop.permute.xlu0 %1440
      %1442 = vrot.lane.b32.xlu0 %v1264, 8
      %v1443 = vpop.permute.xlu0 %1442
      %1444 = vrot.lane.b32.xlu0 %v1266, 8
      %v1445 = vpop.permute.xlu0 %1444
      %1446 = vrot.lane.b32.xlu0 %v1269, 8
      %v1447 = vpop.permute.xlu0 %1446
      %1448 = vrot.lane.b32.xlu0 %v1271, 8
      %v1449 = vpop.permute.xlu0 %1448
      %1450 = vrot.lane.b32.xlu0 %v1274, 8
      %v1451 = vpop.permute.xlu0 %1450
      %1452 = vrot.lane.b32.xlu0 %v1276, 8
      %v1453 = vpop.permute.xlu0 %1452
      %1454 = vrot.lane.b32.xlu0 %v1279, 8
      %v1455 = vpop.permute.xlu0 %1454
      %1456 = vrot.lane.b32.xlu0 %v1281, 8
      %v1457 = vpop.permute.xlu0 %1456
      %1458 = vrot.lane.b32.xlu0 %v1284, 8
      %v1459 = vpop.permute.xlu0 %1458
      %1460 = vrot.lane.b32.xlu0 %v1286, 8
      %v1461 = vpop.permute.xlu0 %1460
      %1462 = vrot.lane.b32.xlu0 %v1289, 8
      %v1463 = vpop.permute.xlu0 %1462
      %1464 = vrot.lane.b32.xlu0 %v1291, 8
      %v1465 = vpop.permute.xlu0 %1464
      %1466 = vrot.lane.b32.xlu0 %v1294, 8
      %v1467 = vpop.permute.xlu0 %1466
      %1468 = vrot.lane.b32.xlu0 %v1296, 8
      %v1469 = vpop.permute.xlu0 %1468
      %1470 = vrot.lane.b32.xlu0 %v1299, 8
      %v1471 = vpop.permute.xlu0 %1470
      %1472 = vrot.lane.b32.xlu0 %v1301, 8
      %v1473 = vpop.permute.xlu0 %1472
      %1474 = vrot.lane.b32.xlu0 %v1304, 8
      %v1475 = vpop.permute.xlu0 %1474
      %1476 = vrot.lane.b32.xlu0 %v1306, 8
      %v1477 = vpop.permute.xlu0 %1476
      %1478 = vrot.lane.b32.xlu0 %v1309, 8
      %v1479 = vpop.permute.xlu0 %1478
      %1480 = vrot.lane.b32.xlu0 %v1311, 8
      %v1481 = vpop.permute.xlu0 %1480
      %1482 = vrot.lane.b32.xlu0 %v1314, 8
      %v1483 = vpop.permute.xlu0 %1482
      %1484 = vrot.lane.b32.xlu0 %v1316, 8
      %v1485 = vpop.permute.xlu0 %1484
      %1486 = vrot.lane.b32.xlu0 %v1319, 8
      %v1487 = vpop.permute.xlu0 %1486
      %1488 = vrot.lane.b32.xlu0 %v1321, 8
      %v1489 = vpop.permute.xlu0 %1488
      %1490 = vrot.lane.b32.xlu0 %v1324, 8
      %v1491 = vpop.permute.xlu0 %1490
      %1492 = vrot.lane.b32.xlu0 %v1326, 8
      %v1493 = vpop.permute.xlu0 %1492
      %1525 = vrot.lane.b32.xlu0 %v1108, 12
      %v1526 = vpop.permute.xlu0 %1525
      %1527 = vrot.lane.b32.xlu0 %v1015, 12
      %v1528 = vpop.permute.xlu0 %1527
      %1529 = vrot.lane.b32.xlu0 %v1109, 12
      %v1530 = vpop.permute.xlu0 %1529
      %1531 = vrot.lane.b32.xlu0 %v1018, 12
      %v1532 = vpop.permute.xlu0 %1531
      %1533 = vrot.lane.b32.xlu0 %v1110, 12
      %v1534 = vpop.permute.xlu0 %1533
      %1535 = vrot.lane.b32.xlu0 %v1021, 12
      %v1536 = vpop.permute.xlu0 %1535
      %1537 = vrot.lane.b32.xlu0 %v1111, 12
      %v1538 = vpop.permute.xlu0 %1537
      %1539 = vrot.lane.b32.xlu0 %v1024, 12
      %v1540 = vpop.permute.xlu0 %1539
      %1541 = vrot.lane.b32.xlu0 %v1112, 12
      %v1542 = vpop.permute.xlu0 %1541
      %1543 = vrot.lane.b32.xlu0 %v1027, 12
      %v1544 = vpop.permute.xlu0 %1543
      %1545 = vrot.lane.b32.xlu0 %v1113, 12
      %v1546 = vpop.permute.xlu0 %1545
      %1547 = vrot.lane.b32.xlu0 %v1030, 12
      %v1548 = vpop.permute.xlu0 %1547
      %1549 = vrot.lane.b32.xlu0 %v1114, 12
      %v1550 = vpop.permute.xlu0 %1549
      %1551 = vrot.lane.b32.xlu0 %v1033, 12
      %v1552 = vpop.permute.xlu0 %1551
      %1553 = vrot.lane.b32.xlu0 %v1115, 12
      %v1554 = vpop.permute.xlu0 %1553
      %1555 = vrot.lane.b32.xlu0 %v1036, 12
      %v1556 = vpop.permute.xlu0 %1555
      %1557 = vrot.lane.b32.xlu0 %v1116, 12
      %v1558 = vpop.permute.xlu0 %1557
      %1559 = vrot.lane.b32.xlu0 %v1039, 12
      %v1560 = vpop.permute.xlu0 %1559
      %1561 = vrot.lane.b32.xlu0 %v1117, 12
      %v1562 = vpop.permute.xlu0 %1561
      %1563 = vrot.lane.b32.xlu0 %v1042, 12
      %v1564 = vpop.permute.xlu0 %1563
      %1565 = vrot.lane.b32.xlu0 %v1118, 12
      %v1566 = vpop.permute.xlu0 %1565
      %1567 = vrot.lane.b32.xlu0 %v1045, 12
      %v1568 = vpop.permute.xlu0 %1567
      %1569 = vrot.lane.b32.xlu0 %v1119, 12
      %v1570 = vpop.permute.xlu0 %1569
      %1571 = vrot.lane.b32.xlu0 %v1048, 12
      %v1572 = vpop.permute.xlu0 %1571
      %1573 = vrot.lane.b32.xlu0 %v1120, 12
      %v1574 = vpop.permute.xlu0 %1573
      %1575 = vrot.lane.b32.xlu0 %v1051, 12
      %v1576 = vpop.permute.xlu0 %1575
      %1577 = vrot.lane.b32.xlu0 %v1121, 12
      %v1578 = vpop.permute.xlu0 %1577
      %1579 = vrot.lane.b32.xlu0 %v1054, 12
      %v1580 = vpop.permute.xlu0 %1579
      %1581 = vrot.lane.b32.xlu0 %v1122, 12
      %v1582 = vpop.permute.xlu0 %1581
      %1583 = vrot.lane.b32.xlu0 %v1057, 12
      %v1584 = vpop.permute.xlu0 %1583
      %1585 = vrot.lane.b32.xlu0 %v1123, 12
      %v1586 = vpop.permute.xlu0 %1585
      %1587 = vrot.lane.b32.xlu0 %v1060, 12
      %v1588 = vpop.permute.xlu0 %1587
      %1621 = vrot.lane.b32.xlu0 %v1176, 16
      %v1622 = vpop.permute.xlu0 %1621
      %1623 = vrot.lane.b32.xlu0 %v1178, 16
      %v1624 = vpop.permute.xlu0 %1623
      %1625 = vrot.lane.b32.xlu0 %v1181, 16
      %v1626 = vpop.permute.xlu0 %1625
      %1627 = vrot.lane.b32.xlu0 %v1183, 16
      %v1628 = vpop.permute.xlu0 %1627
      %1629 = vrot.lane.b32.xlu0 %v1186, 16
      %v1630 = vpop.permute.xlu0 %1629
      %1631 = vrot.lane.b32.xlu0 %v1188, 16
      %v1632 = vpop.permute.xlu0 %1631
      %1633 = vrot.lane.b32.xlu0 %v1191, 16
      %v1634 = vpop.permute.xlu0 %1633
      %1635 = vrot.lane.b32.xlu0 %v1193, 16
      %v1636 = vpop.permute.xlu0 %1635
      %1637 = vrot.lane.b32.xlu0 %v1196, 16
      %v1638 = vpop.permute.xlu0 %1637
      %1639 = vrot.lane.b32.xlu0 %v1198, 16
      %v1640 = vpop.permute.xlu0 %1639
      %1641 = vrot.lane.b32.xlu0 %v1201, 16
      %v1642 = vpop.permute.xlu0 %1641
      %1643 = vrot.lane.b32.xlu0 %v1203, 16
      %v1644 = vpop.permute.xlu0 %1643
      %1645 = vrot.lane.b32.xlu0 %v1206, 16
      %v1646 = vpop.permute.xlu0 %1645
      %1647 = vrot.lane.b32.xlu0 %v1208, 16
      %v1648 = vpop.permute.xlu0 %1647
      %1649 = vrot.lane.b32.xlu0 %v1211, 16
      %v1650 = vpop.permute.xlu0 %1649
      %1651 = vrot.lane.b32.xlu0 %v1213, 16
      %v1652 = vpop.permute.xlu0 %1651
      %1653 = vrot.lane.b32.xlu0 %v1216, 16
      %v1654 = vpop.permute.xlu0 %1653
      %1655 = vrot.lane.b32.xlu0 %v1218, 16
      %v1656 = vpop.permute.xlu0 %1655
      %1657 = vrot.lane.b32.xlu0 %v1221, 16
      %v1658 = vpop.permute.xlu0 %1657
      %1659 = vrot.lane.b32.xlu0 %v1223, 16
      %v1660 = vpop.permute.xlu0 %1659
      %1661 = vrot.lane.b32.xlu0 %v1226, 16
      %v1662 = vpop.permute.xlu0 %1661
      %1663 = vrot.lane.b32.xlu0 %v1228, 16
      %v1664 = vpop.permute.xlu0 %1663
      %1665 = vrot.lane.b32.xlu0 %v1231, 16
      %v1666 = vpop.permute.xlu0 %1665
      %1667 = vrot.lane.b32.xlu0 %v1233, 16
      %v1668 = vpop.permute.xlu0 %1667
      %1669 = vrot.lane.b32.xlu0 %v1236, 16
      %v1670 = vpop.permute.xlu0 %1669
      %1671 = vrot.lane.b32.xlu0 %v1238, 16
      %v1672 = vpop.permute.xlu0 %1671
      %1673 = vrot.lane.b32.xlu0 %v1241, 16
      %v1674 = vpop.permute.xlu0 %1673
      %1675 = vrot.lane.b32.xlu0 %v1243, 16
      %v1676 = vpop.permute.xlu0 %1675
      %1677 = vrot.lane.b32.xlu0 %v1246, 16
      %v1678 = vpop.permute.xlu0 %1677
      %1679 = vrot.lane.b32.xlu0 %v1248, 16
      %v1680 = vpop.permute.xlu0 %1679
      %1681 = vrot.lane.b32.xlu0 %v1331, 16
      %v1682 = vpop.permute.xlu0 %1681
      %1683 = vrot.lane.b32.xlu0 %v1333, 16
      %v1684 = vpop.permute.xlu0 %1683
      %1717 = vrot.lane.b32.xlu0 %v1254, 20
      %v1718 = vpop.permute.xlu0 %1717
      %1719 = vrot.lane.b32.xlu0 %v1256, 20
      %v1720 = vpop.permute.xlu0 %1719
      %1721 = vrot.lane.b32.xlu0 %v1259, 20
      %v1722 = vpop.permute.xlu0 %1721
      %1723 = vrot.lane.b32.xlu0 %v1261, 20
      %v1724 = vpop.permute.xlu0 %1723
      %1725 = vrot.lane.b32.xlu0 %v1264, 20
      %v1726 = vpop.permute.xlu0 %1725
      %1727 = vrot.lane.b32.xlu0 %v1266, 20
      %v1728 = vpop.permute.xlu0 %1727
      %1729 = vrot.lane.b32.xlu0 %v1269, 20
      %v1730 = vpop.permute.xlu0 %1729
      %1731 = vrot.lane.b32.xlu0 %v1271, 20
      %v1732 = vpop.permute.xlu0 %1731
      %1733 = vrot.lane.b32.xlu0 %v1274, 20
      %v1734 = vpop.permute.xlu0 %1733
      %1735 = vrot.lane.b32.xlu0 %v1276, 20
      %v1736 = vpop.permute.xlu0 %1735
      %1737 = vrot.lane.b32.xlu0 %v1279, 20
      %v1738 = vpop.permute.xlu0 %1737
      %1739 = vrot.lane.b32.xlu0 %v1281, 20
      %v1740 = vpop.permute.xlu0 %1739
      %1741 = vrot.lane.b32.xlu0 %v1284, 20
      %v1742 = vpop.permute.xlu0 %1741
      %1743 = vrot.lane.b32.xlu0 %v1286, 20
      %v1744 = vpop.permute.xlu0 %1743
      %1745 = vrot.lane.b32.xlu0 %v1289, 20
      %v1746 = vpop.permute.xlu0 %1745
      %1747 = vrot.lane.b32.xlu0 %v1291, 20
      %v1748 = vpop.permute.xlu0 %1747
      %1749 = vrot.lane.b32.xlu0 %v1294, 20
      %v1750 = vpop.permute.xlu0 %1749
      %1751 = vrot.lane.b32.xlu0 %v1296, 20
      %v1752 = vpop.permute.xlu0 %1751
      %1753 = vrot.lane.b32.xlu0 %v1299, 20
      %v1754 = vpop.permute.xlu0 %1753
      %1755 = vrot.lane.b32.xlu0 %v1301, 20
      %v1756 = vpop.permute.xlu0 %1755
      %1757 = vrot.lane.b32.xlu0 %v1304, 20
      %v1758 = vpop.permute.xlu0 %1757
      %1759 = vrot.lane.b32.xlu0 %v1306, 20
      %v1760 = vpop.permute.xlu0 %1759
      %1761 = vrot.lane.b32.xlu0 %v1309, 20
      %v1762 = vpop.permute.xlu0 %1761
      %1763 = vrot.lane.b32.xlu0 %v1311, 20
      %v1764 = vpop.permute.xlu0 %1763
      %1765 = vrot.lane.b32.xlu0 %v1314, 20
      %v1766 = vpop.permute.xlu0 %1765
      %1767 = vrot.lane.b32.xlu0 %v1316, 20
      %v1768 = vpop.permute.xlu0 %1767
      %1769 = vrot.lane.b32.xlu0 %v1319, 20
      %v1770 = vpop.permute.xlu0 %1769
      %1771 = vrot.lane.b32.xlu0 %v1321, 20
      %v1772 = vpop.permute.xlu0 %1771
      %1773 = vrot.lane.b32.xlu0 %v1324, 20
      %v1774 = vpop.permute.xlu0 %1773
      %1775 = vrot.lane.b32.xlu0 %v1326, 20
      %v1776 = vpop.permute.xlu0 %1775
      %1777 = vrot.lane.b32.xlu0 %v1336, 20
      %v1778 = vpop.permute.xlu0 %1777
      %1779 = vrot.lane.b32.xlu0 %v1338, 20
      %v1780 = vpop.permute.xlu0 %1779
      %1813 = vrot.lane.b32.xlu0 %v1109, 24
      %v1814 = vpop.permute.xlu0 %1813
      %1815 = vrot.lane.b32.xlu0 %v1018, 24
      %v1816 = vpop.permute.xlu0 %1815
      %1817 = vrot.lane.b32.xlu0 %v1110, 24
      %v1818 = vpop.permute.xlu0 %1817
      %1819 = vrot.lane.b32.xlu0 %v1021, 24
      %v1820 = vpop.permute.xlu0 %1819
      %1821 = vrot.lane.b32.xlu0 %v1111, 24
      %v1822 = vpop.permute.xlu0 %1821
      %1823 = vrot.lane.b32.xlu0 %v1024, 24
      %v1824 = vpop.permute.xlu0 %1823
      %1825 = vrot.lane.b32.xlu0 %v1112, 24
      %v1826 = vpop.permute.xlu0 %1825
      %1827 = vrot.lane.b32.xlu0 %v1027, 24
      %v1828 = vpop.permute.xlu0 %1827
      %1829 = vrot.lane.b32.xlu0 %v1113, 24
      %v1830 = vpop.permute.xlu0 %1829
      %1831 = vrot.lane.b32.xlu0 %v1030, 24
      %v1832 = vpop.permute.xlu0 %1831
      %1833 = vrot.lane.b32.xlu0 %v1114, 24
      %v1834 = vpop.permute.xlu0 %1833
      %1835 = vrot.lane.b32.xlu0 %v1033, 24
      %v1836 = vpop.permute.xlu0 %1835
      %1837 = vrot.lane.b32.xlu0 %v1115, 24
      %v1838 = vpop.permute.xlu0 %1837
      %1839 = vrot.lane.b32.xlu0 %v1036, 24
      %v1840 = vpop.permute.xlu0 %1839
      %1841 = vrot.lane.b32.xlu0 %v1116, 24
      %v1842 = vpop.permute.xlu0 %1841
      %1843 = vrot.lane.b32.xlu0 %v1039, 24
      %v1844 = vpop.permute.xlu0 %1843
      %1845 = vrot.lane.b32.xlu0 %v1117, 24
      %v1846 = vpop.permute.xlu0 %1845
      %1847 = vrot.lane.b32.xlu0 %v1042, 24
      %v1848 = vpop.permute.xlu0 %1847
      %1849 = vrot.lane.b32.xlu0 %v1118, 24
      %v1850 = vpop.permute.xlu0 %1849
      %1851 = vrot.lane.b32.xlu0 %v1045, 24
      %v1852 = vpop.permute.xlu0 %1851
      %1853 = vrot.lane.b32.xlu0 %v1119, 24
      %v1854 = vpop.permute.xlu0 %1853
      %1855 = vrot.lane.b32.xlu0 %v1048, 24
      %v1856 = vpop.permute.xlu0 %1855
      %1857 = vrot.lane.b32.xlu0 %v1120, 24
      %v1858 = vpop.permute.xlu0 %1857
      %1859 = vrot.lane.b32.xlu0 %v1051, 24
      %v1860 = vpop.permute.xlu0 %1859
      %1861 = vrot.lane.b32.xlu0 %v1121, 24
      %v1862 = vpop.permute.xlu0 %1861
      %1863 = vrot.lane.b32.xlu0 %v1054, 24
      %v1864 = vpop.permute.xlu0 %1863
      %1865 = vrot.lane.b32.xlu0 %v1122, 24
      %v1866 = vpop.permute.xlu0 %1865
      %1867 = vrot.lane.b32.xlu0 %v1057, 24
      %v1868 = vpop.permute.xlu0 %1867
      %1869 = vrot.lane.b32.xlu0 %v1123, 24
      %v1870 = vpop.permute.xlu0 %1869
      %1871 = vrot.lane.b32.xlu0 %v1060, 24
      %v1872 = vpop.permute.xlu0 %1871
      %1873 = vrot.lane.b32.xlu0 0.0, 24
      %v1874 = vpop.permute.xlu0 %1873
      %1906 = vrot.lane.b32.xlu0 %v1181, 28
      %v1907 = vpop.permute.xlu0 %1906
      %1908 = vrot.lane.b32.xlu0 %v1183, 28
      %v1909 = vpop.permute.xlu0 %1908
      %1910 = vrot.lane.b32.xlu0 %v1186, 28
      %v1911 = vpop.permute.xlu0 %1910
      %1912 = vrot.lane.b32.xlu0 %v1188, 28
      %v1913 = vpop.permute.xlu0 %1912
      %1914 = vrot.lane.b32.xlu0 %v1191, 28
      %v1915 = vpop.permute.xlu0 %1914
      %1916 = vrot.lane.b32.xlu0 %v1193, 28
      %v1917 = vpop.permute.xlu0 %1916
      %1918 = vrot.lane.b32.xlu0 %v1196, 28
      %v1919 = vpop.permute.xlu0 %1918
      %1920 = vrot.lane.b32.xlu0 %v1198, 28
      %v1921 = vpop.permute.xlu0 %1920
      %1922 = vrot.lane.b32.xlu0 %v1201, 28
      %v1923 = vpop.permute.xlu0 %1922
      %1924 = vrot.lane.b32.xlu0 %v1203, 28
      %v1925 = vpop.permute.xlu0 %1924
      %1926 = vrot.lane.b32.xlu0 %v1206, 28
      %v1927 = vpop.permute.xlu0 %1926
      %1928 = vrot.lane.b32.xlu0 %v1208, 28
      %v1929 = vpop.permute.xlu0 %1928
      %1930 = vrot.lane.b32.xlu0 %v1211, 28
      %v1931 = vpop.permute.xlu0 %1930
      %1932 = vrot.lane.b32.xlu0 %v1213, 28
      %v1933 = vpop.permute.xlu0 %1932
      %1934 = vrot.lane.b32.xlu0 %v1216, 28
      %v1935 = vpop.permute.xlu0 %1934
      %1936 = vrot.lane.b32.xlu0 %v1218, 28
      %v1937 = vpop.permute.xlu0 %1936
      %1938 = vrot.lane.b32.xlu0 %v1221, 28
      %v1939 = vpop.permute.xlu0 %1938
      %1940 = vrot.lane.b32.xlu0 %v1223, 28
      %v1941 = vpop.permute.xlu0 %1940
      %1942 = vrot.lane.b32.xlu0 %v1226, 28
      %v1943 = vpop.permute.xlu0 %1942
      %1944 = vrot.lane.b32.xlu0 %v1228, 28
      %v1945 = vpop.permute.xlu0 %1944
      %1946 = vrot.lane.b32.xlu0 %v1231, 28
      %v1947 = vpop.permute.xlu0 %1946
      %1948 = vrot.lane.b32.xlu0 %v1233, 28
      %v1949 = vpop.permute.xlu0 %1948
      %1950 = vrot.lane.b32.xlu0 %v1236, 28
      %v1951 = vpop.permute.xlu0 %1950
      %1952 = vrot.lane.b32.xlu0 %v1238, 28
      %v1953 = vpop.permute.xlu0 %1952
      %1954 = vrot.lane.b32.xlu0 %v1241, 28
      %v1955 = vpop.permute.xlu0 %1954
      %1956 = vrot.lane.b32.xlu0 %v1243, 28
      %v1957 = vpop.permute.xlu0 %1956
      %1958 = vrot.lane.b32.xlu0 %v1246, 28
      %v1959 = vpop.permute.xlu0 %1958
      %1960 = vrot.lane.b32.xlu0 %v1248, 28
      %v1961 = vpop.permute.xlu0 %1960
      %1962 = vrot.lane.b32.xlu0 %v1331, 28
      %v1963 = vpop.permute.xlu0 %1962
      %1964 = vrot.lane.b32.xlu0 %v1333, 28
      %v1965 = vpop.permute.xlu0 %1964
      %1966 = vrot.lane.b32.xlu0 %v1173, 28
      %v1967 = vpop.permute.xlu0 %1966
      %1999 = vrot.lane.b32.xlu0 %v1259, 32
      %v2000 = vpop.permute.xlu0 %1999
      %2001 = vrot.lane.b32.xlu0 %v1261, 32
      %v2002 = vpop.permute.xlu0 %2001
      %2003 = vrot.lane.b32.xlu0 %v1264, 32
      %v2004 = vpop.permute.xlu0 %2003
      %2005 = vrot.lane.b32.xlu0 %v1266, 32
      %v2006 = vpop.permute.xlu0 %2005
      %2007 = vrot.lane.b32.xlu0 %v1269, 32
      %v2008 = vpop.permute.xlu0 %2007
      %2009 = vrot.lane.b32.xlu0 %v1271, 32
      %v2010 = vpop.permute.xlu0 %2009
      %2011 = vrot.lane.b32.xlu0 %v1274, 32
      %v2012 = vpop.permute.xlu0 %2011
      %2013 = vrot.lane.b32.xlu0 %v1276, 32
      %v2014 = vpop.permute.xlu0 %2013
      %2015 = vrot.lane.b32.xlu0 %v1279, 32
      %v2016 = vpop.permute.xlu0 %2015
      %2017 = vrot.lane.b32.xlu0 %v1281, 32
      %v2018 = vpop.permute.xlu0 %2017
      %2019 = vrot.lane.b32.xlu0 %v1284, 32
      %v2020 = vpop.permute.xlu0 %2019
      %2021 = vrot.lane.b32.xlu0 %v1286, 32
      %v2022 = vpop.permute.xlu0 %2021
      %2023 = vrot.lane.b32.xlu0 %v1289, 32
      %v2024 = vpop.permute.xlu0 %2023
      %2025 = vrot.lane.b32.xlu0 %v1291, 32
      %v2026 = vpop.permute.xlu0 %2025
      %2027 = vrot.lane.b32.xlu0 %v1294, 32
      %v2028 = vpop.permute.xlu0 %2027
      %2029 = vrot.lane.b32.xlu0 %v1296, 32
      %v2030 = vpop.permute.xlu0 %2029
      %2031 = vrot.lane.b32.xlu0 %v1299, 32
      %v2032 = vpop.permute.xlu0 %2031
      %2033 = vrot.lane.b32.xlu0 %v1301, 32
      %v2034 = vpop.permute.xlu0 %2033
      %2035 = vrot.lane.b32.xlu0 %v1304, 32
      %v2036 = vpop.permute.xlu0 %2035
      %2037 = vrot.lane.b32.xlu0 %v1306, 32
      %v2038 = vpop.permute.xlu0 %2037
      %2039 = vrot.lane.b32.xlu0 %v1309, 32
      %v2040 = vpop.permute.xlu0 %2039
      %2041 = vrot.lane.b32.xlu0 %v1311, 32
      %v2042 = vpop.permute.xlu0 %2041
      %2043 = vrot.lane.b32.xlu0 %v1314, 32
      %v2044 = vpop.permute.xlu0 %2043
      %2045 = vrot.lane.b32.xlu0 %v1316, 32
      %v2046 = vpop.permute.xlu0 %2045
      %2047 = vrot.lane.b32.xlu0 %v1319, 32
      %v2048 = vpop.permute.xlu0 %2047
      %2049 = vrot.lane.b32.xlu0 %v1321, 32
      %v2050 = vpop.permute.xlu0 %2049
      %2051 = vrot.lane.b32.xlu0 %v1324, 32
      %v2052 = vpop.permute.xlu0 %2051
      %2053 = vrot.lane.b32.xlu0 %v1326, 32
      %v2054 = vpop.permute.xlu0 %2053
      %2055 = vrot.lane.b32.xlu0 %v1336, 32
      %v2056 = vpop.permute.xlu0 %2055
      %2057 = vrot.lane.b32.xlu0 %v1338, 32
      %v2058 = vpop.permute.xlu0 %2057
      %2059 = vrot.lane.b32.xlu0 %v1251, 32
      %v2060 = vpop.permute.xlu0 %2059
      %v2092 = vsel %vm421, 0.0, %v1340
      %v2093 = vsel %vm421, %v1108, %v1342
      %v2094 = vsel %vm421, %v1015, %v1344
      %v2095 = vsel %vm421, %v1109, %v1346
      %v2096 = vsel %vm421, %v1018, %v1348
      %v2097 = vsel %vm421, %v1110, %v1350
      %v2098 = vsel %vm421, %v1021, %v1352
      %v2099 = vsel %vm421, %v1111, %v1354
      %v2100 = vsel %vm421, %v1024, %v1356
      %v2101 = vsel %vm421, %v1112, %v1358
      %v2102 = vsel %vm421, %v1027, %v1360
      %v2103 = vsel %vm421, %v1113, %v1362
      %v2104 = vsel %vm421, %v1030, %v1364
      %v2105 = vsel %vm421, %v1114, %v1366
      %v2106 = vsel %vm421, %v1033, %v1368
      %v2107 = vsel %vm421, %v1115, %v1370
      %v2108 = vsel %vm421, %v1036, %v1372
      %v2109 = vsel %vm421, %v1116, %v1374
      %v2110 = vsel %vm421, %v1039, %v1376
      %v2111 = vsel %vm421, %v1117, %v1378
      %v2112 = vsel %vm421, %v1042, %v1380
      %v2113 = vsel %vm421, %v1118, %v1382
      %v2114 = vsel %vm421, %v1045, %v1384
      %v2115 = vsel %vm421, %v1119, %v1386
      %v2116 = vsel %vm421, %v1048, %v1388
      %v2117 = vsel %vm421, %v1120, %v1390
      %v2118 = vsel %vm421, %v1051, %v1392
      %v2119 = vsel %vm421, %v1121, %v1394
      %v2120 = vsel %vm421, %v1054, %v1396
      %v2121 = vsel %vm421, %v1122, %v1398
      %v2122 = vsel %vm421, %v1057, %v1400
      %vm2123 = vcmask 64512
      %v2124 = vsel %vm2123, %v2092, %v1433
      %v2125 = vsel %vm2123, %v2093, %v1435
      %v2126 = vsel %vm2123, %v2094, %v1437
      %v2127 = vsel %vm2123, %v2095, %v1439
      %v2128 = vsel %vm2123, %v2096, %v1441
      %v2129 = vsel %vm2123, %v2097, %v1443
      %v2130 = vsel %vm2123, %v2098, %v1445
      %v2131 = vsel %vm2123, %v2099, %v1447
      %v2132 = vsel %vm2123, %v2100, %v1449
      %v2133 = vsel %vm2123, %v2101, %v1451
      %v2134 = vsel %vm2123, %v2102, %v1453
      %v2135 = vsel %vm2123, %v2103, %v1455
      %v2136 = vsel %vm2123, %v2104, %v1457
      %v2137 = vsel %vm2123, %v2105, %v1459
      %v2138 = vsel %vm2123, %v2106, %v1461
      %v2139 = vsel %vm2123, %v2107, %v1463
      %v2140 = vsel %vm2123, %v2108, %v1465
      %v2141 = vsel %vm2123, %v2109, %v1467
      %v2142 = vsel %vm2123, %v2110, %v1469
      %v2143 = vsel %vm2123, %v2111, %v1471
      %v2144 = vsel %vm2123, %v2112, %v1473
      %v2145 = vsel %vm2123, %v2113, %v1475
      %v2146 = vsel %vm2123, %v2114, %v1477
      %v2147 = vsel %vm2123, %v2115, %v1479
      %v2148 = vsel %vm2123, %v2116, %v1481
      %v2149 = vsel %vm2123, %v2117, %v1483
      %v2150 = vsel %vm2123, %v2118, %v1485
      %v2151 = vsel %vm2123, %v2119, %v1487
      %v2152 = vsel %vm2123, %v2120, %v1489
      %v2153 = vsel %vm2123, %v2121, %v1491
      %v2154 = vsel %vm2123, %v2122, %v1493
      %vm2155 = vcmask 97280
      %v2156 = vsel %vm2155, %v2124, %v1526
      %v2157 = vsel %vm2155, %v2124, %v1528
      %v2158 = vsel %vm2155, %v2125, %v1530
      %v2159 = vsel %vm2155, %v2126, %v1532
      %v2160 = vsel %vm2155, %v2127, %v1534
      %v2161 = vsel %vm2155, %v2128, %v1536
      %v2162 = vsel %vm2155, %v2129, %v1538
      %v2163 = vsel %vm2155, %v2130, %v1540
      %v2164 = vsel %vm2155, %v2131, %v1542
      %v2165 = vsel %vm2155, %v2132, %v1544
      %v2166 = vsel %vm2155, %v2133, %v1546
      %v2167 = vsel %vm2155, %v2134, %v1548
      %v2168 = vsel %vm2155, %v2135, %v1550
      %v2169 = vsel %vm2155, %v2136, %v1552
      %v2170 = vsel %vm2155, %v2137, %v1554
      %v2171 = vsel %vm2155, %v2138, %v1556
      %v2172 = vsel %vm2155, %v2139, %v1558
      %v2173 = vsel %vm2155, %v2140, %v1560
      %v2174 = vsel %vm2155, %v2141, %v1562
      %v2175 = vsel %vm2155, %v2142, %v1564
      %v2176 = vsel %vm2155, %v2143, %v1566
      %v2177 = vsel %vm2155, %v2144, %v1568
      %v2178 = vsel %vm2155, %v2145, %v1570
      %v2179 = vsel %vm2155, %v2146, %v1572
      %v2180 = vsel %vm2155, %v2147, %v1574
      %v2181 = vsel %vm2155, %v2148, %v1576
      %v2182 = vsel %vm2155, %v2149, %v1578
      %v2183 = vsel %vm2155, %v2150, %v1580
      %v2184 = vsel %vm2155, %v2151, %v1582
      %v2185 = vsel %vm2155, %v2152, %v1584
      %v2186 = vsel %vm2155, %v2153, %v1586
      %v2187 = vsel %vm2155, %v2154, %v1588
      %vm2188 = vcmask 130048
      %v2189 = vsel %vm2188, %v2156, %v1622
      %v2190 = vsel %vm2188, %v2157, %v1624
      %v2191 = vsel %vm2188, %v2158, %v1626
      %v2192 = vsel %vm2188, %v2159, %v1628
      %v2193 = vsel %vm2188, %v2160, %v1630
      %v2194 = vsel %vm2188, %v2161, %v1632
      %v2195 = vsel %vm2188, %v2162, %v1634
      %v2196 = vsel %vm2188, %v2163, %v1636
      %v2197 = vsel %vm2188, %v2164, %v1638
      %v2198 = vsel %vm2188, %v2165, %v1640
      %v2199 = vsel %vm2188, %v2166, %v1642
      %v2200 = vsel %vm2188, %v2167, %v1644
      %v2201 = vsel %vm2188, %v2168, %v1646
      %v2202 = vsel %vm2188, %v2169, %v1648
      %v2203 = vsel %vm2188, %v2170, %v1650
      %v2204 = vsel %vm2188, %v2171, %v1652
      %v2205 = vsel %vm2188, %v2172, %v1654
      %v2206 = vsel %vm2188, %v2173, %v1656
      %v2207 = vsel %vm2188, %v2174, %v1658
      %v2208 = vsel %vm2188, %v2175, %v1660
      %v2209 = vsel %vm2188, %v2176, %v1662
      %v2210 = vsel %vm2188, %v2177, %v1664
      %v2211 = vsel %vm2188, %v2178, %v1666
      %v2212 = vsel %vm2188, %v2179, %v1668
      %v2213 = vsel %vm2188, %v2180, %v1670
      %v2214 = vsel %vm2188, %v2181, %v1672
      %v2215 = vsel %vm2188, %v2182, %v1674
      %v2216 = vsel %vm2188, %v2183, %v1676
      %v2217 = vsel %vm2188, %v2184, %v1678
      %v2218 = vsel %vm2188, %v2185, %v1680
      %v2219 = vsel %vm2188, %v2186, %v1682
      %v2220 = vsel %vm2188, %v2187, %v1684
      %vm2221 = vcmask 162816
      %v2222 = vsel %vm2221, %v2189, %v1718
      %v2223 = vsel %vm2221, %v2190, %v1720
      %v2224 = vsel %vm2221, %v2191, %v1722
      %v2225 = vsel %vm2221, %v2192, %v1724
      %v2226 = vsel %vm2221, %v2193, %v1726
      %v2227 = vsel %vm2221, %v2194, %v1728
      %v2228 = vsel %vm2221, %v2195, %v1730
      %v2229 = vsel %vm2221, %v2196, %v1732
      %v2230 = vsel %vm2221, %v2197, %v1734
      %v2231 = vsel %vm2221, %v2198, %v1736
      %v2232 = vsel %vm2221, %v2199, %v1738
      %v2233 = vsel %vm2221, %v2200, %v1740
      %v2234 = vsel %vm2221, %v2201, %v1742
      %v2235 = vsel %vm2221, %v2202, %v1744
      %v2236 = vsel %vm2221, %v2203, %v1746
      %v2237 = vsel %vm2221, %v2204, %v1748
      %v2238 = vsel %vm2221, %v2205, %v1750
      %v2239 = vsel %vm2221, %v2206, %v1752
      %v2240 = vsel %vm2221, %v2207, %v1754
      %v2241 = vsel %vm2221, %v2208, %v1756
      %v2242 = vsel %vm2221, %v2209, %v1758
      %v2243 = vsel %vm2221, %v2210, %v1760
      %v2244 = vsel %vm2221, %v2211, %v1762
      %v2245 = vsel %vm2221, %v2212, %v1764
      %v2246 = vsel %vm2221, %v2213, %v1766
      %v2247 = vsel %vm2221, %v2214, %v1768
      %v2248 = vsel %vm2221, %v2215, %v1770
      %v2249 = vsel %vm2221, %v2216, %v1772
      %v2250 = vsel %vm2221, %v2217, %v1774
      %v2251 = vsel %vm2221, %v2218, %v1776
      %v2252 = vsel %vm2221, %v2219, %v1778
      %v2253 = vsel %vm2221, %v2220, %v1780
      %vm2254 = vcmask 195584
      %v2255 = vsel %vm2254, %v2222, %v1814
      %v2256 = vsel %vm2254, %v2223, %v1816
      %v2257 = vsel %vm2254, %v2224, %v1818
      %v2258 = vsel %vm2254, %v2225, %v1820
      %v2259 = vsel %vm2254, %v2226, %v1822
      %v2260 = vsel %vm2254, %v2227, %v1824
      %v2261 = vsel %vm2254, %v2228, %v1826
      %v2262 = vsel %vm2254, %v2229, %v1828
      %v2263 = vsel %vm2254, %v2230, %v1830
      %v2264 = vsel %vm2254, %v2231, %v1832
      %v2265 = vsel %vm2254, %v2232, %v1834
      %v2266 = vsel %vm2254, %v2233, %v1836
      %v2267 = vsel %vm2254, %v2234, %v1838
      %v2268 = vsel %vm2254, %v2235, %v1840
      %v2269 = vsel %vm2254, %v2236, %v1842
      %v2270 = vsel %vm2254, %v2237, %v1844
      %v2271 = vsel %vm2254, %v2238, %v1846
      %v2272 = vsel %vm2254, %v2239, %v1848
      %v2273 = vsel %vm2254, %v2240, %v1850
      %v2274 = vsel %vm2254, %v2241, %v1852
      %v2275 = vsel %vm2254, %v2242, %v1854
      %v2276 = vsel %vm2254, %v2243, %v1856
      %v2277 = vsel %vm2254, %v2244, %v1858
      %v2278 = vsel %vm2254, %v2245, %v1860
      %v2279 = vsel %vm2254, %v2246, %v1862
      %v2280 = vsel %vm2254, %v2247, %v1864
      %v2281 = vsel %vm2254, %v2248, %v1866
      %v2282 = vsel %vm2254, %v2249, %v1868
      %v2283 = vsel %vm2254, %v2250, %v1870
      %v2284 = vsel %vm2254, %v2251, %v1872
      %v2285 = vsel %vm2254, %v2252, %v1874
      %v2286 = vsel %vm2254, %v2253, %v1874
      %vm2287 = vcmask 228352
      %v2288 = vsel %vm2287, %v2255, %v1907
      %v2289 = vsel %vm2287, %v2256, %v1909
      %v2290 = vsel %vm2287, %v2257, %v1911
      %v2291 = vsel %vm2287, %v2258, %v1913
      %v2292 = vsel %vm2287, %v2259, %v1915
      %v2293 = vsel %vm2287, %v2260, %v1917
      %v2294 = vsel %vm2287, %v2261, %v1919
      %v2295 = vsel %vm2287, %v2262, %v1921
      %v2296 = vsel %vm2287, %v2263, %v1923
      %v2297 = vsel %vm2287, %v2264, %v1925
      %v2298 = vsel %vm2287, %v2265, %v1927
      %v2299 = vsel %vm2287, %v2266, %v1929
      %v2300 = vsel %vm2287, %v2267, %v1931
      %v2301 = vsel %vm2287, %v2268, %v1933
      %v2302 = vsel %vm2287, %v2269, %v1935
      %v2303 = vsel %vm2287, %v2270, %v1937
      %v2304 = vsel %vm2287, %v2271, %v1939
      %v2305 = vsel %vm2287, %v2272, %v1941
      %v2306 = vsel %vm2287, %v2273, %v1943
      %v2307 = vsel %vm2287, %v2274, %v1945
      %v2308 = vsel %vm2287, %v2275, %v1947
      %v2309 = vsel %vm2287, %v2276, %v1949
      %v2310 = vsel %vm2287, %v2277, %v1951
      %v2311 = vsel %vm2287, %v2278, %v1953
      %v2312 = vsel %vm2287, %v2279, %v1955
      %v2313 = vsel %vm2287, %v2280, %v1957
      %v2314 = vsel %vm2287, %v2281, %v1959
      %v2315 = vsel %vm2287, %v2282, %v1961
      %v2316 = vsel %vm2287, %v2283, %v1963
      %v2317 = vsel %vm2287, %v2284, %v1965
      %v2318 = vsel %vm2287, %v2285, %v1967
      %v2319 = vsel %vm2287, %v2286, %v1967
      %vm2320 = vcmask 261120
      %v2321 = vsel %vm2320, %v2288, %v2000
      %v2322 = vsel %vm2320, %v2289, %v2002
      %v2323 = vsel %vm2320, %v2290, %v2004
      %v2324 = vsel %vm2320, %v2291, %v2006
      %v2325 = vsel %vm2320, %v2292, %v2008
      %v2326 = vsel %vm2320, %v2293, %v2010
      %v2327 = vsel %vm2320, %v2294, %v2012
      %v2328 = vsel %vm2320, %v2295, %v2014
      %v2329 = vsel %vm2320, %v2296, %v2016
      %v2330 = vsel %vm2320, %v2297, %v2018
      %v2331 = vsel %vm2320, %v2298, %v2020
      %v2332 = vsel %vm2320, %v2299, %v2022
      %v2333 = vsel %vm2320, %v2300, %v2024
      %v2334 = vsel %vm2320, %v2301, %v2026
      %v2335 = vsel %vm2320, %v2302, %v2028
      %v2336 = vsel %vm2320, %v2303, %v2030
      %v2337 = vsel %vm2320, %v2304, %v2032
      %v2338 = vsel %vm2320, %v2305, %v2034
      %v2339 = vsel %vm2320, %v2306, %v2036
      %v2340 = vsel %vm2320, %v2307, %v2038
      %v2341 = vsel %vm2320, %v2308, %v2040
      %v2342 = vsel %vm2320, %v2309, %v2042
      %v2343 = vsel %vm2320, %v2310, %v2044
      %v2344 = vsel %vm2320, %v2311, %v2046
      %v2345 = vsel %vm2320, %v2312, %v2048
      %v2346 = vsel %vm2320, %v2313, %v2050
      %v2347 = vsel %vm2320, %v2314, %v2052
      %v2348 = vsel %vm2320, %v2315, %v2054
      %v2349 = vsel %vm2320, %v2316, %v2056
      %v2350 = vsel %vm2320, %v2317, %v2058
      %v2351 = vsel %vm2320, %v2318, %v2060
      %v2352 = vsel %vm2320, %v2319, %v2060
      %v2354 = vlaneseq
      %v2355 = vshrl.u32 %v2354, 7
      %v2356 = vsub.s32 0, %v2355
      %v2357 = vrot.slane %v979, %v2356
      %vm2359 = vcmask 293888
      %v2361 = vsel %vm2359, %v2321, 0
      %v2364 = vsel %vm2359, %v2322, 0
      %v2367 = vsel %vm2359, %v2323, 0
      %v2370 = vsel %vm2359, %v2324, 0
      %v2373 = vsel %vm2359, %v2325, 0
      %v2376 = vsel %vm2359, %v2326, 0
      %v2379 = vsel %vm2359, %v2327, 0
      %v2382 = vsel %vm2359, %v2328, 0
      %v2385 = vsel %vm2359, %v2329, 0
      %v2388 = vsel %vm2359, %v2330, 0
      %v2391 = vsel %vm2359, %v2331, 0
      %v2394 = vsel %vm2359, %v2332, 0
      %v2397 = vsel %vm2359, %v2333, 0
      %v2400 = vsel %vm2359, %v2334, 0
      %v2403 = vsel %vm2359, %v2335, 0
      %v2406 = vsel %vm2359, %v2336, 0
      %v2409 = vsel %vm2359, %v2337, 0
      %v2412 = vsel %vm2359, %v2338, 0
      %v2415 = vsel %vm2359, %v2339, 0
      %v2418 = vsel %vm2359, %v2340, 0
      %v2421 = vsel %vm2359, %v2341, 0
      %v2424 = vsel %vm2359, %v2342, 0
      %v2427 = vsel %vm2359, %v2343, 0
      %v2430 = vsel %vm2359, %v2344, 0
      %v2433 = vsel %vm2359, %v2345, 0
      %v2436 = vsel %vm2359, %v2346, 0
      %v2439 = vsel %vm2359, %v2347, 0
      %v2442 = vsel %vm2359, %v2348, 0
      %v2445 = vsel %vm2359, %v2349, 0
      %v2448 = vsel %vm2359, %v2350, 0
      %v2451 = vsel %vm2359, %v2351, 0
      %v2454 = vsel %vm2359, %v2352, 0
      %vm2456 = vcmask 1043456
      %v2458 = vsel %vm2456, %v978, 0
      %2460 = vmatprep.subr.mxu0 0.0
      %2461 = vmatpush1.msra.mxu0 %v974
      %2462 = vmatprep.subr.mxu0 0.0
      %2463 = vmatpush1.msra.mxu0 %v975
      %2464 = vmatprep.subr.mxu0 0.0
      %2465 = vmatpush1.msra.mxu0 %v976
      %2466 = vmatprep.subr.mxu0 0.0
      %2467 = vmatpush1.msra.mxu0 %v977
      %2468 = vmatprep.subr.mxu0 0.0
      %2469 = vmatpush1.msra.mxu0 %v2458
      %2470 = vmatprep.subr.mxu0 0.0
      %2471 = vmatpush1.msra.mxu0 0.0
      %2472 = vmatprep.subr.mxu0 0.0
      %2473 = vmatpush1.msra.mxu0 0.0
      %2474 = vmatprep.subr.mxu0 0.0
      %2475 = vmatpush1.msra.mxu0 0.0
      %2476 = vmatprep.subr.mxu0 0.0
      %2477 = vmatpush1.msra.mxu0 0.0
      %2478 = vmatprep.subr.mxu0 0.0
      %2479 = vmatpush1.msra.mxu0 0.0
      %2480 = vmatprep.subr.mxu0 0.0
      %2481 = vmatpush1.msra.mxu0 0.0
      %2482 = vmatprep.subr.mxu0 0.0
      %2483 = vmatpush1.msra.mxu0 0.0
      %2484 = vmatprep.subr.mxu0 0.0
      %2485 = vmatpush1.msra.mxu0 0.0
      %2486 = vmatprep.subr.mxu0 0.0
      %2487 = vmatpush1.msra.mxu0 0.0
      %2488 = vmatprep.subr.mxu0 0.0
      %2489 = vmatpush1.msra.mxu0 0.0
      %2490 = vmatprep.subr.mxu0 0.0
      %2491 = vmatpush1.msra.mxu0 0.0
      %2492 = vmatprep.subr.mxu0 0.0
      %2493 = vmatpush1.msra.mxu0 0.0
      %2494 = vmatprep.subr.mxu0 0.0
      %2495 = vmatpush1.msra.mxu0 0.0
      %2496 = vmatprep.subr.mxu0 0.0
      %2497 = vmatpush1.msra.mxu0 0.0
      %2498 = vmatprep.subr.mxu0 0.0
      %2499 = vmatpush1.msra.mxu0 0.0
      %2500 = vmatprep.subr.mxu0 0.0
      %2501 = vmatpush1.msra.mxu0 0.0
      %2502 = vmatprep.subr.mxu0 0.0
      %2503 = vmatpush1.msra.mxu0 0.0
      %2504 = vmatprep.subr.mxu0 0.0
      %2505 = vmatpush1.msra.mxu0 0.0
      %2506 = vmatprep.subr.mxu0 0.0
      %2507 = vmatpush1.msra.mxu0 0.0
      %2508 = vmatprep.subr.mxu0 0.0
      %2509 = vmatpush1.msra.mxu0 0.0
      %2510 = vmatprep.subr.mxu0 0.0
      %2511 = vmatpush1.msra.mxu0 0.0
      %2512 = vmatprep.subr.mxu0 0.0
      %2513 = vmatpush1.msra.mxu0 0.0
      %2514 = vmatprep.subr.mxu0 0.0
      %2515 = vmatpush1.msra.mxu0 0.0
      %2516 = vmatprep.subr.mxu0 0.0
      %2517 = vmatpush1.msra.mxu0 0.0
      %2518 = vmatprep.subr.mxu0 0.0
      %2519 = vmatpush1.msra.mxu0 0.0
      %2520 = vmatprep.subr.mxu0 0.0
      %2521 = vmatpush1.msra.mxu0 0.0
      %2522 = vmatprep.subr.mxu0 0.0
      %2523 = vmatpush1.msra.mxu0 0.0
      %2524 = vmatprep.mubr.f32.mxu0 0.0
      %2525 = vmatmul.mubr.f32.gmra.mrb[0].mxu0 %v2361
      %v2526 = vpop.f32.mrb[0].mxu0
      %v2527 = vadd.f32 %v2357, %v2526
      %v2528 = vpop.f32.mrb[0].mxu0
      %2529 = vmatprep.mubr.f32.mxu0 0.0
      %2530 = vmatmul.mubr.f32.gmra.mrb[0].mxu0 %v2364
      %v2531 = vpop.f32.mrb[0].mxu0
      %v2532 = vadd.f32 %v2357, %v2531
      %v2533 = vpop.f32.mrb[0].mxu0
      %2534 = vmatprep.mubr.f32.mxu0 0.0
      %2535 = vmatmul.mubr.f32.gmra.mrb[0].mxu0 %v2367
      %v2536 = vpop.f32.mrb[0].mxu0
      %v2537 = vadd.f32 %v2357, %v2536
      %v2538 = vpop.f32.mrb[0].mxu0
      %2539 = vmatprep.mubr.f32.mxu0 0.0
      %2540 = vmatmul.mubr.f32.gmra.mrb[0].mxu0 %v2370
      %v2541 = vpop.f32.mrb[0].mxu0
      %v2542 = vadd.f32 %v2357, %v2541
      %v2543 = vpop.f32.mrb[0].mxu0
      %2544 = vmatprep.mubr.f32.mxu0 0.0
      %2545 = vmatmul.mubr.f32.gmra.mrb[0].mxu0 %v2373
      %v2546 = vpop.f32.mrb[0].mxu0
      %v2547 = vadd.f32 %v2357, %v2546
      %v2548 = vpop.f32.mrb[0].mxu0
      %2549 = vmatprep.mubr.f32.mxu0 0.0
      %2550 = vmatmul.mubr.f32.gmra.mrb[0].mxu0 %v2376
      %v2551 = vpop.f32.mrb[0].mxu0
      %v2552 = vadd.f32 %v2357, %v2551
      %v2553 = vpop.f32.mrb[0].mxu0
      %2554 = vmatprep.mubr.f32.mxu0 0.0
      %2555 = vmatmul.mubr.f32.gmra.mrb[0].mxu0 %v2379
      %v2556 = vpop.f32.mrb[0].mxu0
      %v2557 = vadd.f32 %v2357, %v2556
      %v2558 = vpop.f32.mrb[0].mxu0
      %2559 = vmatprep.mubr.f32.mxu0 0.0
      %2560 = vmatmul.mubr.f32.gmra.mrb[0].mxu0 %v2382
      %v2561 = vpop.f32.mrb[0].mxu0
      %v2562 = vadd.f32 %v2357, %v2561
      %v2563 = vpop.f32.mrb[0].mxu0
      %2564 = vmatprep.mubr.f32.mxu0 0.0
      %2565 = vmatmul.mubr.f32.gmra.mrb[0].mxu0 %v2385
      %v2566 = vpop.f32.mrb[0].mxu0
      %v2567 = vadd.f32 %v2357, %v2566
      %v2568 = vpop.f32.mrb[0].mxu0
      %2569 = vmatprep.mubr.f32.mxu0 0.0
      %2570 = vmatmul.mubr.f32.gmra.mrb[0].mxu0 %v2388
      %v2571 = vpop.f32.mrb[0].mxu0
      %v2572 = vadd.f32 %v2357, %v2571
      %v2573 = vpop.f32.mrb[0].mxu0
      %2574 = vmatprep.mubr.f32.mxu0 0.0
      %2575 = vmatmul.mubr.f32.gmra.mrb[0].mxu0 %v2391
      %v2576 = vpop.f32.mrb[0].mxu0
      %v2577 = vadd.f32 %v2357, %v2576
      %v2578 = vpop.f32.mrb[0].mxu0
      %2579 = vmatprep.mubr.f32.mxu0 0.0
      %2580 = vmatmul.mubr.f32.gmra.mrb[0].mxu0 %v2394
      %v2581 = vpop.f32.mrb[0].mxu0
      %v2582 = vadd.f32 %v2357, %v2581
      %v2583 = vpop.f32.mrb[0].mxu0
      %2584 = vmatprep.mubr.f32.mxu0 0.0
      %2585 = vmatmul.mubr.f32.gmra.mrb[0].mxu0 %v2397
      %v2586 = vpop.f32.mrb[0].mxu0
      %v2587 = vadd.f32 %v2357, %v2586
      %v2588 = vpop.f32.mrb[0].mxu0
      %2589 = vmatprep.mubr.f32.mxu0 0.0
      %2590 = vmatmul.mubr.f32.gmra.mrb[0].mxu0 %v2400
      %v2591 = vpop.f32.mrb[0].mxu0
      %v2592 = vadd.f32 %v2357, %v2591
      %v2593 = vpop.f32.mrb[0].mxu0
      %2594 = vmatprep.mubr.f32.mxu0 0.0
      %2595 = vmatmul.mubr.f32.gmra.mrb[0].mxu0 %v2403
      %v2596 = vpop.f32.mrb[0].mxu0
      %v2597 = vadd.f32 %v2357, %v2596
      %v2598 = vpop.f32.mrb[0].mxu0
      %2599 = vmatprep.mubr.f32.mxu0 0.0
      %2600 = vmatmul.mubr.f32.gmra.mrb[0].mxu0 %v2406
      %v2601 = vpop.f32.mrb[0].mxu0
      %v2602 = vadd.f32 %v2357, %v2601
      %v2603 = vpop.f32.mrb[0].mxu0
      %2604 = vmatprep.mubr.f32.mxu0 0.0
      %2605 = vmatmul.mubr.f32.gmra.mrb[0].mxu0 %v2409
      %v2606 = vpop.f32.mrb[0].mxu0
      %v2607 = vadd.f32 %v2357, %v2606
      %v2608 = vpop.f32.mrb[0].mxu0
      %2609 = vmatprep.mubr.f32.mxu0 0.0
      %2610 = vmatmul.mubr.f32.gmra.mrb[0].mxu0 %v2412
      %v2611 = vpop.f32.mrb[0].mxu0
      %v2612 = vadd.f32 %v2357, %v2611
      %v2613 = vpop.f32.mrb[0].mxu0
      %2614 = vmatprep.mubr.f32.mxu0 0.0
      %2615 = vmatmul.mubr.f32.gmra.mrb[0].mxu0 %v2415
      %v2616 = vpop.f32.mrb[0].mxu0
      %v2617 = vadd.f32 %v2357, %v2616
      %v2618 = vpop.f32.mrb[0].mxu0
      %2619 = vmatprep.mubr.f32.mxu0 0.0
      %2620 = vmatmul.mubr.f32.gmra.mrb[0].mxu0 %v2418
      %v2621 = vpop.f32.mrb[0].mxu0
      %v2622 = vadd.f32 %v2357, %v2621
      %v2623 = vpop.f32.mrb[0].mxu0
      %2624 = vmatprep.mubr.f32.mxu0 0.0
      %2625 = vmatmul.mubr.f32.gmra.mrb[0].mxu0 %v2421
      %v2626 = vpop.f32.mrb[0].mxu0
      %v2627 = vadd.f32 %v2357, %v2626
      %v2628 = vpop.f32.mrb[0].mxu0
      %2629 = vmatprep.mubr.f32.mxu0 0.0
      %2630 = vmatmul.mubr.f32.gmra.mrb[0].mxu0 %v2424
      %v2631 = vpop.f32.mrb[0].mxu0
      %v2632 = vadd.f32 %v2357, %v2631
      %v2633 = vpop.f32.mrb[0].mxu0
      %2634 = vmatprep.mubr.f32.mxu0 0.0
      %2635 = vmatmul.mubr.f32.gmra.mrb[0].mxu0 %v2427
      %v2636 = vpop.f32.mrb[0].mxu0
      %v2637 = vadd.f32 %v2357, %v2636
      %v2638 = vpop.f32.mrb[0].mxu0
      %2639 = vmatprep.mubr.f32.mxu0 0.0
      %2640 = vmatmul.mubr.f32.gmra.mrb[0].mxu0 %v2430
      %v2641 = vpop.f32.mrb[0].mxu0
      %v2642 = vadd.f32 %v2357, %v2641
      %v2643 = vpop.f32.mrb[0].mxu0
      %2644 = vmatprep.mubr.f32.mxu0 0.0
      %2645 = vmatmul.mubr.f32.gmra.mrb[0].mxu0 %v2433
      %v2646 = vpop.f32.mrb[0].mxu0
      %v2647 = vadd.f32 %v2357, %v2646
      %v2648 = vpop.f32.mrb[0].mxu0
      %2649 = vmatprep.mubr.f32.mxu0 0.0
      %2650 = vmatmul.mubr.f32.gmra.mrb[0].mxu0 %v2436
      %v2651 = vpop.f32.mrb[0].mxu0
      %v2652 = vadd.f32 %v2357, %v2651
      %v2653 = vpop.f32.mrb[0].mxu0
      %2654 = vmatprep.mubr.f32.mxu0 0.0
      %2655 = vmatmul.mubr.f32.gmra.mrb[0].mxu0 %v2439
      %v2656 = vpop.f32.mrb[0].mxu0
      %v2657 = vadd.f32 %v2357, %v2656
      %v2658 = vpop.f32.mrb[0].mxu0
      %2659 = vmatprep.mubr.f32.mxu0 0.0
      %2660 = vmatmul.mubr.f32.gmra.mrb[0].mxu0 %v2442
      %v2661 = vpop.f32.mrb[0].mxu0
      %v2662 = vadd.f32 %v2357, %v2661
      %v2663 = vpop.f32.mrb[0].mxu0
      %2664 = vmatprep.mubr.f32.mxu0 0.0
      %2665 = vmatmul.mubr.f32.gmra.mrb[0].mxu0 %v2445
      %v2666 = vpop.f32.mrb[0].mxu0
      %v2667 = vadd.f32 %v2357, %v2666
      %v2668 = vpop.f32.mrb[0].mxu0
      %2669 = vmatprep.mubr.f32.mxu0 0.0
      %2670 = vmatmul.mubr.f32.gmra.mrb[0].mxu0 %v2448
      %v2671 = vpop.f32.mrb[0].mxu0
      %v2672 = vadd.f32 %v2357, %v2671
      %v2673 = vpop.f32.mrb[0].mxu0
      %2674 = vmatprep.mubr.f32.mxu0 0.0
      %2675 = vmatmul.mubr.f32.gmra.mrb[0].mxu0 %v2451
      %v2676 = vpop.f32.mrb[0].mxu0
      %v2677 = vadd.f32 %v2357, %v2676
      %v2678 = vpop.f32.mrb[0].mxu0
      %2679 = vmatprep.mubr.f32.mxu0 0.0
      %2680 = vmatmul.mubr.f32.gmra.mrb[0].mxu0 %v2454
      %v2681 = vpop.f32.mrb[0].mxu0
      %v2682 = vadd.f32 %v2357, %v2681
      %v2683 = vpop.f32.mrb[0].mxu0
      %2684 = vdwg.mxu0
      %v2685 = vld [vmem:[%s5] sm:$0x1]
      %v2686 = vld [vmem:[%s6] sm:$0x1]
      %v2687 = vsel %vm2123, %v2527, 0.0
      %v2688 = vsel %vm2123, %v2532, 0.0
      %v2689 = vadd.f32 %v2687, %v2688
      %v2690 = vsel %vm2123, %v2537, 0.0
      %v2691 = vadd.f32 %v2689, %v2690
      %v2692 = vsel %vm2123, %v2542, 0.0
      %v2693 = vadd.f32 %v2691, %v2692
      %v2694 = vsel %vm2123, %v2547, 0.0
      %v2695 = vadd.f32 %v2693, %v2694
      %v2696 = vsel %vm2123, %v2552, 0.0
      %v2697 = vadd.f32 %v2695, %v2696
      %v2698 = vsel %vm2123, %v2557, 0.0
      %v2699 = vadd.f32 %v2697, %v2698
      %v2700 = vsel %vm2123, %v2562, 0.0
      %v2701 = vadd.f32 %v2699, %v2700
      %v2702 = vsel %vm2123, %v2567, 0.0
      %v2703 = vadd.f32 %v2701, %v2702
      %v2704 = vsel %vm2123, %v2572, 0.0
      %v2705 = vadd.f32 %v2703, %v2704
      %v2706 = vsel %vm2123, %v2577, 0.0
      %v2707 = vadd.f32 %v2705, %v2706
      %v2708 = vsel %vm2123, %v2582, 0.0
      %v2709 = vadd.f32 %v2707, %v2708
      %v2710 = vsel %vm2123, %v2587, 0.0
      %v2711 = vadd.f32 %v2709, %v2710
      %v2712 = vsel %vm2123, %v2592, 0.0
      %v2713 = vadd.f32 %v2711, %v2712
      %v2714 = vsel %vm2123, %v2597, 0.0
      %v2715 = vadd.f32 %v2713, %v2714
      %v2716 = vsel %vm2123, %v2602, 0.0
      %v2717 = vadd.f32 %v2715, %v2716
      %v2718 = vsel %vm2123, %v2607, 0.0
      %v2719 = vadd.f32 %v2717, %v2718
      %v2720 = vsel %vm2123, %v2612, 0.0
      %v2721 = vadd.f32 %v2719, %v2720
      %v2722 = vsel %vm2123, %v2617, 0.0
      %v2723 = vadd.f32 %v2721, %v2722
      %v2724 = vsel %vm2123, %v2622, 0.0
      %v2725 = vadd.f32 %v2723, %v2724
      %v2726 = vsel %vm2123, %v2627, 0.0
      %v2727 = vadd.f32 %v2725, %v2726
      %v2728 = vsel %vm2123, %v2632, 0.0
      %v2729 = vadd.f32 %v2727, %v2728
      %v2730 = vsel %vm2123, %v2637, 0.0
      %v2731 = vadd.f32 %v2729, %v2730
      %v2732 = vsel %vm2123, %v2642, 0.0
      %v2733 = vadd.f32 %v2731, %v2732
      %v2734 = vsel %vm2123, %v2647, 0.0
      %v2735 = vadd.f32 %v2733, %v2734
      %v2736 = vsel %vm2123, %v2652, 0.0
      %v2737 = vadd.f32 %v2735, %v2736
      %v2738 = vsel %vm2123, %v2657, 0.0
      %v2739 = vadd.f32 %v2737, %v2738
      %v2740 = vsel %vm2123, %v2662, 0.0
      %v2741 = vadd.f32 %v2739, %v2740
      %v2742 = vsel %vm2123, %v2667, 0.0
      %v2743 = vadd.f32 %v2741, %v2742
      %v2744 = vsel %vm2123, %v2672, 0.0
      %v2745 = vadd.f32 %v2743, %v2744
      %v2746 = vsel %vm2123, %v2677, 0.0
      %v2747 = vadd.f32 %v2745, %v2746
      %v2748 = vsel %vm2123, %v2682, 0.0
      %v2749 = vadd.f32 %v2747, %v2748
      %2750 = vadd.xlane.f32.xlu0 %v2749
      %v2751 = vpop.xlane.xlu0 %2750
      %v2752 = vrot.slane %v2751, 4
      %v2753 = vadd.f32 %v2751, %v2752
      %v2754 = vrot.slane %v2753, 2
      %v2755 = vadd.f32 %v2753, %v2754
      %v2756 = vrot.slane %v2755, 1
      %v2757 = vadd.f32 %v2755, %v2756
      %s2758 = vtos %v2757
      %v2759 = vrcp.pop 2048.0
      %s2760 = vtos %v2759
      %s2761 = smul.f32 %s2758, %s2760
      %v2762 = vstv %s2761
      %v2763 = vsub.f32 %v2527, %v2762
      %v2764 = vsub.f32 %v2532, %v2762
      %v2765 = vsub.f32 %v2537, %v2762
      %v2766 = vsub.f32 %v2542, %v2762
      %v2767 = vsub.f32 %v2547, %v2762
      %v2768 = vsub.f32 %v2552, %v2762
      %v2769 = vsub.f32 %v2557, %v2762
      %v2770 = vsub.f32 %v2562, %v2762
      %v2771 = vsub.f32 %v2567, %v2762
      %v2772 = vsub.f32 %v2572, %v2762
      %v2773 = vsub.f32 %v2577, %v2762
      %v2774 = vsub.f32 %v2582, %v2762
      %v2775 = vsub.f32 %v2587, %v2762
      %v2776 = vsub.f32 %v2592, %v2762
      %v2777 = vsub.f32 %v2597, %v2762
      %v2778 = vsub.f32 %v2602, %v2762
      %v2779 = vsub.f32 %v2607, %v2762
      %v2780 = vsub.f32 %v2612, %v2762
      %v2781 = vsub.f32 %v2617, %v2762
      %v2782 = vsub.f32 %v2622, %v2762
      %v2783 = vsub.f32 %v2627, %v2762
      %v2784 = vsub.f32 %v2632, %v2762
      %v2785 = vsub.f32 %v2637, %v2762
      %v2786 = vsub.f32 %v2642, %v2762
      %v2787 = vsub.f32 %v2647, %v2762
      %v2788 = vsub.f32 %v2652, %v2762
      %v2789 = vsub.f32 %v2657, %v2762
      %v2790 = vsub.f32 %v2662, %v2762
      %v2791 = vsub.f32 %v2667, %v2762
      %v2792 = vsub.f32 %v2672, %v2762
      %v2793 = vsub.f32 %v2677, %v2762
      %v2794 = vsub.f32 %v2682, %v2762
      %v2795 = vmul.f32 %v2763, %v2763
      %v2796 = vmul.f32 %v2764, %v2764
      %v2797 = vmul.f32 %v2765, %v2765
      %v2798 = vmul.f32 %v2766, %v2766
      %v2799 = vmul.f32 %v2767, %v2767
      %v2800 = vmul.f32 %v2768, %v2768
      %v2801 = vmul.f32 %v2769, %v2769
      %v2802 = vmul.f32 %v2770, %v2770
      %v2803 = vmul.f32 %v2771, %v2771
      %v2804 = vmul.f32 %v2772, %v2772
      %v2805 = vmul.f32 %v2773, %v2773
      %v2806 = vmul.f32 %v2774, %v2774
      %v2807 = vmul.f32 %v2775, %v2775
      %v2808 = vmul.f32 %v2776, %v2776
      %v2809 = vmul.f32 %v2777, %v2777
      %v2810 = vmul.f32 %v2778, %v2778
      %v2811 = vmul.f32 %v2779, %v2779
      %v2812 = vmul.f32 %v2780, %v2780
      %v2813 = vmul.f32 %v2781, %v2781
      %v2814 = vmul.f32 %v2782, %v2782
      %v2815 = vmul.f32 %v2783, %v2783
      %v2816 = vmul.f32 %v2784, %v2784
      %v2817 = vmul.f32 %v2785, %v2785
      %v2818 = vmul.f32 %v2786, %v2786
      %v2819 = vmul.f32 %v2787, %v2787
      %v2820 = vmul.f32 %v2788, %v2788
      %v2821 = vmul.f32 %v2789, %v2789
      %v2822 = vmul.f32 %v2790, %v2790
      %v2823 = vmul.f32 %v2791, %v2791
      %v2824 = vmul.f32 %v2792, %v2792
      %v2825 = vmul.f32 %v2793, %v2793
      %v2826 = vmul.f32 %v2794, %v2794
      %v2827 = vsel %vm2123, %v2795, 0.0
      %v2828 = vsel %vm2123, %v2796, 0.0
      %v2829 = vadd.f32 %v2827, %v2828
      %v2830 = vsel %vm2123, %v2797, 0.0
      %v2831 = vadd.f32 %v2829, %v2830
      %v2832 = vsel %vm2123, %v2798, 0.0
      %v2833 = vadd.f32 %v2831, %v2832
      %v2834 = vsel %vm2123, %v2799, 0.0
      %v2835 = vadd.f32 %v2833, %v2834
      %v2836 = vsel %vm2123, %v2800, 0.0
      %v2837 = vadd.f32 %v2835, %v2836
      %v2838 = vsel %vm2123, %v2801, 0.0
      %v2839 = vadd.f32 %v2837, %v2838
      %v2840 = vsel %vm2123, %v2802, 0.0
      %v2841 = vadd.f32 %v2839, %v2840
      %v2842 = vsel %vm2123, %v2803, 0.0
      %v2843 = vadd.f32 %v2841, %v2842
      %v2844 = vsel %vm2123, %v2804, 0.0
      %v2845 = vadd.f32 %v2843, %v2844
      %v2846 = vsel %vm2123, %v2805, 0.0
      %v2847 = vadd.f32 %v2845, %v2846
      %v2848 = vsel %vm2123, %v2806, 0.0
      %v2849 = vadd.f32 %v2847, %v2848
      %v2850 = vsel %vm2123, %v2807, 0.0
      %v2851 = vadd.f32 %v2849, %v2850
      %v2852 = vsel %vm2123, %v2808, 0.0
      %v2853 = vadd.f32 %v2851, %v2852
      %v2854 = vsel %vm2123, %v2809, 0.0
      %v2855 = vadd.f32 %v2853, %v2854
      %v2856 = vsel %vm2123, %v2810, 0.0
      %v2857 = vadd.f32 %v2855, %v2856
      %v2858 = vsel %vm2123, %v2811, 0.0
      %v2859 = vadd.f32 %v2857, %v2858
      %v2860 = vsel %vm2123, %v2812, 0.0
      %v2861 = vadd.f32 %v2859, %v2860
      %v2862 = vsel %vm2123, %v2813, 0.0
      %v2863 = vadd.f32 %v2861, %v2862
      %v2864 = vsel %vm2123, %v2814, 0.0
      %v2865 = vadd.f32 %v2863, %v2864
      %v2866 = vsel %vm2123, %v2815, 0.0
      %v2867 = vadd.f32 %v2865, %v2866
      %v2868 = vsel %vm2123, %v2816, 0.0
      %v2869 = vadd.f32 %v2867, %v2868
      %v2870 = vsel %vm2123, %v2817, 0.0
      %v2871 = vadd.f32 %v2869, %v2870
      %v2872 = vsel %vm2123, %v2818, 0.0
      %v2873 = vadd.f32 %v2871, %v2872
      %v2874 = vsel %vm2123, %v2819, 0.0
      %v2875 = vadd.f32 %v2873, %v2874
      %v2876 = vsel %vm2123, %v2820, 0.0
      %v2877 = vadd.f32 %v2875, %v2876
      %v2878 = vsel %vm2123, %v2821, 0.0
      %v2879 = vadd.f32 %v2877, %v2878
      %v2880 = vsel %vm2123, %v2822, 0.0
      %v2881 = vadd.f32 %v2879, %v2880
      %v2882 = vsel %vm2123, %v2823, 0.0
      %v2883 = vadd.f32 %v2881, %v2882
      %v2884 = vsel %vm2123, %v2824, 0.0
      %v2885 = vadd.f32 %v2883, %v2884
      %v2886 = vsel %vm2123, %v2825, 0.0
      %v2887 = vadd.f32 %v2885, %v2886
      %v2888 = vsel %vm2123, %v2826, 0.0
      %v2889 = vadd.f32 %v2887, %v2888
      %2890 = vadd.xlane.f32.xlu0 %v2889
      %v2891 = vpop.xlane.xlu0 %2890
      %v2892 = vrot.slane %v2891, 4
      %v2893 = vadd.f32 %v2891, %v2892
      %v2894 = vrot.slane %v2893, 2
      %v2895 = vadd.f32 %v2893, %v2894
      %v2896 = vrot.slane %v2895, 1
      %v2897 = vadd.f32 %v2895, %v2896
      %s2898 = vtos %v2897
      %v2899 = vrcp.pop 2048.0
      %s2900 = vtos %v2899
      %s2901 = smul.f32 %s2898, %s2900
      %s2902 = sadd.f32 %s2901, 1e-06
      %v2903 = vstv %s2902
      %v2904 = vrsqrt.pop %v2903
      %s2905 = vtos %v2904
      %v2906 = vstv %s2905
      %v2907 = vmul.f32 %v2763, %v2906
      %v2908 = vmul.f32 %v2764, %v2906
      %v2909 = vmul.f32 %v2765, %v2906
      %v2910 = vmul.f32 %v2766, %v2906
      %v2911 = vmul.f32 %v2767, %v2906
      %v2912 = vmul.f32 %v2768, %v2906
      %v2913 = vmul.f32 %v2769, %v2906
      %v2914 = vmul.f32 %v2770, %v2906
      %v2915 = vmul.f32 %v2771, %v2906
      %v2916 = vmul.f32 %v2772, %v2906
      %v2917 = vmul.f32 %v2773, %v2906
      %v2918 = vmul.f32 %v2774, %v2906
      %v2919 = vmul.f32 %v2775, %v2906
      %v2920 = vmul.f32 %v2776, %v2906
      %v2921 = vmul.f32 %v2777, %v2906
      %v2922 = vmul.f32 %v2778, %v2906
      %v2923 = vmul.f32 %v2779, %v2906
      %v2924 = vmul.f32 %v2780, %v2906
      %v2925 = vmul.f32 %v2781, %v2906
      %v2926 = vmul.f32 %v2782, %v2906
      %v2927 = vmul.f32 %v2783, %v2906
      %v2928 = vmul.f32 %v2784, %v2906
      %v2929 = vmul.f32 %v2785, %v2906
      %v2930 = vmul.f32 %v2786, %v2906
      %v2931 = vmul.f32 %v2787, %v2906
      %v2932 = vmul.f32 %v2788, %v2906
      %v2933 = vmul.f32 %v2789, %v2906
      %v2934 = vmul.f32 %v2790, %v2906
      %v2935 = vmul.f32 %v2791, %v2906
      %v2936 = vmul.f32 %v2792, %v2906
      %v2937 = vmul.f32 %v2793, %v2906
      %v2938 = vmul.f32 %v2794, %v2906
      %v2940 = vlaneseq
      %v2941 = vshrl.u32 %v2940, 7
      %v2942 = vsub.s32 0, %v2941
      %v2943 = vrot.slane %v2685, %v2942
      %v2945 = vmul.f32 %v2907, %v2943
      %v2946 = vmul.f32 %v2908, %v2943
      %v2947 = vmul.f32 %v2909, %v2943
      %v2948 = vmul.f32 %v2910, %v2943
      %v2949 = vmul.f32 %v2911, %v2943
      %v2950 = vmul.f32 %v2912, %v2943
      %v2951 = vmul.f32 %v2913, %v2943
      %v2952 = vmul.f32 %v2914, %v2943
      %v2953 = vmul.f32 %v2915, %v2943
      %v2954 = vmul.f32 %v2916, %v2943
      %v2955 = vmul.f32 %v2917, %v2943
      %v2956 = vmul.f32 %v2918, %v2943
      %v2957 = vmul.f32 %v2919, %v2943
      %v2958 = vmul.f32 %v2920, %v2943
      %v2959 = vmul.f32 %v2921, %v2943
      %v2960 = vmul.f32 %v2922, %v2943
      %v2961 = vmul.f32 %v2923, %v2943
      %v2962 = vmul.f32 %v2924, %v2943
      %v2963 = vmul.f32 %v2925, %v2943
      %v2964 = vmul.f32 %v2926, %v2943
      %v2965 = vmul.f32 %v2927, %v2943
      %v2966 = vmul.f32 %v2928, %v2943
      %v2967 = vmul.f32 %v2929, %v2943
      %v2968 = vmul.f32 %v2930, %v2943
      %v2969 = vmul.f32 %v2931, %v2943
      %v2970 = vmul.f32 %v2932, %v2943
      %v2971 = vmul.f32 %v2933, %v2943
      %v2972 = vmul.f32 %v2934, %v2943
      %v2973 = vmul.f32 %v2935, %v2943
      %v2974 = vmul.f32 %v2936, %v2943
      %v2975 = vmul.f32 %v2937, %v2943
      %v2976 = vmul.f32 %v2938, %v2943
      %v2978 = vlaneseq
      %v2979 = vshrl.u32 %v2978, 7
      %v2980 = vsub.s32 0, %v2979
      %v2981 = vrot.slane %v2686, %v2980
      %v2983 = vadd.f32 %v2945, %v2981
      %v2984 = vadd.f32 %v2946, %v2981
      %v2985 = vadd.f32 %v2947, %v2981
      %v2986 = vadd.f32 %v2948, %v2981
      %v2987 = vadd.f32 %v2949, %v2981
      %v2988 = vadd.f32 %v2950, %v2981
      %v2989 = vadd.f32 %v2951, %v2981
      %v2990 = vadd.f32 %v2952, %v2981
      %v2991 = vadd.f32 %v2953, %v2981
      %v2992 = vadd.f32 %v2954, %v2981
      %v2993 = vadd.f32 %v2955, %v2981
      %v2994 = vadd.f32 %v2956, %v2981
      %v2995 = vadd.f32 %v2957, %v2981
      %v2996 = vadd.f32 %v2958, %v2981
      %v2997 = vadd.f32 %v2959, %v2981
      %v2998 = vadd.f32 %v2960, %v2981
      %v2999 = vadd.f32 %v2961, %v2981
      %v3000 = vadd.f32 %v2962, %v2981
      %v3001 = vadd.f32 %v2963, %v2981
      %v3002 = vadd.f32 %v2964, %v2981
      %v3003 = vadd.f32 %v2965, %v2981
      %v3004 = vadd.f32 %v2966, %v2981
      %v3005 = vadd.f32 %v2967, %v2981
      %v3006 = vadd.f32 %v2968, %v2981
      %v3007 = vadd.f32 %v2969, %v2981
      %v3008 = vadd.f32 %v2970, %v2981
      %v3009 = vadd.f32 %v2971, %v2981
      %v3010 = vadd.f32 %v2972, %v2981
      %v3011 = vadd.f32 %v2973, %v2981
      %v3012 = vadd.f32 %v2974, %v2981
      %v3013 = vadd.f32 %v2975, %v2981
      %v3014 = vadd.f32 %v2976, %v2981
      %v3015 = vxor.u32 %v2983, 2147483648
      %v3016 = vxor.u32 %v2984, 2147483648
      %v3017 = vxor.u32 %v2985, 2147483648
      %v3018 = vxor.u32 %v2986, 2147483648
      %v3019 = vxor.u32 %v2987, 2147483648
      %v3020 = vxor.u32 %v2988, 2147483648
      %v3021 = vxor.u32 %v2989, 2147483648
      %v3022 = vxor.u32 %v2990, 2147483648
      %v3023 = vxor.u32 %v2991, 2147483648
      %v3024 = vxor.u32 %v2992, 2147483648
      %v3025 = vxor.u32 %v2993, 2147483648
      %v3026 = vxor.u32 %v2994, 2147483648
      %v3027 = vxor.u32 %v2995, 2147483648
      %v3028 = vxor.u32 %v2996, 2147483648
      %v3029 = vxor.u32 %v2997, 2147483648
      %v3030 = vxor.u32 %v2998, 2147483648
      %v3031 = vxor.u32 %v2999, 2147483648
      %v3032 = vxor.u32 %v3000, 2147483648
      %v3033 = vxor.u32 %v3001, 2147483648
      %v3034 = vxor.u32 %v3002, 2147483648
      %v3035 = vxor.u32 %v3003, 2147483648
      %v3036 = vxor.u32 %v3004, 2147483648
      %v3037 = vxor.u32 %v3005, 2147483648
      %v3038 = vxor.u32 %v3006, 2147483648
      %v3039 = vxor.u32 %v3007, 2147483648
      %v3040 = vxor.u32 %v3008, 2147483648
      %v3041 = vxor.u32 %v3009, 2147483648
      %v3042 = vxor.u32 %v3010, 2147483648
      %v3043 = vxor.u32 %v3011, 2147483648
      %v3044 = vxor.u32 %v3012, 2147483648
      %v3045 = vxor.u32 %v3013, 2147483648
      %v3046 = vxor.u32 %v3014, 2147483648
      %v3047 = vmul.f32 %v3015, 1.442695
      %v3048 = vpow.pop %v3047
      %v3049 = vmul.f32 %v3016, 1.442695
      %v3050 = vpow.pop %v3049
      %v3051 = vmul.f32 %v3017, 1.442695
      %v3052 = vpow.pop %v3051
      %v3053 = vmul.f32 %v3018, 1.442695
      %v3054 = vpow.pop %v3053
      %v3055 = vmul.f32 %v3019, 1.442695
      %v3056 = vpow.pop %v3055
      %v3057 = vmul.f32 %v3020, 1.442695
      %v3058 = vpow.pop %v3057
      %v3059 = vmul.f32 %v3021, 1.442695
      %v3060 = vpow.pop %v3059
      %v3061 = vmul.f32 %v3022, 1.442695
      %v3062 = vpow.pop %v3061
      %v3063 = vmul.f32 %v3023, 1.442695
      %v3064 = vpow.pop %v3063
      %v3065 = vmul.f32 %v3024, 1.442695
      %v3066 = vpow.pop %v3065
      %v3067 = vmul.f32 %v3025, 1.442695
      %v3068 = vpow.pop %v3067
      %v3069 = vmul.f32 %v3026, 1.442695
      %v3070 = vpow.pop %v3069
      %v3071 = vmul.f32 %v3027, 1.442695
      %v3072 = vpow.pop %v3071
      %v3073 = vmul.f32 %v3028, 1.442695
      %v3074 = vpow.pop %v3073
      %v3075 = vmul.f32 %v3029, 1.442695
      %v3076 = vpow.pop %v3075
      %v3077 = vmul.f32 %v3030, 1.442695
      %v3078 = vpow.pop %v3077
      %v3079 = vmul.f32 %v3031, 1.442695
      %v3080 = vpow.pop %v3079
      %v3081 = vmul.f32 %v3032, 1.442695
      %v3082 = vpow.pop %v3081
      %v3083 = vmul.f32 %v3033, 1.442695
      %v3084 = vpow.pop %v3083
      %v3085 = vmul.f32 %v3034, 1.442695
      %v3086 = vpow.pop %v3085
      %v3087 = vmul.f32 %v3035, 1.442695
      %v3088 = vpow.pop %v3087
      %v3089 = vmul.f32 %v3036, 1.442695
      %v3090 = vpow.pop %v3089
      %v3091 = vmul.f32 %v3037, 1.442695
      %v3092 = vpow.pop %v3091
      %v3093 = vmul.f32 %v3038, 1.442695
      %v3094 = vpow.pop %v3093
      %v3095 = vmul.f32 %v3039, 1.442695
      %v3096 = vpow.pop %v3095
      %v3097 = vmul.f32 %v3040, 1.442695
      %v3098 = vpow.pop %v3097
      %v3099 = vmul.f32 %v3041, 1.442695
      %v3100 = vpow.pop %v3099
      %v3101 = vmul.f32 %v3042, 1.442695
      %v3102 = vpow.pop %v3101
      %v3103 = vmul.f32 %v3043, 1.442695
      %v3104 = vpow.pop %v3103
      %v3105 = vmul.f32 %v3044, 1.442695
      %v3106 = vpow.pop %v3105
      %v3107 = vmul.f32 %v3045, 1.442695
      %v3108 = vpow.pop %v3107
      %v3109 = vmul.f32 %v3046, 1.442695
      %v3110 = vpow.pop %v3109
      %v3111 = vadd.f32 %v3048, 1.0
      %v3112 = vadd.f32 %v3050, 1.0
      %v3113 = vadd.f32 %v3052, 1.0
      %v3114 = vadd.f32 %v3054, 1.0
      %v3115 = vadd.f32 %v3056, 1.0
      %v3116 = vadd.f32 %v3058, 1.0
      %v3117 = vadd.f32 %v3060, 1.0
      %v3118 = vadd.f32 %v3062, 1.0
      %v3119 = vadd.f32 %v3064, 1.0
      %v3120 = vadd.f32 %v3066, 1.0
      %v3121 = vadd.f32 %v3068, 1.0
      %v3122 = vadd.f32 %v3070, 1.0
      %v3123 = vadd.f32 %v3072, 1.0
      %v3124 = vadd.f32 %v3074, 1.0
      %v3125 = vadd.f32 %v3076, 1.0
      %v3126 = vadd.f32 %v3078, 1.0
      %v3127 = vadd.f32 %v3080, 1.0
      %v3128 = vadd.f32 %v3082, 1.0
      %v3129 = vadd.f32 %v3084, 1.0
      %v3130 = vadd.f32 %v3086, 1.0
      %v3131 = vadd.f32 %v3088, 1.0
      %v3132 = vadd.f32 %v3090, 1.0
      %v3133 = vadd.f32 %v3092, 1.0
      %v3134 = vadd.f32 %v3094, 1.0
      %v3135 = vadd.f32 %v3096, 1.0
      %v3136 = vadd.f32 %v3098, 1.0
      %v3137 = vadd.f32 %v3100, 1.0
      %v3138 = vadd.f32 %v3102, 1.0
      %v3139 = vadd.f32 %v3104, 1.0
      %v3140 = vadd.f32 %v3106, 1.0
      %v3141 = vadd.f32 %v3108, 1.0
      %v3142 = vadd.f32 %v3110, 1.0
      %v3143 = vrcp.pop %v3111
      %v3144 = vmul.f32 1.0, %v3143
      %v3145 = vrcp.pop %v3112
      %v3146 = vmul.f32 1.0, %v3145
      %v3147 = vrcp.pop %v3113
      %v3148 = vmul.f32 1.0, %v3147
      %v3149 = vrcp.pop %v3114
      %v3150 = vmul.f32 1.0, %v3149
      %v3151 = vrcp.pop %v3115
      %v3152 = vmul.f32 1.0, %v3151
      %v3153 = vrcp.pop %v3116
      %v3154 = vmul.f32 1.0, %v3153
      %v3155 = vrcp.pop %v3117
      %v3156 = vmul.f32 1.0, %v3155
      %v3157 = vrcp.pop %v3118
      %v3158 = vmul.f32 1.0, %v3157
      %v3159 = vrcp.pop %v3119
      %v3160 = vmul.f32 1.0, %v3159
      %v3161 = vrcp.pop %v3120
      %v3162 = vmul.f32 1.0, %v3161
      %v3163 = vrcp.pop %v3121
      %v3164 = vmul.f32 1.0, %v3163
      %v3165 = vrcp.pop %v3122
      %v3166 = vmul.f32 1.0, %v3165
      %v3167 = vrcp.pop %v3123
      %v3168 = vmul.f32 1.0, %v3167
      %v3169 = vrcp.pop %v3124
      %v3170 = vmul.f32 1.0, %v3169
      %v3171 = vrcp.pop %v3125
      %v3172 = vmul.f32 1.0, %v3171
      %v3173 = vrcp.pop %v3126
      %v3174 = vmul.f32 1.0, %v3173
      %v3175 = vrcp.pop %v3127
      %v3176 = vmul.f32 1.0, %v3175
      %v3177 = vrcp.pop %v3128
      %v3178 = vmul.f32 1.0, %v3177
      %v3179 = vrcp.pop %v3129
      %v3180 = vmul.f32 1.0, %v3179
      %v3181 = vrcp.pop %v3130
      %v3182 = vmul.f32 1.0, %v3181
      %v3183 = vrcp.pop %v3131
      %v3184 = vmul.f32 1.0, %v3183
      %v3185 = vrcp.pop %v3132
      %v3186 = vmul.f32 1.0, %v3185
      %v3187 = vrcp.pop %v3133
      %v3188 = vmul.f32 1.0, %v3187
      %v3189 = vrcp.pop %v3134
      %v3190 = vmul.f32 1.0, %v3189
      %v3191 = vrcp.pop %v3135
      %v3192 = vmul.f32 1.0, %v3191
      %v3193 = vrcp.pop %v3136
      %v3194 = vmul.f32 1.0, %v3193
      %v3195 = vrcp.pop %v3137
      %v3196 = vmul.f32 1.0, %v3195
      %v3197 = vrcp.pop %v3138
      %v3198 = vmul.f32 1.0, %v3197
      %v3199 = vrcp.pop %v3139
      %v3200 = vmul.f32 1.0, %v3199
      %v3201 = vrcp.pop %v3140
      %v3202 = vmul.f32 1.0, %v3201
      %v3203 = vrcp.pop %v3141
      %v3204 = vmul.f32 1.0, %v3203
      %v3205 = vrcp.pop %v3142
      %v3206 = vmul.f32 1.0, %v3205
      %v3207 = vmul.f32 %v2983, %v3144
      %v3208 = vmul.f32 %v2984, %v3146
      %v3209 = vmul.f32 %v2985, %v3148
      %v3210 = vmul.f32 %v2986, %v3150
      %v3211 = vmul.f32 %v2987, %v3152
      %v3212 = vmul.f32 %v2988, %v3154
      %v3213 = vmul.f32 %v2989, %v3156
      %v3214 = vmul.f32 %v2990, %v3158
      %v3215 = vmul.f32 %v2991, %v3160
      %v3216 = vmul.f32 %v2992, %v3162
      %v3217 = vmul.f32 %v2993, %v3164
      %v3218 = vmul.f32 %v2994, %v3166
      %v3219 = vmul.f32 %v2995, %v3168
      %v3220 = vmul.f32 %v2996, %v3170
      %v3221 = vmul.f32 %v2997, %v3172
      %v3222 = vmul.f32 %v2998, %v3174
      %v3223 = vmul.f32 %v2999, %v3176
      %v3224 = vmul.f32 %v3000, %v3178
      %v3225 = vmul.f32 %v3001, %v3180
      %v3226 = vmul.f32 %v3002, %v3182
      %v3227 = vmul.f32 %v3003, %v3184
      %v3228 = vmul.f32 %v3004, %v3186
      %v3229 = vmul.f32 %v3005, %v3188
      %v3230 = vmul.f32 %v3006, %v3190
      %v3231 = vmul.f32 %v3007, %v3192
      %v3232 = vmul.f32 %v3008, %v3194
      %v3233 = vmul.f32 %v3009, %v3196
      %v3234 = vmul.f32 %v3010, %v3198
      %v3235 = vmul.f32 %v3011, %v3200
      %v3236 = vmul.f32 %v3012, %v3202
      %v3237 = vmul.f32 %v3013, %v3204
      %v3238 = vmul.f32 %v3014, %v3206
      %v3239 = vld [vmem:[%s7] sm:$0xff]
      %v3240 = vld [vmem:[%s7 + $0x8] sm:$0xff]
      %v3241 = vld [vmem:[%s7 + $0x10] sm:$0xff]
      %v3242 = vld [vmem:[%s7 + $0x18] sm:$0xff]
      %v3243 = vld [vmem:[%s7 + $0x20] sm:$0xff]
      %v3244 = vld [vmem:[%s7 + $0x28] sm:$0xff]
      %v3245 = vld [vmem:[%s7 + $0x30] sm:$0xff]
      %v3246 = vld [vmem:[%s7 + $0x38] sm:$0xff]
      %v3247 = vld [vmem:[%s7 + $0x40] sm:$0xff]
      %v3248 = vld [vmem:[%s8] sm:$0x1]
      %v3281 = vrot.slane %v3207, 7
      %v3282 = vrot.slane %v3208, 7
      %v3283 = vsel %vm1012, %v3281, %v3282
      %v3284 = vrot.slane %v3209, 7
      %v3285 = vrot.slane %v3210, 7
      %v3286 = vsel %vm1012, %v3284, %v3285
      %v3287 = vrot.slane %v3211, 7
      %v3288 = vrot.slane %v3212, 7
      %v3289 = vsel %vm1012, %v3287, %v3288
      %v3290 = vrot.slane %v3213, 7
      %v3291 = vrot.slane %v3214, 7
      %v3292 = vsel %vm1012, %v3290, %v3291
      %v3293 = vrot.slane %v3215, 7
      %v3294 = vrot.slane %v3216, 7
      %v3295 = vsel %vm1012, %v3293, %v3294
      %v3296 = vrot.slane %v3217, 7
      %v3297 = vrot.slane %v3218, 7
      %v3298 = vsel %vm1012, %v3296, %v3297
      %v3299 = vrot.slane %v3219, 7
      %v3300 = vrot.slane %v3220, 7
      %v3301 = vsel %vm1012, %v3299, %v3300
      %v3302 = vrot.slane %v3221, 7
      %v3303 = vrot.slane %v3222, 7
      %v3304 = vsel %vm1012, %v3302, %v3303
      %v3305 = vrot.slane %v3223, 7
      %v3306 = vrot.slane %v3224, 7
      %v3307 = vsel %vm1012, %v3305, %v3306
      %v3308 = vrot.slane %v3225, 7
      %v3309 = vrot.slane %v3226, 7
      %v3310 = vsel %vm1012, %v3308, %v3309
      %v3311 = vrot.slane %v3227, 7
      %v3312 = vrot.slane %v3228, 7
      %v3313 = vsel %vm1012, %v3311, %v3312
      %v3314 = vrot.slane %v3229, 7
      %v3315 = vrot.slane %v3230, 7
      %v3316 = vsel %vm1012, %v3314, %v3315
      %v3317 = vrot.slane %v3231, 7
      %v3318 = vrot.slane %v3232, 7
      %v3319 = vsel %vm1012, %v3317, %v3318
      %v3320 = vrot.slane %v3233, 7
      %v3321 = vrot.slane %v3234, 7
      %v3322 = vsel %vm1012, %v3320, %v3321
      %v3323 = vrot.slane %v3235, 7
      %v3324 = vrot.slane %v3236, 7
      %v3325 = vsel %vm1012, %v3323, %v3324
      %v3326 = vrot.slane %v3237, 7
      %v3327 = vrot.slane %v3238, 7
      %v3328 = vsel %vm1012, %v3326, %v3327
      %v3376 = vsel %vm1012, 0.0, %v3281
      %v3377 = vsel %vm1012, 0.0, %v3284
      %v3378 = vsel %vm1012, 0.0, %v3287
      %v3379 = vsel %vm1012, 0.0, %v3290
      %v3380 = vsel %vm1012, 0.0, %v3293
      %v3381 = vsel %vm1012, 0.0, %v3296
      %v3382 = vsel %vm1012, 0.0, %v3299
      %v3383 = vsel %vm1012, 0.0, %v3302
      %v3384 = vsel %vm1012, 0.0, %v3305
      %v3385 = vsel %vm1012, 0.0, %v3308
      %v3386 = vsel %vm1012, 0.0, %v3311
      %v3387 = vsel %vm1012, 0.0, %v3314
      %v3388 = vsel %vm1012, 0.0, %v3317
      %v3389 = vsel %vm1012, 0.0, %v3320
      %v3390 = vsel %vm1012, 0.0, %v3323
      %v3391 = vsel %vm1012, 0.0, %v3326
      %v3392 = vsel %vm1012, %v3282, 0.0
      %v3393 = vsel %vm1012, %v3285, 0.0
      %v3394 = vsel %vm1012, %v3288, 0.0
      %v3395 = vsel %vm1012, %v3291, 0.0
      %v3396 = vsel %vm1012, %v3294, 0.0
      %v3397 = vsel %vm1012, %v3297, 0.0
      %v3398 = vsel %vm1012, %v3300, 0.0
      %v3399 = vsel %vm1012, %v3303, 0.0
      %v3400 = vsel %vm1012, %v3306, 0.0
      %v3401 = vsel %vm1012, %v3309, 0.0
      %v3402 = vsel %vm1012, %v3312, 0.0
      %v3403 = vsel %vm1012, %v3315, 0.0
      %v3404 = vsel %vm1012, %v3318, 0.0
      %v3405 = vsel %vm1012, %v3321, 0.0
      %v3406 = vsel %vm1012, %v3324, 0.0
      %v3407 = vsel %vm1012, %v3327, 0.0
      %v3438 = vrot.slane %v3376, 1
      %v3439 = vrot.slane %v3283, 1
      %v3440 = vsel %vm1171, %v3438, %v3439
      %v3441 = vrot.slane %v3392, 1
      %v3442 = vsel %vm1171, %v3439, %v3441
      %v3443 = vrot.slane %v3377, 1
      %v3444 = vrot.slane %v3286, 1
      %v3445 = vsel %vm1171, %v3443, %v3444
      %v3446 = vrot.slane %v3393, 1
      %v3447 = vsel %vm1171, %v3444, %v3446
      %v3448 = vrot.slane %v3378, 1
      %v3449 = vrot.slane %v3289, 1
      %v3450 = vsel %vm1171, %v3448, %v3449
      %v3451 = vrot.slane %v3394, 1
      %v3452 = vsel %vm1171, %v3449, %v3451
      %v3453 = vrot.slane %v3379, 1
      %v3454 = vrot.slane %v3292, 1
      %v3455 = vsel %vm1171, %v3453, %v3454
      %v3456 = vrot.slane %v3395, 1
      %v3457 = vsel %vm1171, %v3454, %v3456
      %v3458 = vrot.slane %v3380, 1
      %v3459 = vrot.slane %v3295, 1
      %v3460 = vsel %vm1171, %v3458, %v3459
      %v3461 = vrot.slane %v3396, 1
      %v3462 = vsel %vm1171, %v3459, %v3461
      %v3463 = vrot.slane %v3381, 1
      %v3464 = vrot.slane %v3298, 1
      %v3465 = vsel %vm1171, %v3463, %v3464
      %v3466 = vrot.slane %v3397, 1
      %v3467 = vsel %vm1171, %v3464, %v3466
      %v3468 = vrot.slane %v3382, 1
      %v3469 = vrot.slane %v3301, 1
      %v3470 = vsel %vm1171, %v3468, %v3469
      %v3471 = vrot.slane %v3398, 1
      %v3472 = vsel %vm1171, %v3469, %v3471
      %v3473 = vrot.slane %v3383, 1
      %v3474 = vrot.slane %v3304, 1
      %v3475 = vsel %vm1171, %v3473, %v3474
      %v3476 = vrot.slane %v3399, 1
      %v3477 = vsel %vm1171, %v3474, %v3476
      %v3478 = vrot.slane %v3384, 1
      %v3479 = vrot.slane %v3307, 1
      %v3480 = vsel %vm1171, %v3478, %v3479
      %v3481 = vrot.slane %v3400, 1
      %v3482 = vsel %vm1171, %v3479, %v3481
      %v3483 = vrot.slane %v3385, 1
      %v3484 = vrot.slane %v3310, 1
      %v3485 = vsel %vm1171, %v3483, %v3484
      %v3486 = vrot.slane %v3401, 1
      %v3487 = vsel %vm1171, %v3484, %v3486
      %v3488 = vrot.slane %v3386, 1
      %v3489 = vrot.slane %v3313, 1
      %v3490 = vsel %vm1171, %v3488, %v3489
      %v3491 = vrot.slane %v3402, 1
      %v3492 = vsel %vm1171, %v3489, %v3491
      %v3493 = vrot.slane %v3387, 1
      %v3494 = vrot.slane %v3316, 1
      %v3495 = vsel %vm1171, %v3493, %v3494
      %v3496 = vrot.slane %v3403, 1
      %v3497 = vsel %vm1171, %v3494, %v3496
      %v3498 = vrot.slane %v3388, 1
      %v3499 = vrot.slane %v3319, 1
      %v3500 = vsel %vm1171, %v3498, %v3499
      %v3501 = vrot.slane %v3404, 1
      %v3502 = vsel %vm1171, %v3499, %v3501
      %v3503 = vrot.slane %v3389, 1
      %v3504 = vrot.slane %v3322, 1
      %v3505 = vsel %vm1171, %v3503, %v3504
      %v3506 = vrot.slane %v3405, 1
      %v3507 = vsel %vm1171, %v3504, %v3506
      %v3508 = vrot.slane %v3390, 1
      %v3509 = vrot.slane %v3325, 1
      %v3510 = vsel %vm1171, %v3508, %v3509
      %v3511 = vrot.slane %v3406, 1
      %v3512 = vsel %vm1171, %v3509, %v3511
      %v3513 = vrot.slane %v3376, 2
      %v3514 = vrot.slane %v3283, 2
      %v3515 = vsel %vm1249, %v3513, %v3514
      %v3516 = vrot.slane %v3392, 2
      %v3517 = vsel %vm1249, %v3514, %v3516
      %v3518 = vrot.slane %v3377, 2
      %v3519 = vrot.slane %v3286, 2
      %v3520 = vsel %vm1249, %v3518, %v3519
      %v3521 = vrot.slane %v3393, 2
      %v3522 = vsel %vm1249, %v3519, %v3521
      %v3523 = vrot.slane %v3378, 2
      %v3524 = vrot.slane %v3289, 2
      %v3525 = vsel %vm1249, %v3523, %v3524
      %v3526 = vrot.slane %v3394, 2
      %v3527 = vsel %vm1249, %v3524, %v3526
      %v3528 = vrot.slane %v3379, 2
      %v3529 = vrot.slane %v3292, 2
      %v3530 = vsel %vm1249, %v3528, %v3529
      %v3531 = vrot.slane %v3395, 2
      %v3532 = vsel %vm1249, %v3529, %v3531
      %v3533 = vrot.slane %v3380, 2
      %v3534 = vrot.slane %v3295, 2
      %v3535 = vsel %vm1249, %v3533, %v3534
      %v3536 = vrot.slane %v3396, 2
      %v3537 = vsel %vm1249, %v3534, %v3536
      %v3538 = vrot.slane %v3381, 2
      %v3539 = vrot.slane %v3298, 2
      %v3540 = vsel %vm1249, %v3538, %v3539
      %v3541 = vrot.slane %v3397, 2
      %v3542 = vsel %vm1249, %v3539, %v3541
      %v3543 = vrot.slane %v3382, 2
      %v3544 = vrot.slane %v3301, 2
      %v3545 = vsel %vm1249, %v3543, %v3544
      %v3546 = vrot.slane %v3398, 2
      %v3547 = vsel %vm1249, %v3544, %v3546
      %v3548 = vrot.slane %v3383, 2
      %v3549 = vrot.slane %v3304, 2
      %v3550 = vsel %vm1249, %v3548, %v3549
      %v3551 = vrot.slane %v3399, 2
      %v3552 = vsel %vm1249, %v3549, %v3551
      %v3553 = vrot.slane %v3384, 2
      %v3554 = vrot.slane %v3307, 2
      %v3555 = vsel %vm1249, %v3553, %v3554
      %v3556 = vrot.slane %v3400, 2
      %v3557 = vsel %vm1249, %v3554, %v3556
      %v3558 = vrot.slane %v3385, 2
      %v3559 = vrot.slane %v3310, 2
      %v3560 = vsel %vm1249, %v3558, %v3559
      %v3561 = vrot.slane %v3401, 2
      %v3562 = vsel %vm1249, %v3559, %v3561
      %v3563 = vrot.slane %v3386, 2
      %v3564 = vrot.slane %v3313, 2
      %v3565 = vsel %vm1249, %v3563, %v3564
      %v3566 = vrot.slane %v3402, 2
      %v3567 = vsel %vm1249, %v3564, %v3566
      %v3568 = vrot.slane %v3387, 2
      %v3569 = vrot.slane %v3316, 2
      %v3570 = vsel %vm1249, %v3568, %v3569
      %v3571 = vrot.slane %v3403, 2
      %v3572 = vsel %vm1249, %v3569, %v3571
      %v3573 = vrot.slane %v3388, 2
      %v3574 = vrot.slane %v3319, 2
      %v3575 = vsel %vm1249, %v3573, %v3574
      %v3576 = vrot.slane %v3404, 2
      %v3577 = vsel %vm1249, %v3574, %v3576
      %v3578 = vrot.slane %v3389, 2
      %v3579 = vrot.slane %v3322, 2
      %v3580 = vsel %vm1249, %v3578, %v3579
      %v3581 = vrot.slane %v3405, 2
      %v3582 = vsel %vm1249, %v3579, %v3581
      %v3583 = vrot.slane %v3390, 2
      %v3584 = vrot.slane %v3325, 2
      %v3585 = vsel %vm1249, %v3583, %v3584
      %v3586 = vrot.slane %v3406, 2
      %v3587 = vsel %vm1249, %v3584, %v3586
      %v3590 = vrot.slane %v3391, 1
      %v3591 = vrot.slane %v3328, 1
      %v3592 = vsel %vm1171, %v3590, %v3591
      %v3593 = vrot.slane %v3407, 1
      %v3594 = vsel %vm1171, %v3591, %v3593
      %v3595 = vrot.slane %v3391, 2
      %v3596 = vrot.slane %v3328, 2
      %v3597 = vsel %vm1249, %v3595, %v3596
      %v3598 = vrot.slane %v3407, 2
      %v3599 = vsel %vm1249, %v3596, %v3598
      %3600 = vrot.lane.b32.xlu0 %v1173, 8
      %v3601 = vpop.permute.xlu0 %3600
      %3602 = vrot.lane.b32.xlu0 %v3440, 8
      %v3603 = vpop.permute.xlu0 %3602
      %3604 = vrot.lane.b32.xlu0 %v3442, 8
      %v3605 = vpop.permute.xlu0 %3604
      %3606 = vrot.lane.b32.xlu0 %v3445, 8
      %v3607 = vpop.permute.xlu0 %3606
      %3608 = vrot.lane.b32.xlu0 %v3447, 8
      %v3609 = vpop.permute.xlu0 %3608
      %3610 = vrot.lane.b32.xlu0 %v3450, 8
      %v3611 = vpop.permute.xlu0 %3610
      %3612 = vrot.lane.b32.xlu0 %v3452, 8
      %v3613 = vpop.permute.xlu0 %3612
      %3614 = vrot.lane.b32.xlu0 %v3455, 8
      %v3615 = vpop.permute.xlu0 %3614
      %3616 = vrot.lane.b32.xlu0 %v3457, 8
      %v3617 = vpop.permute.xlu0 %3616
      %3618 = vrot.lane.b32.xlu0 %v3460, 8
      %v3619 = vpop.permute.xlu0 %3618
      %3620 = vrot.lane.b32.xlu0 %v3462, 8
      %v3621 = vpop.permute.xlu0 %3620
      %3622 = vrot.lane.b32.xlu0 %v3465, 8
      %v3623 = vpop.permute.xlu0 %3622
      %3624 = vrot.lane.b32.xlu0 %v3467, 8
      %v3625 = vpop.permute.xlu0 %3624
      %3626 = vrot.lane.b32.xlu0 %v3470, 8
      %v3627 = vpop.permute.xlu0 %3626
      %3628 = vrot.lane.b32.xlu0 %v3472, 8
      %v3629 = vpop.permute.xlu0 %3628
      %3630 = vrot.lane.b32.xlu0 %v3475, 8
      %v3631 = vpop.permute.xlu0 %3630
      %3632 = vrot.lane.b32.xlu0 %v3477, 8
      %v3633 = vpop.permute.xlu0 %3632
      %3634 = vrot.lane.b32.xlu0 %v3480, 8
      %v3635 = vpop.permute.xlu0 %3634
      %3636 = vrot.lane.b32.xlu0 %v3482, 8
      %v3637 = vpop.permute.xlu0 %3636
      %3638 = vrot.lane.b32.xlu0 %v3485, 8
      %v3639 = vpop.permute.xlu0 %3638
      %3640 = vrot.lane.b32.xlu0 %v3487, 8
      %v3641 = vpop.permute.xlu0 %3640
      %3642 = vrot.lane.b32.xlu0 %v3490, 8
      %v3643 = vpop.permute.xlu0 %3642
      %3644 = vrot.lane.b32.xlu0 %v3492, 8
      %v3645 = vpop.permute.xlu0 %3644
      %3646 = vrot.lane.b32.xlu0 %v3495, 8
      %v3647 = vpop.permute.xlu0 %3646
      %3648 = vrot.lane.b32.xlu0 %v3497, 8
      %v3649 = vpop.permute.xlu0 %3648
      %3650 = vrot.lane.b32.xlu0 %v3500, 8
      %v3651 = vpop.permute.xlu0 %3650
      %3652 = vrot.lane.b32.xlu0 %v3502, 8
      %v3653 = vpop.permute.xlu0 %3652
      %3654 = vrot.lane.b32.xlu0 %v3505, 8
      %v3655 = vpop.permute.xlu0 %3654
      %3656 = vrot.lane.b32.xlu0 %v3507, 8
      %v3657 = vpop.permute.xlu0 %3656
      %3658 = vrot.lane.b32.xlu0 %v3510, 8
      %v3659 = vpop.permute.xlu0 %3658
      %3660 = vrot.lane.b32.xlu0 %v3512, 8
      %v3661 = vpop.permute.xlu0 %3660
      %3693 = vrot.lane.b32.xlu0 %v1251, 16
      %v3694 = vpop.permute.xlu0 %3693
      %3695 = vrot.lane.b32.xlu0 %v3515, 16
      %v3696 = vpop.permute.xlu0 %3695
      %3697 = vrot.lane.b32.xlu0 %v3517, 16
      %v3698 = vpop.permute.xlu0 %3697
      %3699 = vrot.lane.b32.xlu0 %v3520, 16
      %v3700 = vpop.permute.xlu0 %3699
      %3701 = vrot.lane.b32.xlu0 %v3522, 16
      %v3702 = vpop.permute.xlu0 %3701
      %3703 = vrot.lane.b32.xlu0 %v3525, 16
      %v3704 = vpop.permute.xlu0 %3703
      %3705 = vrot.lane.b32.xlu0 %v3527, 16
      %v3706 = vpop.permute.xlu0 %3705
      %3707 = vrot.lane.b32.xlu0 %v3530, 16
      %v3708 = vpop.permute.xlu0 %3707
      %3709 = vrot.lane.b32.xlu0 %v3532, 16
      %v3710 = vpop.permute.xlu0 %3709
      %3711 = vrot.lane.b32.xlu0 %v3535, 16
      %v3712 = vpop.permute.xlu0 %3711
      %3713 = vrot.lane.b32.xlu0 %v3537, 16
      %v3714 = vpop.permute.xlu0 %3713
      %3715 = vrot.lane.b32.xlu0 %v3540, 16
      %v3716 = vpop.permute.xlu0 %3715
      %3717 = vrot.lane.b32.xlu0 %v3542, 16
      %v3718 = vpop.permute.xlu0 %3717
      %3719 = vrot.lane.b32.xlu0 %v3545, 16
      %v3720 = vpop.permute.xlu0 %3719
      %3721 = vrot.lane.b32.xlu0 %v3547, 16
      %v3722 = vpop.permute.xlu0 %3721
      %3723 = vrot.lane.b32.xlu0 %v3550, 16
      %v3724 = vpop.permute.xlu0 %3723
      %3725 = vrot.lane.b32.xlu0 %v3552, 16
      %v3726 = vpop.permute.xlu0 %3725
      %3727 = vrot.lane.b32.xlu0 %v3555, 16
      %v3728 = vpop.permute.xlu0 %3727
      %3729 = vrot.lane.b32.xlu0 %v3557, 16
      %v3730 = vpop.permute.xlu0 %3729
      %3731 = vrot.lane.b32.xlu0 %v3560, 16
      %v3732 = vpop.permute.xlu0 %3731
      %3733 = vrot.lane.b32.xlu0 %v3562, 16
      %v3734 = vpop.permute.xlu0 %3733
      %3735 = vrot.lane.b32.xlu0 %v3565, 16
      %v3736 = vpop.permute.xlu0 %3735
      %3737 = vrot.lane.b32.xlu0 %v3567, 16
      %v3738 = vpop.permute.xlu0 %3737
      %3739 = vrot.lane.b32.xlu0 %v3570, 16
      %v3740 = vpop.permute.xlu0 %3739
      %3741 = vrot.lane.b32.xlu0 %v3572, 16
      %v3742 = vpop.permute.xlu0 %3741
      %3743 = vrot.lane.b32.xlu0 %v3575, 16
      %v3744 = vpop.permute.xlu0 %3743
      %3745 = vrot.lane.b32.xlu0 %v3577, 16
      %v3746 = vpop.permute.xlu0 %3745
      %3747 = vrot.lane.b32.xlu0 %v3580, 16
      %v3748 = vpop.permute.xlu0 %3747
      %3749 = vrot.lane.b32.xlu0 %v3582, 16
      %v3750 = vpop.permute.xlu0 %3749
      %3751 = vrot.lane.b32.xlu0 %v3585, 16
      %v3752 = vpop.permute.xlu0 %3751
      %3753 = vrot.lane.b32.xlu0 %v3587, 16
      %v3754 = vpop.permute.xlu0 %3753
      %3786 = vrot.lane.b32.xlu0 %v3376, 24
      %v3787 = vpop.permute.xlu0 %3786
      %3788 = vrot.lane.b32.xlu0 %v3283, 24
      %v3789 = vpop.permute.xlu0 %3788
      %3790 = vrot.lane.b32.xlu0 %v3377, 24
      %v3791 = vpop.permute.xlu0 %3790
      %3792 = vrot.lane.b32.xlu0 %v3286, 24
      %v3793 = vpop.permute.xlu0 %3792
      %3794 = vrot.lane.b32.xlu0 %v3378, 24
      %v3795 = vpop.permute.xlu0 %3794
      %3796 = vrot.lane.b32.xlu0 %v3289, 24
      %v3797 = vpop.permute.xlu0 %3796
      %3798 = vrot.lane.b32.xlu0 %v3379, 24
      %v3799 = vpop.permute.xlu0 %3798
      %3800 = vrot.lane.b32.xlu0 %v3292, 24
      %v3801 = vpop.permute.xlu0 %3800
      %3802 = vrot.lane.b32.xlu0 %v3380, 24
      %v3803 = vpop.permute.xlu0 %3802
      %3804 = vrot.lane.b32.xlu0 %v3295, 24
      %v3805 = vpop.permute.xlu0 %3804
      %3806 = vrot.lane.b32.xlu0 %v3381, 24
      %v3807 = vpop.permute.xlu0 %3806
      %3808 = vrot.lane.b32.xlu0 %v3298, 24
      %v3809 = vpop.permute.xlu0 %3808
      %3810 = vrot.lane.b32.xlu0 %v3382, 24
      %v3811 = vpop.permute.xlu0 %3810
      %3812 = vrot.lane.b32.xlu0 %v3301, 24
      %v3813 = vpop.permute.xlu0 %3812
      %3814 = vrot.lane.b32.xlu0 %v3383, 24
      %v3815 = vpop.permute.xlu0 %3814
      %3816 = vrot.lane.b32.xlu0 %v3304, 24
      %v3817 = vpop.permute.xlu0 %3816
      %3818 = vrot.lane.b32.xlu0 %v3384, 24
      %v3819 = vpop.permute.xlu0 %3818
      %3820 = vrot.lane.b32.xlu0 %v3307, 24
      %v3821 = vpop.permute.xlu0 %3820
      %3822 = vrot.lane.b32.xlu0 %v3385, 24
      %v3823 = vpop.permute.xlu0 %3822
      %3824 = vrot.lane.b32.xlu0 %v3310, 24
      %v3825 = vpop.permute.xlu0 %3824
      %3826 = vrot.lane.b32.xlu0 %v3386, 24
      %v3827 = vpop.permute.xlu0 %3826
      %3828 = vrot.lane.b32.xlu0 %v3313, 24
      %v3829 = vpop.permute.xlu0 %3828
      %3830 = vrot.lane.b32.xlu0 %v3387, 24
      %v3831 = vpop.permute.xlu0 %3830
      %3832 = vrot.lane.b32.xlu0 %v3316, 24
      %v3833 = vpop.permute.xlu0 %3832
      %3834 = vrot.lane.b32.xlu0 %v3388, 24
      %v3835 = vpop.permute.xlu0 %3834
      %3836 = vrot.lane.b32.xlu0 %v3319, 24
      %v3837 = vpop.permute.xlu0 %3836
      %3838 = vrot.lane.b32.xlu0 %v3389, 24
      %v3839 = vpop.permute.xlu0 %3838
      %3840 = vrot.lane.b32.xlu0 %v3322, 24
      %v3841 = vpop.permute.xlu0 %3840
      %3842 = vrot.lane.b32.xlu0 %v3390, 24
      %v3843 = vpop.permute.xlu0 %3842
      %3844 = vrot.lane.b32.xlu0 %v3325, 24
      %v3845 = vpop.permute.xlu0 %3844
      %3846 = vrot.lane.b32.xlu0 %v3391, 24
      %v3847 = vpop.permute.xlu0 %3846
      %3848 = vrot.lane.b32.xlu0 %v3328, 24
      %v3849 = vpop.permute.xlu0 %3848
      %3882 = vrot.lane.b32.xlu0 %v3440, 32
      %v3883 = vpop.permute.xlu0 %3882
      %3884 = vrot.lane.b32.xlu0 %v3442, 32
      %v3885 = vpop.permute.xlu0 %3884
      %3886 = vrot.lane.b32.xlu0 %v3445, 32
      %v3887 = vpop.permute.xlu0 %3886
      %3888 = vrot.lane.b32.xlu0 %v3447, 32
      %v3889 = vpop.permute.xlu0 %3888
      %3890 = vrot.lane.b32.xlu0 %v3450, 32
      %v3891 = vpop.permute.xlu0 %3890
      %3892 = vrot.lane.b32.xlu0 %v3452, 32
      %v3893 = vpop.permute.xlu0 %3892
      %3894 = vrot.lane.b32.xlu0 %v3455, 32
      %v3895 = vpop.permute.xlu0 %3894
      %3896 = vrot.lane.b32.xlu0 %v3457, 32
      %v3897 = vpop.permute.xlu0 %3896
      %3898 = vrot.lane.b32.xlu0 %v3460, 32
      %v3899 = vpop.permute.xlu0 %3898
      %3900 = vrot.lane.b32.xlu0 %v3462, 32
      %v3901 = vpop.permute.xlu0 %3900
      %3902 = vrot.lane.b32.xlu0 %v3465, 32
      %v3903 = vpop.permute.xlu0 %3902
      %3904 = vrot.lane.b32.xlu0 %v3467, 32
      %v3905 = vpop.permute.xlu0 %3904
      %3906 = vrot.lane.b32.xlu0 %v3470, 32
      %v3907 = vpop.permute.xlu0 %3906
      %3908 = vrot.lane.b32.xlu0 %v3472, 32
      %v3909 = vpop.permute.xlu0 %3908
      %3910 = vrot.lane.b32.xlu0 %v3475, 32
      %v3911 = vpop.permute.xlu0 %3910
      %3912 = vrot.lane.b32.xlu0 %v3477, 32
      %v3913 = vpop.permute.xlu0 %3912
      %3914 = vrot.lane.b32.xlu0 %v3480, 32
      %v3915 = vpop.permute.xlu0 %3914
      %3916 = vrot.lane.b32.xlu0 %v3482, 32
      %v3917 = vpop.permute.xlu0 %3916
      %3918 = vrot.lane.b32.xlu0 %v3485, 32
      %v3919 = vpop.permute.xlu0 %3918
      %3920 = vrot.lane.b32.xlu0 %v3487, 32
      %v3921 = vpop.permute.xlu0 %3920
      %3922 = vrot.lane.b32.xlu0 %v3490, 32
      %v3923 = vpop.permute.xlu0 %3922
      %3924 = vrot.lane.b32.xlu0 %v3492, 32
      %v3925 = vpop.permute.xlu0 %3924
      %3926 = vrot.lane.b32.xlu0 %v3495, 32
      %v3927 = vpop.permute.xlu0 %3926
      %3928 = vrot.lane.b32.xlu0 %v3497, 32
      %v3929 = vpop.permute.xlu0 %3928
      %3930 = vrot.lane.b32.xlu0 %v3500, 32
      %v3931 = vpop.permute.xlu0 %3930
      %3932 = vrot.lane.b32.xlu0 %v3502, 32
      %v3933 = vpop.permute.xlu0 %3932
      %3934 = vrot.lane.b32.xlu0 %v3505, 32
      %v3935 = vpop.permute.xlu0 %3934
      %3936 = vrot.lane.b32.xlu0 %v3507, 32
      %v3937 = vpop.permute.xlu0 %3936
      %3938 = vrot.lane.b32.xlu0 %v3510, 32
      %v3939 = vpop.permute.xlu0 %3938
      %3940 = vrot.lane.b32.xlu0 %v3512, 32
      %v3941 = vpop.permute.xlu0 %3940
      %3942 = vrot.lane.b32.xlu0 %v3592, 32
      %v3943 = vpop.permute.xlu0 %3942
      %3944 = vrot.lane.b32.xlu0 %v3594, 32
      %v3945 = vpop.permute.xlu0 %3944
      %3978 = vrot.lane.b32.xlu0 %v3515, 40
      %v3979 = vpop.permute.xlu0 %3978
      %3980 = vrot.lane.b32.xlu0 %v3517, 40
      %v3981 = vpop.permute.xlu0 %3980
      %3982 = vrot.lane.b32.xlu0 %v3520, 40
      %v3983 = vpop.permute.xlu0 %3982
      %3984 = vrot.lane.b32.xlu0 %v3522, 40
      %v3985 = vpop.permute.xlu0 %3984
      %3986 = vrot.lane.b32.xlu0 %v3525, 40
      %v3987 = vpop.permute.xlu0 %3986
      %3988 = vrot.lane.b32.xlu0 %v3527, 40
      %v3989 = vpop.permute.xlu0 %3988
      %3990 = vrot.lane.b32.xlu0 %v3530, 40
      %v3991 = vpop.permute.xlu0 %3990
      %3992 = vrot.lane.b32.xlu0 %v3532, 40
      %v3993 = vpop.permute.xlu0 %3992
      %3994 = vrot.lane.b32.xlu0 %v3535, 40
      %v3995 = vpop.permute.xlu0 %3994
      %3996 = vrot.lane.b32.xlu0 %v3537, 40
      %v3997 = vpop.permute.xlu0 %3996
      %3998 = vrot.lane.b32.xlu0 %v3540, 40
      %v3999 = vpop.permute.xlu0 %3998
      %4000 = vrot.lane.b32.xlu0 %v3542, 40
      %v4001 = vpop.permute.xlu0 %4000
      %4002 = vrot.lane.b32.xlu0 %v3545, 40
      %v4003 = vpop.permute.xlu0 %4002
      %4004 = vrot.lane.b32.xlu0 %v3547, 40
      %v4005 = vpop.permute.xlu0 %4004
      %4006 = vrot.lane.b32.xlu0 %v3550, 40
      %v4007 = vpop.permute.xlu0 %4006
      %4008 = vrot.lane.b32.xlu0 %v3552, 40
      %v4009 = vpop.permute.xlu0 %4008
      %4010 = vrot.lane.b32.xlu0 %v3555, 40
      %v4011 = vpop.permute.xlu0 %4010
      %4012 = vrot.lane.b32.xlu0 %v3557, 40
      %v4013 = vpop.permute.xlu0 %4012
      %4014 = vrot.lane.b32.xlu0 %v3560, 40
      %v4015 = vpop.permute.xlu0 %4014
      %4016 = vrot.lane.b32.xlu0 %v3562, 40
      %v4017 = vpop.permute.xlu0 %4016
      %4018 = vrot.lane.b32.xlu0 %v3565, 40
      %v4019 = vpop.permute.xlu0 %4018
      %4020 = vrot.lane.b32.xlu0 %v3567, 40
      %v4021 = vpop.permute.xlu0 %4020
      %4022 = vrot.lane.b32.xlu0 %v3570, 40
      %v4023 = vpop.permute.xlu0 %4022
      %4024 = vrot.lane.b32.xlu0 %v3572, 40
      %v4025 = vpop.permute.xlu0 %4024
      %4026 = vrot.lane.b32.xlu0 %v3575, 40
      %v4027 = vpop.permute.xlu0 %4026
      %4028 = vrot.lane.b32.xlu0 %v3577, 40
      %v4029 = vpop.permute.xlu0 %4028
      %4030 = vrot.lane.b32.xlu0 %v3580, 40
      %v4031 = vpop.permute.xlu0 %4030
      %4032 = vrot.lane.b32.xlu0 %v3582, 40
      %v4033 = vpop.permute.xlu0 %4032
      %4034 = vrot.lane.b32.xlu0 %v3585, 40
      %v4035 = vpop.permute.xlu0 %4034
      %4036 = vrot.lane.b32.xlu0 %v3587, 40
      %v4037 = vpop.permute.xlu0 %4036
      %4038 = vrot.lane.b32.xlu0 %v3597, 40
      %v4039 = vpop.permute.xlu0 %4038
      %4040 = vrot.lane.b32.xlu0 %v3599, 40
      %v4041 = vpop.permute.xlu0 %4040
      %4074 = vrot.lane.b32.xlu0 %v3377, 48
      %v4075 = vpop.permute.xlu0 %4074
      %4076 = vrot.lane.b32.xlu0 %v3286, 48
      %v4077 = vpop.permute.xlu0 %4076
      %4078 = vrot.lane.b32.xlu0 %v3378, 48
      %v4079 = vpop.permute.xlu0 %4078
      %4080 = vrot.lane.b32.xlu0 %v3289, 48
      %v4081 = vpop.permute.xlu0 %4080
      %4082 = vrot.lane.b32.xlu0 %v3379, 48
      %v4083 = vpop.permute.xlu0 %4082
      %4084 = vrot.lane.b32.xlu0 %v3292, 48
      %v4085 = vpop.permute.xlu0 %4084
      %4086 = vrot.lane.b32.xlu0 %v3380, 48
      %v4087 = vpop.permute.xlu0 %4086
      %4088 = vrot.lane.b32.xlu0 %v3295, 48
      %v4089 = vpop.permute.xlu0 %4088
      %4090 = vrot.lane.b32.xlu0 %v3381, 48
      %v4091 = vpop.permute.xlu0 %4090
      %4092 = vrot.lane.b32.xlu0 %v3298, 48
      %v4093 = vpop.permute.xlu0 %4092
      %4094 = vrot.lane.b32.xlu0 %v3382, 48
      %v4095 = vpop.permute.xlu0 %4094
      %4096 = vrot.lane.b32.xlu0 %v3301, 48
      %v4097 = vpop.permute.xlu0 %4096
      %4098 = vrot.lane.b32.xlu0 %v3383, 48
      %v4099 = vpop.permute.xlu0 %4098
      %4100 = vrot.lane.b32.xlu0 %v3304, 48
      %v4101 = vpop.permute.xlu0 %4100
      %4102 = vrot.lane.b32.xlu0 %v3384, 48
      %v4103 = vpop.permute.xlu0 %4102
      %4104 = vrot.lane.b32.xlu0 %v3307, 48
      %v4105 = vpop.permute.xlu0 %4104
      %4106 = vrot.lane.b32.xlu0 %v3385, 48
      %v4107 = vpop.permute.xlu0 %4106
      %4108 = vrot.lane.b32.xlu0 %v3310, 48
      %v4109 = vpop.permute.xlu0 %4108
      %4110 = vrot.lane.b32.xlu0 %v3386, 48
      %v4111 = vpop.permute.xlu0 %4110
      %4112 = vrot.lane.b32.xlu0 %v3313, 48
      %v4113 = vpop.permute.xlu0 %4112
      %4114 = vrot.lane.b32.xlu0 %v3387, 48
      %v4115 = vpop.permute.xlu0 %4114
      %4116 = vrot.lane.b32.xlu0 %v3316, 48
      %v4117 = vpop.permute.xlu0 %4116
      %4118 = vrot.lane.b32.xlu0 %v3388, 48
      %v4119 = vpop.permute.xlu0 %4118
      %4120 = vrot.lane.b32.xlu0 %v3319, 48
      %v4121 = vpop.permute.xlu0 %4120
      %4122 = vrot.lane.b32.xlu0 %v3389, 48
      %v4123 = vpop.permute.xlu0 %4122
      %4124 = vrot.lane.b32.xlu0 %v3322, 48
      %v4125 = vpop.permute.xlu0 %4124
      %4126 = vrot.lane.b32.xlu0 %v3390, 48
      %v4127 = vpop.permute.xlu0 %4126
      %4128 = vrot.lane.b32.xlu0 %v3325, 48
      %v4129 = vpop.permute.xlu0 %4128
      %4130 = vrot.lane.b32.xlu0 %v3391, 48
      %v4131 = vpop.permute.xlu0 %4130
      %4132 = vrot.lane.b32.xlu0 %v3328, 48
      %v4133 = vpop.permute.xlu0 %4132
      %4134 = vrot.lane.b32.xlu0 0.0, 48
      %v4135 = vpop.permute.xlu0 %4134
      %4167 = vrot.lane.b32.xlu0 %v3445, 56
      %v4168 = vpop.permute.xlu0 %4167
      %4169 = vrot.lane.b32.xlu0 %v3447, 56
      %v4170 = vpop.permute.xlu0 %4169
      %4171 = vrot.lane.b32.xlu0 %v3450, 56
      %v4172 = vpop.permute.xlu0 %4171
      %4173 = vrot.lane.b32.xlu0 %v3452, 56
      %v4174 = vpop.permute.xlu0 %4173
      %4175 = vrot.lane.b32.xlu0 %v3455, 56
      %v4176 = vpop.permute.xlu0 %4175
      %4177 = vrot.lane.b32.xlu0 %v3457, 56
      %v4178 = vpop.permute.xlu0 %4177
      %4179 = vrot.lane.b32.xlu0 %v3460, 56
      %v4180 = vpop.permute.xlu0 %4179
      %4181 = vrot.lane.b32.xlu0 %v3462, 56
      %v4182 = vpop.permute.xlu0 %4181
      %4183 = vrot.lane.b32.xlu0 %v3465, 56
      %v4184 = vpop.permute.xlu0 %4183
      %4185 = vrot.lane.b32.xlu0 %v3467, 56
      %v4186 = vpop.permute.xlu0 %4185
      %4187 = vrot.lane.b32.xlu0 %v3470, 56
      %v4188 = vpop.permute.xlu0 %4187
      %4189 = vrot.lane.b32.xlu0 %v3472, 56
      %v4190 = vpop.permute.xlu0 %4189
      %4191 = vrot.lane.b32.xlu0 %v3475, 56
      %v4192 = vpop.permute.xlu0 %4191
      %4193 = vrot.lane.b32.xlu0 %v3477, 56
      %v4194 = vpop.permute.xlu0 %4193
      %4195 = vrot.lane.b32.xlu0 %v3480, 56
      %v4196 = vpop.permute.xlu0 %4195
      %4197 = vrot.lane.b32.xlu0 %v3482, 56
      %v4198 = vpop.permute.xlu0 %4197
      %4199 = vrot.lane.b32.xlu0 %v3485, 56
      %v4200 = vpop.permute.xlu0 %4199
      %4201 = vrot.lane.b32.xlu0 %v3487, 56
      %v4202 = vpop.permute.xlu0 %4201
      %4203 = vrot.lane.b32.xlu0 %v3490, 56
      %v4204 = vpop.permute.xlu0 %4203
      %4205 = vrot.lane.b32.xlu0 %v3492, 56
      %v4206 = vpop.permute.xlu0 %4205
      %4207 = vrot.lane.b32.xlu0 %v3495, 56
      %v4208 = vpop.permute.xlu0 %4207
      %4209 = vrot.lane.b32.xlu0 %v3497, 56
      %v4210 = vpop.permute.xlu0 %4209
      %4211 = vrot.lane.b32.xlu0 %v3500, 56
      %v4212 = vpop.permute.xlu0 %4211
      %4213 = vrot.lane.b32.xlu0 %v3502, 56
      %v4214 = vpop.permute.xlu0 %4213
      %4215 = vrot.lane.b32.xlu0 %v3505, 56
      %v4216 = vpop.permute.xlu0 %4215
      %4217 = vrot.lane.b32.xlu0 %v3507, 56
      %v4218 = vpop.permute.xlu0 %4217
      %4219 = vrot.lane.b32.xlu0 %v3510, 56
      %v4220 = vpop.permute.xlu0 %4219
      %4221 = vrot.lane.b32.xlu0 %v3512, 56
      %v4222 = vpop.permute.xlu0 %4221
      %4223 = vrot.lane.b32.xlu0 %v3592, 56
      %v4224 = vpop.permute.xlu0 %4223
      %4225 = vrot.lane.b32.xlu0 %v3594, 56
      %v4226 = vpop.permute.xlu0 %4225
      %4227 = vrot.lane.b32.xlu0 %v1173, 56
      %v4228 = vpop.permute.xlu0 %4227
      %4260 = vrot.lane.b32.xlu0 %v3520, 64
      %v4261 = vpop.permute.xlu0 %4260
      %4262 = vrot.lane.b32.xlu0 %v3522, 64
      %v4263 = vpop.permute.xlu0 %4262
      %4264 = vrot.lane.b32.xlu0 %v3525, 64
      %v4265 = vpop.permute.xlu0 %4264
      %4266 = vrot.lane.b32.xlu0 %v3527, 64
      %v4267 = vpop.permute.xlu0 %4266
      %4268 = vrot.lane.b32.xlu0 %v3530, 64
      %v4269 = vpop.permute.xlu0 %4268
      %4270 = vrot.lane.b32.xlu0 %v3532, 64
      %v4271 = vpop.permute.xlu0 %4270
      %4272 = vrot.lane.b32.xlu0 %v3535, 64
      %v4273 = vpop.permute.xlu0 %4272
      %4274 = vrot.lane.b32.xlu0 %v3537, 64
      %v4275 = vpop.permute.xlu0 %4274
      %4276 = vrot.lane.b32.xlu0 %v3540, 64
      %v4277 = vpop.permute.xlu0 %4276
      %4278 = vrot.lane.b32.xlu0 %v3542, 64
      %v4279 = vpop.permute.xlu0 %4278
      %4280 = vrot.lane.b32.xlu0 %v3545, 64
      %v4281 = vpop.permute.xlu0 %4280
      %4282 = vrot.lane.b32.xlu0 %v3547, 64
      %v4283 = vpop.permute.xlu0 %4282
      %4284 = vrot.lane.b32.xlu0 %v3550, 64
      %v4285 = vpop.permute.xlu0 %4284
      %4286 = vrot.lane.b32.xlu0 %v3552, 64
      %v4287 = vpop.permute.xlu0 %4286
      %4288 = vrot.lane.b32.xlu0 %v3555, 64
      %v4289 = vpop.permute.xlu0 %4288
      %4290 = vrot.lane.b32.xlu0 %v3557, 64
      %v4291 = vpop.permute.xlu0 %4290
      %4292 = vrot.lane.b32.xlu0 %v3560, 64
      %v4293 = vpop.permute.xlu0 %4292
      %4294 = vrot.lane.b32.xlu0 %v3562, 64
      %v4295 = vpop.permute.xlu0 %4294
      %4296 = vrot.lane.b32.xlu0 %v3565, 64
      %v4297 = vpop.permute.xlu0 %4296
      %4298 = vrot.lane.b32.xlu0 %v3567, 64
      %v4299 = vpop.permute.xlu0 %4298
      %4300 = vrot.lane.b32.xlu0 %v3570, 64
      %v4301 = vpop.permute.xlu0 %4300
      %4302 = vrot.lane.b32.xlu0 %v3572, 64
      %v4303 = vpop.permute.xlu0 %4302
      %4304 = vrot.lane.b32.xlu0 %v3575, 64
      %v4305 = vpop.permute.xlu0 %4304
      %4306 = vrot.lane.b32.xlu0 %v3577, 64
      %v4307 = vpop.permute.xlu0 %4306
      %4308 = vrot.lane.b32.xlu0 %v3580, 64
      %v4309 = vpop.permute.xlu0 %4308
      %4310 = vrot.lane.b32.xlu0 %v3582, 64
      %v4311 = vpop.permute.xlu0 %4310
      %4312 = vrot.lane.b32.xlu0 %v3585, 64
      %v4313 = vpop.permute.xlu0 %4312
      %4314 = vrot.lane.b32.xlu0 %v3587, 64
      %v4315 = vpop.permute.xlu0 %4314
      %4316 = vrot.lane.b32.xlu0 %v3597, 64
      %v4317 = vpop.permute.xlu0 %4316
      %4318 = vrot.lane.b32.xlu0 %v3599, 64
      %v4319 = vpop.permute.xlu0 %4318
      %4320 = vrot.lane.b32.xlu0 %v1251, 64
      %v4321 = vpop.permute.xlu0 %4320
      %v4353 = vsel %vm2123, 0.0, %v3601
      %v4354 = vsel %vm2123, %v3376, %v3603
      %v4355 = vsel %vm2123, %v3283, %v3605
      %v4356 = vsel %vm2123, %v3377, %v3607
      %v4357 = vsel %vm2123, %v3286, %v3609
      %v4358 = vsel %vm2123, %v3378, %v3611
      %v4359 = vsel %vm2123, %v3289, %v3613
      %v4360 = vsel %vm2123, %v3379, %v3615
      %v4361 = vsel %vm2123, %v3292, %v3617
      %v4362 = vsel %vm2123, %v3380, %v3619
      %v4363 = vsel %vm2123, %v3295, %v3621
      %v4364 = vsel %vm2123, %v3381, %v3623
      %v4365 = vsel %vm2123, %v3298, %v3625
      %v4366 = vsel %vm2123, %v3382, %v3627
      %v4367 = vsel %vm2123, %v3301, %v3629
      %v4368 = vsel %vm2123, %v3383, %v3631
      %v4369 = vsel %vm2123, %v3304, %v3633
      %v4370 = vsel %vm2123, %v3384, %v3635
      %v4371 = vsel %vm2123, %v3307, %v3637
      %v4372 = vsel %vm2123, %v3385, %v3639
      %v4373 = vsel %vm2123, %v3310, %v3641
      %v4374 = vsel %vm2123, %v3386, %v3643
      %v4375 = vsel %vm2123, %v3313, %v3645
      %v4376 = vsel %vm2123, %v3387, %v3647
      %v4377 = vsel %vm2123, %v3316, %v3649
      %v4378 = vsel %vm2123, %v3388, %v3651
      %v4379 = vsel %vm2123, %v3319, %v3653
      %v4380 = vsel %vm2123, %v3389, %v3655
      %v4381 = vsel %vm2123, %v3322, %v3657
      %v4382 = vsel %vm2123, %v3390, %v3659
      %v4383 = vsel %vm2123, %v3325, %v3661
      %v4384 = vsel %vm2188, %v4353, %v3694
      %v4385 = vsel %vm2188, %v4354, %v3696
      %v4386 = vsel %vm2188, %v4355, %v3698
      %v4387 = vsel %vm2188, %v4356, %v3700
      %v4388 = vsel %vm2188, %v4357, %v3702
      %v4389 = vsel %vm2188, %v4358, %v3704
      %v4390 = vsel %vm2188, %v4359, %v3706
      %v4391 = vsel %vm2188, %v4360, %v3708
      %v4392 = vsel %vm2188, %v4361, %v3710
      %v4393 = vsel %vm2188, %v4362, %v3712
      %v4394 = vsel %vm2188, %v4363, %v3714
      %v4395 = vsel %vm2188, %v4364, %v3716
      %v4396 = vsel %vm2188, %v4365, %v3718
      %v4397 = vsel %vm2188, %v4366, %v3720
      %v4398 = vsel %vm2188, %v4367, %v3722
      %v4399 = vsel %vm2188, %v4368, %v3724
      %v4400 = vsel %vm2188, %v4369, %v3726
      %v4401 = vsel %vm2188, %v4370, %v3728
      %v4402 = vsel %vm2188, %v4371, %v3730
      %v4403 = vsel %vm2188, %v4372, %v3732
      %v4404 = vsel %vm2188, %v4373, %v3734
      %v4405 = vsel %vm2188, %v4374, %v3736
      %v4406 = vsel %vm2188, %v4375, %v3738
      %v4407 = vsel %vm2188, %v4376, %v3740
      %v4408 = vsel %vm2188, %v4377, %v3742
      %v4409 = vsel %vm2188, %v4378, %v3744
      %v4410 = vsel %vm2188, %v4379, %v3746
      %v4411 = vsel %vm2188, %v4380, %v3748
      %v4412 = vsel %vm2188, %v4381, %v3750
      %v4413 = vsel %vm2188, %v4382, %v3752
      %v4414 = vsel %vm2188, %v4383, %v3754
      %v4415 = vsel %vm2254, %v4384, %v3787
      %v4416 = vsel %vm2254, %v4384, %v3789
      %v4417 = vsel %vm2254, %v4385, %v3791
      %v4418 = vsel %vm2254, %v4386, %v3793
      %v4419 = vsel %vm2254, %v4387, %v3795
      %v4420 = vsel %vm2254, %v4388, %v3797
      %v4421 = vsel %vm2254, %v4389, %v3799
      %v4422 = vsel %vm2254, %v4390, %v3801
      %v4423 = vsel %vm2254, %v4391, %v3803
      %v4424 = vsel %vm2254, %v4392, %v3805
      %v4425 = vsel %vm2254, %v4393, %v3807
      %v4426 = vsel %vm2254, %v4394, %v3809
      %v4427 = vsel %vm2254, %v4395, %v3811
      %v4428 = vsel %vm2254, %v4396, %v3813
      %v4429 = vsel %vm2254, %v4397, %v3815
      %v4430 = vsel %vm2254, %v4398, %v3817
      %v4431 = vsel %vm2254, %v4399, %v3819
      %v4432 = vsel %vm2254, %v4400, %v3821
      %v4433 = vsel %vm2254, %v4401, %v3823
      %v4434 = vsel %vm2254, %v4402, %v3825
      %v4435 = vsel %vm2254, %v4403, %v3827
      %v4436 = vsel %vm2254, %v4404, %v3829
      %v4437 = vsel %vm2254, %v4405, %v3831
      %v4438 = vsel %vm2254, %v4406, %v3833
      %v4439 = vsel %vm2254, %v4407, %v3835
      %v4440 = vsel %vm2254, %v4408, %v3837
      %v4441 = vsel %vm2254, %v4409, %v3839
      %v4442 = vsel %vm2254, %v4410, %v3841
      %v4443 = vsel %vm2254, %v4411, %v3843
      %v4444 = vsel %vm2254, %v4412, %v3845
      %v4445 = vsel %vm2254, %v4413, %v3847
      %v4446 = vsel %vm2254, %v4414, %v3849
      %v4447 = vsel %vm2320, %v4415, %v3883
      %v4448 = vsel %vm2320, %v4416, %v3885
      %v4449 = vsel %vm2320, %v4417, %v3887
      %v4450 = vsel %vm2320, %v4418, %v3889
      %v4451 = vsel %vm2320, %v4419, %v3891
      %v4452 = vsel %vm2320, %v4420, %v3893
      %v4453 = vsel %vm2320, %v4421, %v3895
      %v4454 = vsel %vm2320, %v4422, %v3897
      %v4455 = vsel %vm2320, %v4423, %v3899
      %v4456 = vsel %vm2320, %v4424, %v3901
      %v4457 = vsel %vm2320, %v4425, %v3903
      %v4458 = vsel %vm2320, %v4426, %v3905
      %v4459 = vsel %vm2320, %v4427, %v3907
      %v4460 = vsel %vm2320, %v4428, %v3909
      %v4461 = vsel %vm2320, %v4429, %v3911
      %v4462 = vsel %vm2320, %v4430, %v3913
      %v4463 = vsel %vm2320, %v4431, %v3915
      %v4464 = vsel %vm2320, %v4432, %v3917
      %v4465 = vsel %vm2320, %v4433, %v3919
      %v4466 = vsel %vm2320, %v4434, %v3921
      %v4467 = vsel %vm2320, %v4435, %v3923
      %v4468 = vsel %vm2320, %v4436, %v3925
      %v4469 = vsel %vm2320, %v4437, %v3927
      %v4470 = vsel %vm2320, %v4438, %v3929
      %v4471 = vsel %vm2320, %v4439, %v3931
      %v4472 = vsel %vm2320, %v4440, %v3933
      %v4473 = vsel %vm2320, %v4441, %v3935
      %v4474 = vsel %vm2320, %v4442, %v3937
      %v4475 = vsel %vm2320, %v4443, %v3939
      %v4476 = vsel %vm2320, %v4444, %v3941
      %v4477 = vsel %vm2320, %v4445, %v3943
      %v4478 = vsel %vm2320, %v4446, %v3945
      %vm4479 = vcmask 326656
      %v4480 = vsel %vm4479, %v4447, %v3979
      %v4481 = vsel %vm4479, %v4448, %v3981
      %v4482 = vsel %vm4479, %v4449, %v3983
      %v4483 = vsel %vm4479, %v4450, %v3985
      %v4484 = vsel %vm4479, %v4451, %v3987
      %v4485 = vsel %vm4479, %v4452, %v3989
      %v4486 = vsel %vm4479, %v4453, %v3991
      %v4487 = vsel %vm4479, %v4454, %v3993
      %v4488 = vsel %vm4479, %v4455, %v3995
      %v4489 = vsel %vm4479, %v4456, %v3997
      %v4490 = vsel %vm4479, %v4457, %v3999
      %v4491 = vsel %vm4479, %v4458, %v4001
      %v4492 = vsel %vm4479, %v4459, %v4003
      %v4493 = vsel %vm4479, %v4460, %v4005
      %v4494 = vsel %vm4479, %v4461, %v4007
      %v4495 = vsel %vm4479, %v4462, %v4009
      %v4496 = vsel %vm4479, %v4463, %v4011
      %v4497 = vsel %vm4479, %v4464, %v4013
      %v4498 = vsel %vm4479, %v4465, %v4015
      %v4499 = vsel %vm4479, %v4466, %v4017
      %v4500 = vsel %vm4479, %v4467, %v4019
      %v4501 = vsel %vm4479, %v4468, %v4021
      %v4502 = vsel %vm4479, %v4469, %v4023
      %v4503 = vsel %vm4479, %v4470, %v4025
      %v4504 = vsel %vm4479, %v4471, %v4027
      %v4505 = vsel %vm4479, %v4472, %v4029
      %v4506 = vsel %vm4479, %v4473, %v4031
      %v4507 = vsel %vm4479, %v4474, %v4033
      %v4508 = vsel %vm4479, %v4475, %v4035
      %v4509 = vsel %vm4479, %v4476, %v4037
      %v4510 = vsel %vm4479, %v4477, %v4039
      %v4511 = vsel %vm4479, %v4478, %v4041
      %vm4512 = vcmask 392192
      %v4513 = vsel %vm4512, %v4480, %v4075
      %v4514 = vsel %vm4512, %v4481, %v4077
      %v4515 = vsel %vm4512, %v4482, %v4079
      %v4516 = vsel %vm4512, %v4483, %v4081
      %v4517 = vsel %vm4512, %v4484, %v4083
      %v4518 = vsel %vm4512, %v4485, %v4085
      %v4519 = vsel %vm4512, %v4486, %v4087
      %v4520 = vsel %vm4512, %v4487, %v4089
      %v4521 = vsel %vm4512, %v4488, %v4091
      %v4522 = vsel %vm4512, %v4489, %v4093
      %v4523 = vsel %vm4512, %v4490, %v4095
      %v4524 = vsel %vm4512, %v4491, %v4097
      %v4525 = vsel %vm4512, %v4492, %v4099
      %v4526 = vsel %vm4512, %v4493, %v4101
      %v4527 = vsel %vm4512, %v4494, %v4103
      %v4528 = vsel %vm4512, %v4495, %v4105
      %v4529 = vsel %vm4512, %v4496, %v4107
      %v4530 = vsel %vm4512, %v4497, %v4109
      %v4531 = vsel %vm4512, %v4498, %v4111
      %v4532 = vsel %vm4512, %v4499, %v4113
      %v4533 = vsel %vm4512, %v4500, %v4115
      %v4534 = vsel %vm4512, %v4501, %v4117
      %v4535 = vsel %vm4512, %v4502, %v4119
      %v4536 = vsel %vm4512, %v4503, %v4121
      %v4537 = vsel %vm4512, %v4504, %v4123
      %v4538 = vsel %vm4512, %v4505, %v4125
      %v4539 = vsel %vm4512, %v4506, %v4127
      %v4540 = vsel %vm4512, %v4507, %v4129
      %v4541 = vsel %vm4512, %v4508, %v4131
      %v4542 = vsel %vm4512, %v4509, %v4133
      %v4543 = vsel %vm4512, %v4510, %v4135
      %v4544 = vsel %vm4512, %v4511, %v4135
      %vm4545 = vcmask 457728
      %v4546 = vsel %vm4545, %v4513, %v4168
      %v4547 = vsel %vm4545, %v4514, %v4170
      %v4548 = vsel %vm4545, %v4515, %v4172
      %v4549 = vsel %vm4545, %v4516, %v4174
      %v4550 = vsel %vm4545, %v4517, %v4176
      %v4551 = vsel %vm4545, %v4518, %v4178
      %v4552 = vsel %vm4545, %v4519, %v4180
      %v4553 = vsel %vm4545, %v4520, %v4182
      %v4554 = vsel %vm4545, %v4521, %v4184
      %v4555 = vsel %vm4545, %v4522, %v4186
      %v4556 = vsel %vm4545, %v4523, %v4188
      %v4557 = vsel %vm4545, %v4524, %v4190
      %v4558 = vsel %vm4545, %v4525, %v4192
      %v4559 = vsel %vm4545, %v4526, %v4194
      %v4560 = vsel %vm4545, %v4527, %v4196
      %v4561 = vsel %vm4545, %v4528, %v4198
      %v4562 = vsel %vm4545, %v4529, %v4200
      %v4563 = vsel %vm4545, %v4530, %v4202
      %v4564 = vsel %vm4545, %v4531, %v4204
      %v4565 = vsel %vm4545, %v4532, %v4206
      %v4566 = vsel %vm4545, %v4533, %v4208
      %v4567 = vsel %vm4545, %v4534, %v4210
      %v4568 = vsel %vm4545, %v4535, %v4212
      %v4569 = vsel %vm4545, %v4536, %v4214
      %v4570 = vsel %vm4545, %v4537, %v4216
      %v4571 = vsel %vm4545, %v4538, %v4218
      %v4572 = vsel %vm4545, %v4539, %v4220
      %v4573 = vsel %vm4545, %v4540, %v4222
      %v4574 = vsel %vm4545, %v4541, %v4224
      %v4575 = vsel %vm4545, %v4542, %v4226
      %v4576 = vsel %vm4545, %v4543, %v4228
      %v4577 = vsel %vm4545, %v4544, %v4228
      %vm4578 = vcmask 523264
      %v4579 = vsel %vm4578, %v4546, %v4261
      %v4580 = vsel %vm4578, %v4547, %v4263
      %v4581 = vsel %vm4578, %v4548, %v4265
      %v4582 = vsel %vm4578, %v4549, %v4267
      %v4583 = vsel %vm4578, %v4550, %v4269
      %v4584 = vsel %vm4578, %v4551, %v4271
      %v4585 = vsel %vm4578, %v4552, %v4273
      %v4586 = vsel %vm4578, %v4553, %v4275
      %v4587 = vsel %vm4578, %v4554, %v4277
      %v4588 = vsel %vm4578, %v4555, %v4279
      %v4589 = vsel %vm4578, %v4556, %v4281
      %v4590 = vsel %vm4578, %v4557, %v4283
      %v4591 = vsel %vm4578, %v4558, %v4285
      %v4592 = vsel %vm4578, %v4559, %v4287
      %v4593 = vsel %vm4578, %v4560, %v4289
      %v4594 = vsel %vm4578, %v4561, %v4291
      %v4595 = vsel %vm4578, %v4562, %v4293
      %v4596 = vsel %vm4578, %v4563, %v4295
      %v4597 = vsel %vm4578, %v4564, %v4297
      %v4598 = vsel %vm4578, %v4565, %v4299
      %v4599 = vsel %vm4578, %v4566, %v4301
      %v4600 = vsel %vm4578, %v4567, %v4303
      %v4601 = vsel %vm4578, %v4568, %v4305
      %v4602 = vsel %vm4578, %v4569, %v4307
      %v4603 = vsel %vm4578, %v4570, %v4309
      %v4604 = vsel %vm4578, %v4571, %v4311
      %v4605 = vsel %vm4578, %v4572, %v4313
      %v4606 = vsel %vm4578, %v4573, %v4315
      %v4607 = vsel %vm4578, %v4574, %v4317
      %v4608 = vsel %vm4578, %v4575, %v4319
      %v4609 = vsel %vm4578, %v4576, %v4321
      %v4610 = vsel %vm4578, %v4577, %v4321
      %v4612 = vlaneseq
      %v4613 = vshrl.u32 %v4612, 7
      %v4614 = vsub.s32 0, %v4613
      %v4615 = vrot.slane %v3248, %v4614
      %vm4617 = vcmask 588800
      %v4619 = vsel %vm4617, %v4579, 0
      %v4622 = vsel %vm4617, %v4580, 0
      %v4625 = vsel %vm4617, %v4581, 0
      %v4628 = vsel %vm4617, %v4582, 0
      %v4631 = vsel %vm4617, %v4583, 0
      %v4634 = vsel %vm4617, %v4584, 0
      %v4637 = vsel %vm4617, %v4585, 0
      %v4640 = vsel %vm4617, %v4586, 0
      %v4643 = vsel %vm4617, %v4587, 0
      %v4646 = vsel %vm4617, %v4588, 0
      %v4649 = vsel %vm4617, %v4589, 0
      %v4652 = vsel %vm4617, %v4590, 0
      %v4655 = vsel %vm4617, %v4591, 0
      %v4658 = vsel %vm4617, %v4592, 0
      %v4661 = vsel %vm4617, %v4593, 0
      %v4664 = vsel %vm4617, %v4594, 0
      %v4667 = vsel %vm4617, %v4595, 0
      %v4670 = vsel %vm4617, %v4596, 0
      %v4673 = vsel %vm4617, %v4597, 0
      %v4676 = vsel %vm4617, %v4598, 0
      %v4679 = vsel %vm4617, %v4599, 0
      %v4682 = vsel %vm4617, %v4600, 0
      %v4685 = vsel %vm4617, %v4601, 0
      %v4688 = vsel %vm4617, %v4602, 0
      %v4691 = vsel %vm4617, %v4603, 0
      %v4694 = vsel %vm4617, %v4604, 0
      %v4697 = vsel %vm4617, %v4605, 0
      %v4700 = vsel %vm4617, %v4606, 0
      %v4703 = vsel %vm4617, %v4607, 0
      %v4706 = vsel %vm4617, %v4608, 0
      %v4709 = vsel %vm4617, %v4609, 0
      %v4712 = vsel %vm4617, %v4610, 0
      %4714 = vmatprep.subr.mxu0 0.0
      %4715 = vmatpush1.msra.mxu0 %v3239
      %4716 = vmatprep.subr.mxu0 0.0
      %4717 = vmatpush1.msra.mxu0 %v3240
      %4718 = vmatprep.subr.mxu0 0.0
      %4719 = vmatpush1.msra.mxu0 %v3241
      %4720 = vmatprep.subr.mxu0 0.0
      %4721 = vmatpush1.msra.mxu0 %v3242
      %4722 = vmatprep.subr.mxu0 0.0
      %4723 = vmatpush1.msra.mxu0 %v3243
      %4724 = vmatprep.subr.mxu0 0.0
      %4725 = vmatpush1.msra.mxu0 %v3244
      %4726 = vmatprep.subr.mxu0 0.0
      %4727 = vmatpush1.msra.mxu0 %v3245
      %4728 = vmatprep.subr.mxu0 0.0
      %4729 = vmatpush1.msra.mxu0 %v3246
      %4730 = vmatprep.subr.mxu0 0.0
      %4731 = vmatpush1.msra.mxu0 %v3247
      %4732 = vmatprep.subr.mxu0 0.0
      %4733 = vmatpush1.msra.mxu0 0.0
      %4734 = vmatprep.subr.mxu0 0.0
      %4735 = vmatpush1.msra.mxu0 0.0
      %4736 = vmatprep.subr.mxu0 0.0
      %4737 = vmatpush1.msra.mxu0 0.0
      %4738 = vmatprep.subr.mxu0 0.0
      %4739 = vmatpush1.msra.mxu0 0.0
      %4740 = vmatprep.subr.mxu0 0.0
      %4741 = vmatpush1.msra.mxu0 0.0
      %4742 = vmatprep.subr.mxu0 0.0
      %4743 = vmatpush1.msra.mxu0 0.0
      %4744 = vmatprep.subr.mxu0 0.0
      %4745 = vmatpush1.msra.mxu0 0.0
      %4746 = vmatprep.subr.mxu0 0.0
      %4747 = vmatpush1.msra.mxu0 0.0
      %4748 = vmatprep.subr.mxu0 0.0
      %4749 = vmatpush1.msra.mxu0 0.0
      %4750 = vmatprep.subr.mxu0 0.0
      %4751 = vmatpush1.msra.mxu0 0.0
      %4752 = vmatprep.subr.mxu0 0.0
      %4753 = vmatpush1.msra.mxu0 0.0
      %4754 = vmatprep.subr.mxu0 0.0
      %4755 = vmatpush1.msra.mxu0 0.0
      %4756 = vmatprep.subr.mxu0 0.0
      %4757 = vmatpush1.msra.mxu0 0.0
      %4758 = vmatprep.subr.mxu0 0.0
      %4759 = vmatpush1.msra.mxu0 0.0
      %4760 = vmatprep.subr.mxu0 0.0
      %4761 = vmatpush1.msra.mxu0 0.0
      %4762 = vmatprep.subr.mxu0 0.0
      %4763 = vmatpush1.msra.mxu0 0.0
      %4764 = vmatprep.subr.mxu0 0.0
      %4765 = vmatpush1.msra.mxu0 0.0
      %4766 = vmatprep.subr.mxu0 0.0
      %4767 = vmatpush1.msra.mxu0 0.0
      %4768 = vmatprep.subr.mxu0 0.0
      %4769 = vmatpush1.msra.mxu0 0.0
      %4770 = vmatprep.subr.mxu0 0.0
      %4771 = vmatpush1.msra.mxu0 0.0
      %4772 = vmatprep.subr.mxu0 0.0
      %4773 = vmatpush1.msra.mxu0 0.0
      %4774 = vmatprep.subr.mxu0 0.0
      %4775 = vmatpush1.msra.mxu0 0.0
      %4776 = vmatprep.subr.mxu0 0.0
      %4777 = vmatpush1.msra.mxu0 0.0
      %4778 = vmatprep.mubr.f32.mxu0 0.0
      %4779 = vmatmul.mubr.f32.gmra.mrb[0].mxu0 %v4619
      %v4780 = vpop.f32.mrb[0].mxu0
      %v4781 = vadd.f32 %v4615, %v4780
      %v4782 = vpop.f32.mrb[0].mxu0
      %4783 = vmatprep.mubr.f32.mxu0 0.0
      %4784 = vmatmul.mubr.f32.gmra.mrb[0].mxu0 %v4622
      %v4785 = vpop.f32.mrb[0].mxu0
      %v4786 = vadd.f32 %v4615, %v4785
      %v4787 = vpop.f32.mrb[0].mxu0
      %4788 = vmatprep.mubr.f32.mxu0 0.0
      %4789 = vmatmul.mubr.f32.gmra.mrb[0].mxu0 %v4625
      %v4790 = vpop.f32.mrb[0].mxu0
      %v4791 = vadd.f32 %v4615, %v4790
      %v4792 = vpop.f32.mrb[0].mxu0
      %4793 = vmatprep.mubr.f32.mxu0 0.0
      %4794 = vmatmul.mubr.f32.gmra.mrb[0].mxu0 %v4628
      %v4795 = vpop.f32.mrb[0].mxu0
      %v4796 = vadd.f32 %v4615, %v4795
      %v4797 = vpop.f32.mrb[0].mxu0
      %4798 = vmatprep.mubr.f32.mxu0 0.0
      %4799 = vmatmul.mubr.f32.gmra.mrb[0].mxu0 %v4631
      %v4800 = vpop.f32.mrb[0].mxu0
      %v4801 = vadd.f32 %v4615, %v4800
      %v4802 = vpop.f32.mrb[0].mxu0
      %4803 = vmatprep.mubr.f32.mxu0 0.0
      %4804 = vmatmul.mubr.f32.gmra.mrb[0].mxu0 %v4634
      %v4805 = vpop.f32.mrb[0].mxu0
      %v4806 = vadd.f32 %v4615, %v4805
      %v4807 = vpop.f32.mrb[0].mxu0
      %4808 = vmatprep.mubr.f32.mxu0 0.0
      %4809 = vmatmul.mubr.f32.gmra.mrb[0].mxu0 %v4637
      %v4810 = vpop.f32.mrb[0].mxu0
      %v4811 = vadd.f32 %v4615, %v4810
      %v4812 = vpop.f32.mrb[0].mxu0
      %4813 = vmatprep.mubr.f32.mxu0 0.0
      %4814 = vmatmul.mubr.f32.gmra.mrb[0].mxu0 %v4640
      %v4815 = vpop.f32.mrb[0].mxu0
      %v4816 = vadd.f32 %v4615, %v4815
      %v4817 = vpop.f32.mrb[0].mxu0
      %4818 = vmatprep.mubr.f32.mxu0 0.0
      %4819 = vmatmul.mubr.f32.gmra.mrb[0].mxu0 %v4643
      %v4820 = vpop.f32.mrb[0].mxu0
      %v4821 = vadd.f32 %v4615, %v4820
      %v4822 = vpop.f32.mrb[0].mxu0
      %4823 = vmatprep.mubr.f32.mxu0 0.0
      %4824 = vmatmul.mubr.f32.gmra.mrb[0].mxu0 %v4646
      %v4825 = vpop.f32.mrb[0].mxu0
      %v4826 = vadd.f32 %v4615, %v4825
      %v4827 = vpop.f32.mrb[0].mxu0
      %4828 = vmatprep.mubr.f32.mxu0 0.0
      %4829 = vmatmul.mubr.f32.gmra.mrb[0].mxu0 %v4649
      %v4830 = vpop.f32.mrb[0].mxu0
      %v4831 = vadd.f32 %v4615, %v4830
      %v4832 = vpop.f32.mrb[0].mxu0
      %4833 = vmatprep.mubr.f32.mxu0 0.0
      %4834 = vmatmul.mubr.f32.gmra.mrb[0].mxu0 %v4652
      %v4835 = vpop.f32.mrb[0].mxu0
      %v4836 = vadd.f32 %v4615, %v4835
      %v4837 = vpop.f32.mrb[0].mxu0
      %4838 = vmatprep.mubr.f32.mxu0 0.0
      %4839 = vmatmul.mubr.f32.gmra.mrb[0].mxu0 %v4655
      %v4840 = vpop.f32.mrb[0].mxu0
      %v4841 = vadd.f32 %v4615, %v4840
      %v4842 = vpop.f32.mrb[0].mxu0
      %4843 = vmatprep.mubr.f32.mxu0 0.0
      %4844 = vmatmul.mubr.f32.gmra.mrb[0].mxu0 %v4658
      %v4845 = vpop.f32.mrb[0].mxu0
      %v4846 = vadd.f32 %v4615, %v4845
      %v4847 = vpop.f32.mrb[0].mxu0
      %4848 = vmatprep.mubr.f32.mxu0 0.0
      %4849 = vmatmul.mubr.f32.gmra.mrb[0].mxu0 %v4661
      %v4850 = vpop.f32.mrb[0].mxu0
      %v4851 = vadd.f32 %v4615, %v4850
      %v4852 = vpop.f32.mrb[0].mxu0
      %4853 = vmatprep.mubr.f32.mxu0 0.0
      %4854 = vmatmul.mubr.f32.gmra.mrb[0].mxu0 %v4664
      %v4855 = vpop.f32.mrb[0].mxu0
      %v4856 = vadd.f32 %v4615, %v4855
      %v4857 = vpop.f32.mrb[0].mxu0
      %4858 = vmatprep.mubr.f32.mxu0 0.0
      %4859 = vmatmul.mubr.f32.gmra.mrb[0].mxu0 %v4667
      %v4860 = vpop.f32.mrb[0].mxu0
      %v4861 = vadd.f32 %v4615, %v4860
      %v4862 = vpop.f32.mrb[0].mxu0
      %4863 = vmatprep.mubr.f32.mxu0 0.0
      %4864 = vmatmul.mubr.f32.gmra.mrb[0].mxu0 %v4670
      %v4865 = vpop.f32.mrb[0].mxu0
      %v4866 = vadd.f32 %v4615, %v4865
      %v4867 = vpop.f32.mrb[0].mxu0
      %4868 = vmatprep.mubr.f32.mxu0 0.0
      %4869 = vmatmul.mubr.f32.gmra.mrb[0].mxu0 %v4673
      %v4870 = vpop.f32.mrb[0].mxu0
      %v4871 = vadd.f32 %v4615, %v4870
      %v4872 = vpop.f32.mrb[0].mxu0
      %4873 = vmatprep.mubr.f32.mxu0 0.0
      %4874 = vmatmul.mubr.f32.gmra.mrb[0].mxu0 %v4676
      %v4875 = vpop.f32.mrb[0].mxu0
      %v4876 = vadd.f32 %v4615, %v4875
      %v4877 = vpop.f32.mrb[0].mxu0
      %4878 = vmatprep.mubr.f32.mxu0 0.0
      %4879 = vmatmul.mubr.f32.gmra.mrb[0].mxu0 %v4679
      %v4880 = vpop.f32.mrb[0].mxu0
      %v4881 = vadd.f32 %v4615, %v4880
      %v4882 = vpop.f32.mrb[0].mxu0
      %4883 = vmatprep.mubr.f32.mxu0 0.0
      %4884 = vmatmul.mubr.f32.gmra.mrb[0].mxu0 %v4682
      %v4885 = vpop.f32.mrb[0].mxu0
      %v4886 = vadd.f32 %v4615, %v4885
      %v4887 = vpop.f32.mrb[0].mxu0
      %4888 = vmatprep.mubr.f32.mxu0 0.0
      %4889 = vmatmul.mubr.f32.gmra.mrb[0].mxu0 %v4685
      %v4890 = vpop.f32.mrb[0].mxu0
      %v4891 = vadd.f32 %v4615, %v4890
      %v4892 = vpop.f32.mrb[0].mxu0
      %4893 = vmatprep.mubr.f32.mxu0 0.0
      %4894 = vmatmul.mubr.f32.gmra.mrb[0].mxu0 %v4688
      %v4895 = vpop.f32.mrb[0].mxu0
      %v4896 = vadd.f32 %v4615, %v4895
      %v4897 = vpop.f32.mrb[0].mxu0
      %4898 = vmatprep.mubr.f32.mxu0 0.0
      %4899 = vmatmul.mubr.f32.gmra.mrb[0].mxu0 %v4691
      %v4900 = vpop.f32.mrb[0].mxu0
      %v4901 = vadd.f32 %v4615, %v4900
      %v4902 = vpop.f32.mrb[0].mxu0
      %4903 = vmatprep.mubr.f32.mxu0 0.0
      %4904 = vmatmul.mubr.f32.gmra.mrb[0].mxu0 %v4694
      %v4905 = vpop.f32.mrb[0].mxu0
      %v4906 = vadd.f32 %v4615, %v4905
      %v4907 = vpop.f32.mrb[0].mxu0
      %4908 = vmatprep.mubr.f32.mxu0 0.0
      %4909 = vmatmul.mubr.f32.gmra.mrb[0].mxu0 %v4697
      %v4910 = vpop.f32.mrb[0].mxu0
      %v4911 = vadd.f32 %v4615, %v4910
      %v4912 = vpop.f32.mrb[0].mxu0
      %4913 = vmatprep.mubr.f32.mxu0 0.0
      %4914 = vmatmul.mubr.f32.gmra.mrb[0].mxu0 %v4700
      %v4915 = vpop.f32.mrb[0].mxu0
      %v4916 = vadd.f32 %v4615, %v4915
      %v4917 = vpop.f32.mrb[0].mxu0
      %4918 = vmatprep.mubr.f32.mxu0 0.0
      %4919 = vmatmul.mubr.f32.gmra.mrb[0].mxu0 %v4703
      %v4920 = vpop.f32.mrb[0].mxu0
      %v4921 = vadd.f32 %v4615, %v4920
      %v4922 = vpop.f32.mrb[0].mxu0
      %4923 = vmatprep.mubr.f32.mxu0 0.0
      %4924 = vmatmul.mubr.f32.gmra.mrb[0].mxu0 %v4706
      %v4925 = vpop.f32.mrb[0].mxu0
      %v4926 = vadd.f32 %v4615, %v4925
      %v4927 = vpop.f32.mrb[0].mxu0
      %4928 = vmatprep.mubr.f32.mxu0 0.0
      %4929 = vmatmul.mubr.f32.gmra.mrb[0].mxu0 %v4709
      %v4930 = vpop.f32.mrb[0].mxu0
      %v4931 = vadd.f32 %v4615, %v4930
      %v4932 = vpop.f32.mrb[0].mxu0
      %4933 = vmatprep.mubr.f32.mxu0 0.0
      %4934 = vmatmul.mubr.f32.gmra.mrb[0].mxu0 %v4712
      %v4935 = vpop.f32.mrb[0].mxu0
      %v4936 = vadd.f32 %v4615, %v4935
      %v4937 = vpop.f32.mrb[0].mxu0
      %4938 = vdwg.mxu0
      %v4939 = vld [vmem:[%s9] sm:$0xf]
      %v4940 = vld [vmem:[%s10] sm:$0x1]
      %v4942 = vlaneseq
      %v4943 = vshrl.u32 %v4942, 7
      %v4944 = vsub.s32 0, %v4943
      %v4945 = vrot.slane %v4940, %v4944
      %v4948 = vsel %vm421, %v387, 0
      %v4951 = vsel %vm421, %v388, 0
      %v4954 = vsel %vm421, %v389, 0
      %v4957 = vsel %vm421, %v390, 0
      %v4960 = vsel %vm421, %v391, 0
      %v4963 = vsel %vm421, %v392, 0
      %v4966 = vsel %vm421, %v393, 0
      %v4969 = vsel %vm421, %v394, 0
      %v4972 = vsel %vm421, %v395, 0
      %v4975 = vsel %vm421, %v396, 0
      %v4978 = vsel %vm421, %v397, 0
      %v4981 = vsel %vm421, %v398, 0
      %v4984 = vsel %vm421, %v399, 0
      %v4987 = vsel %vm421, %v400, 0
      %v4990 = vsel %vm421, %v401, 0
      %v4993 = vsel %vm421, %v402, 0
      %v4996 = vsel %vm421, %v403, 0
      %v4999 = vsel %vm421, %v404, 0
      %v5002 = vsel %vm421, %v405, 0
      %v5005 = vsel %vm421, %v406, 0
      %v5008 = vsel %vm421, %v407, 0
      %v5011 = vsel %vm421, %v408, 0
      %v5014 = vsel %vm421, %v409, 0
      %v5017 = vsel %vm421, %v410, 0
      %v5020 = vsel %vm421, %v411, 0
      %v5023 = vsel %vm421, %v412, 0
      %v5026 = vsel %vm421, %v413, 0
      %v5029 = vsel %vm421, %v414, 0
      %v5032 = vsel %vm421, %v415, 0
      %v5035 = vsel %vm421, %v416, 0
      %v5038 = vsel %vm421, %v417, 0
      %v5041 = vsel %vm421, %v418, 0
      %v5044 = vsel %vm2456, %v4939, 0
      %5046 = vmatprep.subr.mxu0 0.0
      %5047 = vmatpush1.msra.mxu0 %v5044
      %5048 = vmatprep.subr.mxu0 0.0
      %5049 = vmatpush1.msra.mxu0 0.0
      %5050 = vmatprep.subr.mxu0 0.0
      %5051 = vmatpush1.msra.mxu0 0.0
      %5052 = vmatprep.subr.mxu0 0.0
      %5053 = vmatpush1.msra.mxu0 0.0
      %5054 = vmatprep.subr.mxu0 0.0
      %5055 = vmatpush1.msra.mxu0 0.0
      %5056 = vmatprep.subr.mxu0 0.0
      %5057 = vmatpush1.msra.mxu0 0.0
      %5058 = vmatprep.subr.mxu0 0.0
      %5059 = vmatpush1.msra.mxu0 0.0
      %5060 = vmatprep.subr.mxu0 0.0
      %5061 = vmatpush1.msra.mxu0 0.0
      %5062 = vmatprep.subr.mxu0 0.0
      %5063 = vmatpush1.msra.mxu0 0.0
      %5064 = vmatprep.subr.mxu0 0.0
      %5065 = vmatpush1.msra.mxu0 0.0
      %5066 = vmatprep.subr.mxu0 0.0
      %5067 = vmatpush1.msra.mxu0 0.0
      %5068 = vmatprep.subr.mxu0 0.0
      %5069 = vmatpush1.msra.mxu0 0.0
      %5070 = vmatprep.subr.mxu0 0.0
      %5071 = vmatpush1.msra.mxu0 0.0
      %5072 = vmatprep.subr.mxu0 0.0
      %5073 = vmatpush1.msra.mxu0 0.0
      %5074 = vmatprep.subr.mxu0 0.0
      %5075 = vmatpush1.msra.mxu0 0.0
      %5076 = vmatprep.subr.mxu0 0.0
      %5077 = vmatpush1.msra.mxu0 0.0
      %5078 = vmatprep.subr.mxu0 0.0
      %5079 = vmatpush1.msra.mxu0 0.0
      %5080 = vmatprep.subr.mxu0 0.0
      %5081 = vmatpush1.msra.mxu0 0.0
      %5082 = vmatprep.subr.mxu0 0.0
      %5083 = vmatpush1.msra.mxu0 0.0
      %5084 = vmatprep.subr.mxu0 0.0
      %5085 = vmatpush1.msra.mxu0 0.0
      %5086 = vmatprep.subr.mxu0 0.0
      %5087 = vmatpush1.msra.mxu0 0.0
      %5088 = vmatprep.subr.mxu0 0.0
      %5089 = vmatpush1.msra.mxu0 0.0
      %5090 = vmatprep.subr.mxu0 0.0
      %5091 = vmatpush1.msra.mxu0 0.0
      %5092 = vmatprep.subr.mxu0 0.0
      %5093 = vmatpush1.msra.mxu0 0.0
      %5094 = vmatprep.subr.mxu0 0.0
      %5095 = vmatpush1.msra.mxu0 0.0
      %5096 = vmatprep.subr.mxu0 0.0
      %5097 = vmatpush1.msra.mxu0 0.0
      %5098 = vmatprep.subr.mxu0 0.0
      %5099 = vmatpush1.msra.mxu0 0.0
      %5100 = vmatprep.subr.mxu0 0.0
      %5101 = vmatpush1.msra.mxu0 0.0
      %5102 = vmatprep.subr.mxu0 0.0
      %5103 = vmatpush1.msra.mxu0 0.0
      %5104 = vmatprep.subr.mxu0 0.0
      %5105 = vmatpush1.msra.mxu0 0.0
      %5106 = vmatprep.subr.mxu0 0.0
      %5107 = vmatpush1.msra.mxu0 0.0
      %5108 = vmatprep.subr.mxu0 0.0
      %5109 = vmatpush1.msra.mxu0 0.0
      %5110 = vmatprep.mubr.f32.mxu0 0.0
      %5111 = vmatmul.mubr.f32.gmra.mrb[0].mxu0 %v4948
      %v5112 = vpop.f32.mrb[0].mxu0
      %v5113 = vadd.f32 %v4945, %v5112
      %v5114 = vpop.f32.mrb[0].mxu0
      %5115 = vmatprep.mubr.f32.mxu0 0.0
      %5116 = vmatmul.mubr.f32.gmra.mrb[0].mxu0 %v4951
      %v5117 = vpop.f32.mrb[0].mxu0
      %v5118 = vadd.f32 %v4945, %v5117
      %v5119 = vpop.f32.mrb[0].mxu0
      %5120 = vmatprep.mubr.f32.mxu0 0.0
      %5121 = vmatmul.mubr.f32.gmra.mrb[0].mxu0 %v4954
      %v5122 = vpop.f32.mrb[0].mxu0
      %v5123 = vadd.f32 %v4945, %v5122
      %v5124 = vpop.f32.mrb[0].mxu0
      %5125 = vmatprep.mubr.f32.mxu0 0.0
      %5126 = vmatmul.mubr.f32.gmra.mrb[0].mxu0 %v4957
      %v5127 = vpop.f32.mrb[0].mxu0
      %v5128 = vadd.f32 %v4945, %v5127
      %v5129 = vpop.f32.mrb[0].mxu0
      %5130 = vmatprep.mubr.f32.mxu0 0.0
      %5131 = vmatmul.mubr.f32.gmra.mrb[0].mxu0 %v4960
      %v5132 = vpop.f32.mrb[0].mxu0
      %v5133 = vadd.f32 %v4945, %v5132
      %v5134 = vpop.f32.mrb[0].mxu0
      %5135 = vmatprep.mubr.f32.mxu0 0.0
      %5136 = vmatmul.mubr.f32.gmra.mrb[0].mxu0 %v4963
      %v5137 = vpop.f32.mrb[0].mxu0
      %v5138 = vadd.f32 %v4945, %v5137
      %v5139 = vpop.f32.mrb[0].mxu0
      %5140 = vmatprep.mubr.f32.mxu0 0.0
      %5141 = vmatmul.mubr.f32.gmra.mrb[0].mxu0 %v4966
      %v5142 = vpop.f32.mrb[0].mxu0
      %v5143 = vadd.f32 %v4945, %v5142
      %v5144 = vpop.f32.mrb[0].mxu0
      %5145 = vmatprep.mubr.f32.mxu0 0.0
      %5146 = vmatmul.mubr.f32.gmra.mrb[0].mxu0 %v4969
      %v5147 = vpop.f32.mrb[0].mxu0
      %v5148 = vadd.f32 %v4945, %v5147
      %v5149 = vpop.f32.mrb[0].mxu0
      %5150 = vmatprep.mubr.f32.mxu0 0.0
      %5151 = vmatmul.mubr.f32.gmra.mrb[0].mxu0 %v4972
      %v5152 = vpop.f32.mrb[0].mxu0
      %v5153 = vadd.f32 %v4945, %v5152
      %v5154 = vpop.f32.mrb[0].mxu0
      %5155 = vmatprep.mubr.f32.mxu0 0.0
      %5156 = vmatmul.mubr.f32.gmra.mrb[0].mxu0 %v4975
      %v5157 = vpop.f32.mrb[0].mxu0
      %v5158 = vadd.f32 %v4945, %v5157
      %v5159 = vpop.f32.mrb[0].mxu0
      %5160 = vmatprep.mubr.f32.mxu0 0.0
      %5161 = vmatmul.mubr.f32.gmra.mrb[0].mxu0 %v4978
      %v5162 = vpop.f32.mrb[0].mxu0
      %v5163 = vadd.f32 %v4945, %v5162
      %v5164 = vpop.f32.mrb[0].mxu0
      %5165 = vmatprep.mubr.f32.mxu0 0.0
      %5166 = vmatmul.mubr.f32.gmra.mrb[0].mxu0 %v4981
      %v5167 = vpop.f32.mrb[0].mxu0
      %v5168 = vadd.f32 %v4945, %v5167
      %v5169 = vpop.f32.mrb[0].mxu0
      %5170 = vmatprep.mubr.f32.mxu0 0.0
      %5171 = vmatmul.mubr.f32.gmra.mrb[0].mxu0 %v4984
      %v5172 = vpop.f32.mrb[0].mxu0
      %v5173 = vadd.f32 %v4945, %v5172
      %v5174 = vpop.f32.mrb[0].mxu0
      %5175 = vmatprep.mubr.f32.mxu0 0.0
      %5176 = vmatmul.mubr.f32.gmra.mrb[0].mxu0 %v4987
      %v5177 = vpop.f32.mrb[0].mxu0
      %v5178 = vadd.f32 %v4945, %v5177
      %v5179 = vpop.f32.mrb[0].mxu0
      %5180 = vmatprep.mubr.f32.mxu0 0.0
      %5181 = vmatmul.mubr.f32.gmra.mrb[0].mxu0 %v4990
      %v5182 = vpop.f32.mrb[0].mxu0
      %v5183 = vadd.f32 %v4945, %v5182
      %v5184 = vpop.f32.mrb[0].mxu0
      %5185 = vmatprep.mubr.f32.mxu0 0.0
      %5186 = vmatmul.mubr.f32.gmra.mrb[0].mxu0 %v4993
      %v5187 = vpop.f32.mrb[0].mxu0
      %v5188 = vadd.f32 %v4945, %v5187
      %v5189 = vpop.f32.mrb[0].mxu0
      %5190 = vmatprep.mubr.f32.mxu0 0.0
      %5191 = vmatmul.mubr.f32.gmra.mrb[0].mxu0 %v4996
      %v5192 = vpop.f32.mrb[0].mxu0
      %v5193 = vadd.f32 %v4945, %v5192
      %v5194 = vpop.f32.mrb[0].mxu0
      %5195 = vmatprep.mubr.f32.mxu0 0.0
      %5196 = vmatmul.mubr.f32.gmra.mrb[0].mxu0 %v4999
      %v5197 = vpop.f32.mrb[0].mxu0
      %v5198 = vadd.f32 %v4945, %v5197
      %v5199 = vpop.f32.mrb[0].mxu0
      %5200 = vmatprep.mubr.f32.mxu0 0.0
      %5201 = vmatmul.mubr.f32.gmra.mrb[0].mxu0 %v5002
      %v5202 = vpop.f32.mrb[0].mxu0
      %v5203 = vadd.f32 %v4945, %v5202
      %v5204 = vpop.f32.mrb[0].mxu0
      %5205 = vmatprep.mubr.f32.mxu0 0.0
      %5206 = vmatmul.mubr.f32.gmra.mrb[0].mxu0 %v5005
      %v5207 = vpop.f32.mrb[0].mxu0
      %v5208 = vadd.f32 %v4945, %v5207
      %v5209 = vpop.f32.mrb[0].mxu0
      %5210 = vmatprep.mubr.f32.mxu0 0.0
      %5211 = vmatmul.mubr.f32.gmra.mrb[0].mxu0 %v5008
      %v5212 = vpop.f32.mrb[0].mxu0
      %v5213 = vadd.f32 %v4945, %v5212
      %v5214 = vpop.f32.mrb[0].mxu0
      %5215 = vmatprep.mubr.f32.mxu0 0.0
      %5216 = vmatmul.mubr.f32.gmra.mrb[0].mxu0 %v5011
      %v5217 = vpop.f32.mrb[0].mxu0
      %v5218 = vadd.f32 %v4945, %v5217
      %v5219 = vpop.f32.mrb[0].mxu0
      %5220 = vmatprep.mubr.f32.mxu0 0.0
      %5221 = vmatmul.mubr.f32.gmra.mrb[0].mxu0 %v5014
      %v5222 = vpop.f32.mrb[0].mxu0
      %v5223 = vadd.f32 %v4945, %v5222
      %v5224 = vpop.f32.mrb[0].mxu0
      %5225 = vmatprep.mubr.f32.mxu0 0.0
      %5226 = vmatmul.mubr.f32.gmra.mrb[0].mxu0 %v5017
      %v5227 = vpop.f32.mrb[0].mxu0
      %v5228 = vadd.f32 %v4945, %v5227
      %v5229 = vpop.f32.mrb[0].mxu0
      %5230 = vmatprep.mubr.f32.mxu0 0.0
      %5231 = vmatmul.mubr.f32.gmra.mrb[0].mxu0 %v5020
      %v5232 = vpop.f32.mrb[0].mxu0
      %v5233 = vadd.f32 %v4945, %v5232
      %v5234 = vpop.f32.mrb[0].mxu0
      %5235 = vmatprep.mubr.f32.mxu0 0.0
      %5236 = vmatmul.mubr.f32.gmra.mrb[0].mxu0 %v5023
      %v5237 = vpop.f32.mrb[0].mxu0
      %v5238 = vadd.f32 %v4945, %v5237
      %v5239 = vpop.f32.mrb[0].mxu0
      %5240 = vmatprep.mubr.f32.mxu0 0.0
      %5241 = vmatmul.mubr.f32.gmra.mrb[0].mxu0 %v5026
      %v5242 = vpop.f32.mrb[0].mxu0
      %v5243 = vadd.f32 %v4945, %v5242
      %v5244 = vpop.f32.mrb[0].mxu0
      %5245 = vmatprep.mubr.f32.mxu0 0.0
      %5246 = vmatmul.mubr.f32.gmra.mrb[0].mxu0 %v5029
      %v5247 = vpop.f32.mrb[0].mxu0
      %v5248 = vadd.f32 %v4945, %v5247
      %v5249 = vpop.f32.mrb[0].mxu0
      %5250 = vmatprep.mubr.f32.mxu0 0.0
      %5251 = vmatmul.mubr.f32.gmra.mrb[0].mxu0 %v5032
      %v5252 = vpop.f32.mrb[0].mxu0
      %v5253 = vadd.f32 %v4945, %v5252
      %v5254 = vpop.f32.mrb[0].mxu0
      %5255 = vmatprep.mubr.f32.mxu0 0.0
      %5256 = vmatmul.mubr.f32.gmra.mrb[0].mxu0 %v5035
      %v5257 = vpop.f32.mrb[0].mxu0
      %v5258 = vadd.f32 %v4945, %v5257
      %v5259 = vpop.f32.mrb[0].mxu0
      %5260 = vmatprep.mubr.f32.mxu0 0.0
      %5261 = vmatmul.mubr.f32.gmra.mrb[0].mxu0 %v5038
      %v5262 = vpop.f32.mrb[0].mxu0
      %v5263 = vadd.f32 %v4945, %v5262
      %v5264 = vpop.f32.mrb[0].mxu0
      %5265 = vmatprep.mubr.f32.mxu0 0.0
      %5266 = vmatmul.mubr.f32.gmra.mrb[0].mxu0 %v5041
      %v5267 = vpop.f32.mrb[0].mxu0
      %v5268 = vadd.f32 %v4945, %v5267
      %v5269 = vpop.f32.mrb[0].mxu0
      %5270 = vdwg.mxu0
      %v5271 = vadd.f32 %v4781, %v5113
      %v5272 = vadd.f32 %v4786, %v5118
      %v5273 = vadd.f32 %v4791, %v5123
      %v5274 = vadd.f32 %v4796, %v5128
      %v5275 = vadd.f32 %v4801, %v5133
      %v5276 = vadd.f32 %v4806, %v5138
      %v5277 = vadd.f32 %v4811, %v5143
      %v5278 = vadd.f32 %v4816, %v5148
      %v5279 = vadd.f32 %v4821, %v5153
      %v5280 = vadd.f32 %v4826, %v5158
      %v5281 = vadd.f32 %v4831, %v5163
      %v5282 = vadd.f32 %v4836, %v5168
      %v5283 = vadd.f32 %v4841, %v5173
      %v5284 = vadd.f32 %v4846, %v5178
      %v5285 = vadd.f32 %v4851, %v5183
      %v5286 = vadd.f32 %v4856, %v5188
      %v5287 = vadd.f32 %v4861, %v5193
      %v5288 = vadd.f32 %v4866, %v5198
      %v5289 = vadd.f32 %v4871, %v5203
      %v5290 = vadd.f32 %v4876, %v5208
      %v5291 = vadd.f32 %v4881, %v5213
      %v5292 = vadd.f32 %v4886, %v5218
      %v5293 = vadd.f32 %v4891, %v5223
      %v5294 = vadd.f32 %v4896, %v5228
      %v5295 = vadd.f32 %v4901, %v5233
      %v5296 = vadd.f32 %v4906, %v5238
      %v5297 = vadd.f32 %v4911, %v5243
      %v5298 = vadd.f32 %v4916, %v5248
      %v5299 = vadd.f32 %v4921, %v5253
      %v5300 = vadd.f32 %v4926, %v5258
      %v5301 = vadd.f32 %v4931, %v5263
      %v5302 = vadd.f32 %v4936, %v5268
      %5303 = vst.msk [vmem:[%s386] sm:$0xff] %vm2123, %v5271
      %5304 = vst.msk [vmem:[%s386 + $0x8] sm:$0xff] %vm2123, %v5272
      %5305 = vst.msk [vmem:[%s386 + $0x10] sm:$0xff] %vm2123, %v5273
      %5306 = vst.msk [vmem:[%s386 + $0x18] sm:$0xff] %vm2123, %v5274
      %5307 = vst.msk [vmem:[%s386 + $0x20] sm:$0xff] %vm2123, %v5275
      %5308 = vst.msk [vmem:[%s386 + $0x28] sm:$0xff] %vm2123, %v5276
      %5309 = vst.msk [vmem:[%s386 + $0x30] sm:$0xff] %vm2123, %v5277
      %5310 = vst.msk [vmem:[%s386 + $0x38] sm:$0xff] %vm2123, %v5278
      %5311 = vst.msk [vmem:[%s386 + $0x40] sm:$0xff] %vm2123, %v5279
      %5312 = vst.msk [vmem:[%s386 + $0x48] sm:$0xff] %vm2123, %v5280
      %5313 = vst.msk [vmem:[%s386 + $0x50] sm:$0xff] %vm2123, %v5281
      %5314 = vst.msk [vmem:[%s386 + $0x58] sm:$0xff] %vm2123, %v5282
      %5315 = vst.msk [vmem:[%s386 + $0x60] sm:$0xff] %vm2123, %v5283
      %5316 = vst.msk [vmem:[%s386 + $0x68] sm:$0xff] %vm2123, %v5284
      %5317 = vst.msk [vmem:[%s386 + $0x70] sm:$0xff] %vm2123, %v5285
      %5318 = vst.msk [vmem:[%s386 + $0x78] sm:$0xff] %vm2123, %v5286
      %5319 = vst.msk [vmem:[%s386 + $0x80] sm:$0xff] %vm2123, %v5287
      %5320 = vst.msk [vmem:[%s386 + $0x88] sm:$0xff] %vm2123, %v5288
      %5321 = vst.msk [vmem:[%s386 + $0x90] sm:$0xff] %vm2123, %v5289
      %5322 = vst.msk [vmem:[%s386 + $0x98] sm:$0xff] %vm2123, %v5290
      %5323 = vst.msk [vmem:[%s386 + $0xa0] sm:$0xff] %vm2123, %v5291
      %5324 = vst.msk [vmem:[%s386 + $0xa8] sm:$0xff] %vm2123, %v5292
      %5325 = vst.msk [vmem:[%s386 + $0xb0] sm:$0xff] %vm2123, %v5293
      %5326 = vst.msk [vmem:[%s386 + $0xb8] sm:$0xff] %vm2123, %v5294
      %5327 = vst.msk [vmem:[%s386 + $0xc0] sm:$0xff] %vm2123, %v5295
      %5328 = vst.msk [vmem:[%s386 + $0xc8] sm:$0xff] %vm2123, %v5296
      %5329 = vst.msk [vmem:[%s386 + $0xd0] sm:$0xff] %vm2123, %v5297
      %5330 = vst.msk [vmem:[%s386 + $0xd8] sm:$0xff] %vm2123, %v5298
      %5331 = vst.msk [vmem:[%s386 + $0xe0] sm:$0xff] %vm2123, %v5299
      %5332 = vst.msk [vmem:[%s386 + $0xe8] sm:$0xff] %vm2123, %v5300
      %5333 = vst.msk [vmem:[%s386 + $0xf0] sm:$0xff] %vm2123, %v5301
      %5334 = vst.msk [vmem:[%s386 + $0xf8] sm:$0xff] %vm2123, %v5302
      %p5335 = scmp.lt.s32.totalorder %s22, 1
      %s5336 = scalar_select %p5335, %s22, 1
      %s5337 = smul.addr %s5336, 32
      %s5338 = smul.addr %s5337, 8
      %s5339 = scalar_lea.vmem %s11, %s5338
      // Predicated region
      $region65: #{tpu_custom_call.1} parent=63 // pred_check
        %p5340 = pneg %p276
      $region66: #{tpu_custom_call.1} parent=63 // pred_check_branch
        %5342 = sbr.rel (%p5340) target = $region68
      $region67: #{tpu_custom_call.1} parent=63 // pred_region
        _
      $region68: #{tpu_custom_call.1} parent=63 // pred_fallthru
        _
    $region64: #{tpu_custom_call.1} parent=5 // pred_fallthru
      _
    %p5343 = scmp.le.s32.totalorder 2, %s17
    // Predicated region
    $region69: #{tpu_custom_call.1} parent=5 // pred_check
      %p5344 = pneg %p5343
    $region70: #{tpu_custom_call.1} parent=5 // pred_check_branch
      %5346 = sbr.rel (%p5344) target = $region72
    $region71: #{tpu_custom_call.1} parent=5 // pred_region
      %s5347 = ssub.s32 %s17, 2
      // Predicated region
      $region73: #{tpu_custom_call.1} parent=71 // pred_check
        %p5348 = pneg %p282
      $region74: #{tpu_custom_call.1} parent=71 // pred_check_branch
        %5350 = sbr.rel (%p5348) target = $region76
      $region75: #{tpu_custom_call.1} parent=71 // pred_region
        %p5351 = scmp.lt.s32.totalorder %s23, 1
        %s5352 = scalar_select %p5351, %s23, 1
        %s5353 = smul.addr %s5352, 32
        %s5354 = smul.addr %s5353, 8
        %s5355 = scalar_lea.vmem %s11, %s5354
      $region76: #{tpu_custom_call.1} parent=71 // pred_fallthru
        _
    $region72: #{tpu_custom_call.1} parent=5 // pred_fallthru
      _
  $region6: #{tpu_custom_call.1} parent=0 // loop_footer
    %s21 = sadd.s32 1, %s17
  $region7: #{tpu_custom_call.1} parent=0 // loop_footer_branch
    %16 = sbr.rel target = $region3
  $region8: #{tpu_custom_call.1} parent=0 // loop_exit
    _

</llo_original>
